<compile_context>
chip_gen: v7x
topology: tpu7x:2x2x1
jax: 0.10.0
libtpu: 0.0.40
codegen_flags: <defaults>
</compile_context>

<pallas_src>
import functools

import jax
import jax.numpy as jnp
from jax.experimental import pallas as pl
from jax.experimental.pallas import tpu as pltpu

BN_EPS = 1e-5
LANE = 128
# Above every generation's scoped default (v5e 16 MiB), comfortably below v7x's
# 64 MiB physical VMEM; actual worst-case footprint at these tiles is ~<20 MiB.
_VMEM_LIMIT = 48 * 1024 * 1024


def _rup(x, m):
    return (x + m - 1) // m * m


def _cdiv(a, b):
    return (a + b - 1) // b


def _pick_tm(m, n_blocks, cap=512):
    """Largest M tile (<=cap, multiple of 8), but keep >=2 total parallel blocks
    when possible so both v7x TensorCores get work (harmless on v5e/v6e)."""
    want_m_blocks = 2 if n_blocks < 2 else 1
    return max(8, min(cap, _rup(_cdiv(m, want_m_blocks), 8)))


def _pick_tile(full, cap=512):
    """Lane-axis tile: full extent when <=cap, else the largest {512,256,128}
    divisor (full is always a multiple of 128 here)."""
    if full <= cap:
        return full
    for t in (512, 256, 128):
        if full % t == 0:
            return t
    return LANE


# -----------------------------------------------------------------------------
# Streaming kernel for stride==1 convs: no HBM im2col intermediate.
# -----------------------------------------------------------------------------
def _make_conv_stream_kernel(kh, kw, wp, halo, tm):
    """relu(conv1x(x) + bias) over the flattened padded image.

    Per (m, n) grid step:
      * at n == 0, DMA the contiguous slab xflat[m*tm : m*tm + tm + halo, :]
        (halo = (kh-1)*wp + (kw-1)) from HBM into VMEM scratch,
      * accumulate the kh*kw shifted-window matmuls into a VMEM f32 accumulator,
      * add the folded-BN bias, ReLU, store the lane-dense (tm, tn) output block.
    Rows whose window wraps an image edge produce garbage that the wrapper
    slices away.
    """

    def kernel(x_hbm, w_ref, bias_ref, o_ref, abuf, acc_ref, sem):
        m = pl.program_id(0)

        @pl.when(pl.program_id(1) == 0)
        def _():
            cp = pltpu.make_async_copy(
                x_hbm.at[pl.ds(m * tm, tm + halo)], abuf, sem.at[0])
            cp.start()
            cp.wait()

        first = True
        for i in range(kh):
            for j in range(kw):
                a = abuf[pl.ds(i * wp + j, tm), :].astype(jnp.bfloat16)
                d = jnp.dot(a, w_ref[i * kw + j],
                            preferred_element_type=jnp.float32)
                if first:
                    acc_ref[...] = d
                    first = False
                else:
                    acc_ref[...] += d

        out = acc_ref[...] + bias_ref[...]
        o_ref[...] = jnp.maximum(out, 0.0).astype(o_ref.dtype)

    return kernel


def _conv2d_bn_relu_stream(xpad, w, bias, *, kh, kw, coutp):
    """xpad: padded NHWC f32 (n, hp, wp, cin); w: (kh*kw, cin, coutp) bf16 with BN
    scale folded in; bias: (1, coutp) f32.  Returns (mp, coutp) f32, mp >= n*hp*wp."""
    n, hp, wp, cin = xpad.shape
    m_full = n * hp * wp
    halo = (kh - 1) * wp + (kw - 1)

    tn = _pick_tile(coutp)
    grid_n = coutp // tn
    tm = _pick_tm(m_full, grid_n)
    mp = _rup(m_full, tm)
    grid_m = mp // tm

    xflat = xpad.reshape(m_full, cin)
    xflat = jnp.pad(xflat, ((0, mp + halo - m_full), (0, 0)))

    kernel = _make_conv_stream_kernel(kh, kw, wp, halo, tm)
    return pl.pallas_call(
        kernel,
        out_shape=jax.ShapeDtypeStruct((mp, coutp), jnp.float32),
        grid_spec=pltpu.PrefetchScalarGridSpec(
            num_scalar_prefetch=0,
            grid=(grid_m, grid_n),
            in_specs=[
                pl.BlockSpec(memory_space=pl.ANY),                          # x in HBM
                pl.BlockSpec((kh * kw, cin, tn), lambda m, nb: (0, 0, nb)),  # W (bf16)
                pl.BlockSpec((1, tn), lambda m, nb: (0, nb)),                # bias (f32)
            ],
            out_specs=pl.BlockSpec((tm, tn), lambda m, nb: (m, nb)),
            scratch_shapes=[
                pltpu.VMEM((tm + halo, cin), jnp.float32),   # input slab
                pltpu.VMEM((tm, tn), jnp.float32),           # f32 accumulator
                pltpu.SemaphoreType.DMA((1,)),
            ],
        ),
        compiler_params=pltpu.CompilerParams(
            dimension_semantics=("parallel", "arbitrary"),
            vmem_limit_bytes=_VMEM_LIMIT),
    )(xflat, w, bias)


# -----------------------------------------------------------------------------
# Fallback matmul kernels (strided convs: XLA im2col + fused Pallas matmul).
# -----------------------------------------------------------------------------
def _mm_bias_relu_1k_kernel(a_ref, w_ref, bias_ref, o_ref):
    acc = jnp.dot(a_ref[...], w_ref[...], preferred_element_type=jnp.float32)
    o_ref[...] = jnp.maximum(acc + bias_ref[...], 0.0).astype(o_ref.dtype)


def _mm_bias_relu_kernel(a_ref, w_ref, bias_ref, o_ref, acc_ref):
    k = pl.program_id(2)

    @pl.when(k == 0)
    def _():
        acc_ref[...] = jnp.zeros_like(acc_ref)

    acc_ref[...] += jnp.dot(a_ref[...], w_ref[...],
                            preferred_element_type=jnp.float32)

    @pl.when(k == pl.num_programs(2) - 1)
    def _():
        o_ref[...] = jnp.maximum(acc_ref[...] + bias_ref[...],
                                 0.0).astype(o_ref.dtype)


def _fused_matmul_bias_relu(a, w, bias):
    """out[M, Coutp] = relu(a @ w + bias); a (M, Kp) bf16, w (Kp, Coutp) bf16
    (BN scale already folded), bias (1, Coutp) f32."""
    m, kp = a.shape
    _, coutp = w.shape

    tn = _pick_tile(coutp)
    tk = _pick_tile(kp)
    grid_n = coutp // tn
    tm = _pick_tm(m, grid_n)
    mp = _rup(m, tm)
    if mp != m:
        a = jnp.pad(a, ((0, mp - m), (0, 0)))

    if tk == kp:  # single K step: no scratch, no init/finalize phases
        out = pl.pallas_call(
            _mm_bias_relu_1k_kernel,
            out_shape=jax.ShapeDtypeStruct((mp, coutp), jnp.float32),
            grid_spec=pltpu.PrefetchScalarGridSpec(
                num_scalar_prefetch=0,
                grid=(mp // tm, grid_n),
                in_specs=[
                    pl.BlockSpec((tm, kp), lambda i, j: (i, 0)),
                    pl.BlockSpec((kp, tn), lambda i, j: (0, j)),
                    pl.BlockSpec((1, tn), lambda i, j: (0, j)),
                ],
                out_specs=pl.BlockSpec((tm, tn), lambda i, j: (i, j)),
            ),
            compiler_params=pltpu.CompilerParams(
                dimension_semantics=("parallel", "parallel"),
                vmem_limit_bytes=_VMEM_LIMIT),
        )(a, w, bias)
    else:
        out = pl.pallas_call(
            _mm_bias_relu_kernel,
            out_shape=jax.ShapeDtypeStruct((mp, coutp), jnp.float32),
            grid_spec=pltpu.PrefetchScalarGridSpec(
                num_scalar_prefetch=0,
                grid=(mp // tm, grid_n, kp // tk),
                in_specs=[
                    pl.BlockSpec((tm, tk), lambda i, j, k: (i, k)),
                    pl.BlockSpec((tk, tn), lambda i, j, k: (k, j)),
                    pl.BlockSpec((1, tn), lambda i, j, k: (0, j)),
                ],
                out_specs=pl.BlockSpec((tm, tn), lambda i, j, k: (i, j)),
                scratch_shapes=[pltpu.VMEM((tm, tn), jnp.float32)],
            ),
            compiler_params=pltpu.CompilerParams(
                dimension_semantics=("parallel", "parallel", "arbitrary"),
                vmem_limit_bytes=_VMEM_LIMIT),
        )(a, w, bias)

    return out[:m] if mp != m else out


# -----------------------------------------------------------------------------
# ConvBnRelu forward (glue in one jit; conv + BN + ReLU fused in Pallas)
# -----------------------------------------------------------------------------
def _conv_bn_relu_forward(x_nchw, w, bias, *, kh, kw, cin, cout, coutp,
                          stride, padding, kp):
    n = x_nchw.shape[0]
    if stride == 1:
        # Activations stay f32 in HBM (cast to bf16 in-kernel before the dot).
        x = jnp.transpose(x_nchw.astype(jnp.float32), (0, 2, 3, 1))      # NHWC
        xpad = jnp.pad(x, ((0, 0), (padding, padding), (padding, padding), (0, 0)))
        hp, wp = xpad.shape[1], xpad.shape[2]
        oh, ow = hp - kh + 1, wp - kw + 1
        yfull = _conv2d_bn_relu_stream(xpad, w, bias, kh=kh, kw=kw, coutp=coutp)
        out = yfull[:n * hp * wp].reshape(n, hp, wp, coutp)[:, :oh, :ow, :cout]
    else:
        # TODO(synk): stream strided windows from HBM too (needs strided DMA);
        # for now im2col in XLA (bf16 before the transpose to halve that pass).
        x = jnp.transpose(x_nchw.astype(jnp.bfloat16), (0, 2, 3, 1))
        xpad = jnp.pad(x, ((0, 0), (padding, padding), (padding, padding), (0, 0)))
        hp, wp = xpad.shape[1], xpad.shape[2]
        oh = (hp - kh) // stride + 1
        ow = (wp - kw) // stride + 1
        cols = []
        for i in range(kh):
            for j in range(kw):
                cols.append(xpad[:, i:i + stride * (oh - 1) + 1:stride,
                                 j:j + stride * (ow - 1) + 1:stride, :])
        patches = jnp.concatenate(cols, axis=-1).reshape(n * oh * ow, kh * kw * cin)
        if kp != kh * kw * cin:  # K-pad (zeros contribute nothing to the dot)
            patches = jnp.pad(patches, ((0, 0), (0, kp - kh * kw * cin)))
        out = _fused_matmul_bias_relu(patches, w, bias)
        out = out[:, :cout].reshape(n, oh, ow, cout)
    return jnp.transpose(out, (0, 3, 1, 2))                              # NCHW


def fold_bn(gamma, beta, running_mean, running_var, eps=BN_EPS):
    scale = gamma / jnp.sqrt(running_var + eps)
    bias = beta - running_mean * scale
    return scale.astype(jnp.float32), bias.astype(jnp.float32)


class ConvBnRelu:
    """Pallas-TPU equivalent of the PyTorch ConvBnRelu module (eval-mode BN)."""

    def __init__(self, in_ch, out_ch, kernel_size, padding, stride, *, key):
        kconv, kg, kb, km, kv = jax.random.split(key, 5)
        fan_out = kernel_size * kernel_size * out_ch
        # PyTorch-layout raw parameters (kept for the pure-JAX reference check).
        self.weight = jax.random.normal(
            kconv, (out_ch, in_ch, kernel_size, kernel_size),
            jnp.float32) * (2.0 / fan_out) ** 0.5
        self.gamma = 1.0 + 0.1 * jax.random.normal(kg, (out_ch,), jnp.float32)
        self.beta = 0.1 * jax.random.normal(kb, (out_ch,), jnp.float32)
        self.running_mean = 0.1 * jax.random.normal(km, (out_ch,), jnp.float32)
        self.running_var = jnp.abs(jax.random.normal(kv, (out_ch,), jnp.float32)) + 0.5
        self.stride, self.padding = stride, padding
        self.kernel_size, self.in_ch, self.out_ch = kernel_size, in_ch, out_ch

        # ---- one-time prep: fold BN scale into W (in f32), relayout, pad, bf16 ----
        scale, bias = fold_bn(self.gamma, self.beta,
                              self.running_mean, self.running_var)
        coutp = _rup(out_ch, LANE)                               # lane-dense output
        w_folded = self.weight * scale[:, None, None, None]       # fold before bf16 cast
        w_khwc = jnp.transpose(w_folded, (2, 3, 1, 0))            # (KH, KW, Cin, Cout)
        k_dim = kernel_size * kernel_size * in_ch
        if stride == 1:
            wprep = w_khwc.reshape(kernel_size * kernel_size, in_ch, out_ch)
            wprep = jnp.pad(wprep, ((0, 0), (0, 0), (0, coutp - out_ch)))
            kp = k_dim
        else:
            kp = _rup(k_dim, LANE)                                # K-pad for full MXU feeds
            wprep = w_khwc.reshape(k_dim, out_ch)
            wprep = jnp.pad(wprep, ((0, kp - k_dim), (0, coutp - out_ch)))
        self._w = wprep.astype(jnp.bfloat16)
        self._bias = jnp.pad(bias, (0, coutp - out_ch)).reshape(1, coutp)

        # Whole forward in one jit program (static conv geometry baked in).
        self._fwd = jax.jit(functools.partial(
            _conv_bn_relu_forward,
            kh=kernel_size, kw=kernel_size, cin=in_ch, cout=out_ch,
            coutp=coutp, stride=stride, padding=padding, kp=kp))

    def __call__(self, x_nchw):
        return self._fwd(x_nchw, self._w, self._bias)


# -----------------------------------------------------------------------------
# Pure-JAX reference (for correctness check only)
# -----------------------------------------------------------------------------
def reference_conv_bn_relu(x, layer):
    y = jax.lax.conv_general_dilated(
        x.astype(jnp.float32), layer.weight.astype(jnp.float32),
        window_strides=(layer.stride, layer.stride),
        padding=((layer.padding, layer.padding), (layer.padding, layer.padding)),
        dimension_numbers=("NCHW", "OIHW", "NCHW"))
    scale, bias = fold_bn(layer.gamma, layer.beta,
                          layer.running_mean, layer.running_var)
    y = y * scale[None, :, None, None] + bias[None, :, None, None]
    return jnp.maximum(y, 0.0)


# -----------------------------------------------------------------------------
if __name__ == "__main__":
    key = jax.random.PRNGKey(0)

    configs = [
        # stride=1 -> streaming (no-HBM-im2col) kernel
        dict(batch=2, in_ch=4, out_ch=32, hw=16, ksize=3, padding=1, stride=1),
        # stride=2, Kp=256 -> single-K-step fused matmul kernel
        dict(batch=2, in_ch=16, out_ch=64, hw=16, ksize=3, padding=1, stride=2),
        # stride=2, Kp=640 -> multi-K-step fused matmul kernel (accumulator path)
        dict(batch=2, in_ch=64, out_ch=128, hw=16, ksize=3, padding=1, stride=2),
    ]

    for cfg in configs:
        key, kparam, kx = jax.random.split(key, 3)
        layer = ConvBnRelu(cfg["in_ch"], cfg["out_ch"], cfg["ksize"],
                           cfg["padding"], cfg["stride"], key=kparam)
        x = jax.random.normal(kx, (cfg["batch"], cfg["in_ch"], cfg["hw"], cfg["hw"]),
                              jnp.float32)

        out = jax.block_until_ready(layer(x))
        ref = jax.block_until_ready(reference_conv_bn_relu(x, layer))

        assert out.shape == ref.shape, (out.shape, ref.shape)
        assert bool(jnp.all(jnp.isfinite(out)))
        rel_err = float(jnp.max(jnp.abs(out - ref)) / (jnp.max(jnp.abs(ref)) + 1e-6))
        assert rel_err < 3e-2, rel_err   # bf16-MXU / f32-accumulate tolerance

    print("KERNEL_OK")
</pallas_src>

<mosaic_0001>
module attributes {stable_mosaic.version = 11 : i64} {
  func.func @kernel(%arg0: i32, %arg1: i32, %arg2: memref<694x4xf32, #tpu.memory_space<any>>, %arg3: memref<9x4x128xbf16, #tpu.memory_space<vmem>>, %arg4: memref<1x128xf32, #tpu.memory_space<vmem>>, %arg5: memref<328x128xf32, #tpu.memory_space<vmem>>, %arg6: memref<366x4xf32, #tpu.memory_space<vmem>>, %arg7: memref<328x128xf32, #tpu.memory_space<vmem>>, %arg8: memref<1x!tpu.dma_semaphore, #tpu.memory_space<semaphore_mem>>) attributes {dimension_semantics = [#tpu.dimension_semantics<parallel>, #tpu.dimension_semantics<arbitrary>], iteration_bounds = array<i64: 2, 1>, scalar_prefetch = 0 : i64, scratch_operands = 3 : i64, tpu.core_type = #tpu.core_type<tc>, window_params = [{}, {transform_indices = @transform_1, window_bounds = array<i64: 9, 4, 128>}, {transform_indices = @transform_2, window_bounds = array<i64: 1, 128>}, {transform_indices = @transform_3, window_bounds = array<i64: 328, 128>}]} {
    %c0_i32 = arith.constant 0 : i32
    %0 = arith.cmpi eq, %arg1, %c0_i32 : i32
    %1 = arith.extui %0 : i1 to i32
    %c0_i32_0 = arith.constant 0 : i32
    %2 = arith.cmpi ne, %1, %c0_i32_0 : i32
    scf.if %2 {
      %c328_i32 = arith.constant 328 : i32
      %80 = arith.muli %arg0, %c328_i32 : i32
      %c0_i32_80 = arith.constant 0 : i32
      %c0_i32_81 = arith.constant 0 : i32
      %81 = tpu.memref_slice %arg2[%80, %c0_i32_81] : memref<694x4xf32, #tpu.memory_space<any>> -> memref<366x4xf32, #tpu.memory_space<any>>
      %82 = tpu.memref_slice %arg8[%c0_i32_80] : memref<1x!tpu.dma_semaphore, #tpu.memory_space<semaphore_mem>> -> memref<1x!tpu.dma_semaphore, #tpu.memory_space<semaphore_mem>>
      %83 = tpu.memref_squeeze %82 : memref<1x!tpu.dma_semaphore, #tpu.memory_space<semaphore_mem>> -> memref<!tpu.dma_semaphore, #tpu.memory_space<semaphore_mem>>
      tpu.enqueue_dma source(%81 : memref<366x4xf32, #tpu.memory_space<any>>) target(%arg6 : memref<366x4xf32, #tpu.memory_space<vmem>>) target_semaphore(%83 : memref<!tpu.dma_semaphore, #tpu.memory_space<semaphore_mem>>)
      %c0_i32_82 = arith.constant 0 : i32
      %c0_i32_83 = arith.constant 0 : i32
      %84 = tpu.memref_slice %arg2[%80, %c0_i32_83] : memref<694x4xf32, #tpu.memory_space<any>> -> memref<366x4xf32, #tpu.memory_space<any>>
      %85 = tpu.memref_slice %arg8[%c0_i32_82] : memref<1x!tpu.dma_semaphore, #tpu.memory_space<semaphore_mem>> -> memref<1x!tpu.dma_semaphore, #tpu.memory_space<semaphore_mem>>
      %86 = tpu.memref_squeeze %85 : memref<1x!tpu.dma_semaphore, #tpu.memory_space<semaphore_mem>> -> memref<!tpu.dma_semaphore, #tpu.memory_space<semaphore_mem>>
      tpu.wait_dma2 semaphore(%86 : memref<!tpu.dma_semaphore, #tpu.memory_space<semaphore_mem>>) src(%84 : memref<366x4xf32, #tpu.memory_space<any>>) dst(%arg6 : memref<366x4xf32, #tpu.memory_space<vmem>>)
    } else {
    }
    %c0 = arith.constant 0 : index
    %c0_1 = arith.constant 0 : index
    %3 = vector.load %arg6[%c0, %c0_1] : memref<366x4xf32, #tpu.memory_space<vmem>>, vector<328x4xf32>
    %4 = arith.truncf %3 : vector<328x4xf32> to vector<328x4xbf16>
    %c0_2 = arith.constant 0 : index
    %c0_3 = arith.constant 0 : index
    %c0_4 = arith.constant 0 : index
    %5 = vector.load %arg3[%c0_2, %c0_3, %c0_4] : memref<9x4x128xbf16, #tpu.memory_space<vmem>>, vector<1x4x128xbf16>
    %6 = vector.shape_cast %5 : vector<1x4x128xbf16> to vector<4x128xbf16>
    %cst = arith.constant dense<0.000000e+00> : vector<328x128xf32>
    %7 = tpu.matmul %4, %6, %cst {dimension_numbers = #tpu.dot_dimension_numbers<[1], [0], [0], [1], [0, 0, 1, 1], [], []>} : vector<328x4xbf16>, vector<4x128xbf16>, vector<328x128xf32> -> vector<328x128xf32>
    %c0_5 = arith.constant 0 : index
    %c0_6 = arith.constant 0 : index
    %8 = vector.load %arg7[%c0_5, %c0_6] : memref<328x128xf32, #tpu.memory_space<vmem>>, vector<328x128xf32>
    tpu.vector_store %arg7[%c0_5, %c0_6], %7 {strides = array<i32>} : memref<328x128xf32, #tpu.memory_space<vmem>>, vector<328x128xf32>,
    %c1 = arith.constant 1 : index
    %c0_7 = arith.constant 0 : index
    %9 = vector.load %arg6[%c1, %c0_7] : memref<366x4xf32, #tpu.memory_space<vmem>>, vector<328x4xf32>
    %10 = arith.truncf %9 : vector<328x4xf32> to vector<328x4xbf16>
    %c1_8 = arith.constant 1 : index
    %c0_9 = arith.constant 0 : index
    %c0_10 = arith.constant 0 : index
    %11 = vector.load %arg3[%c1_8, %c0_9, %c0_10] : memref<9x4x128xbf16, #tpu.memory_space<vmem>>, vector<1x4x128xbf16>
    %12 = vector.shape_cast %11 : vector<1x4x128xbf16> to vector<4x128xbf16>
    %cst_11 = arith.constant dense<0.000000e+00> : vector<328x128xf32>
    %13 = tpu.matmul %10, %12, %cst_11 {dimension_numbers = #tpu.dot_dimension_numbers<[1], [0], [0], [1], [0, 0, 1, 1], [], []>} : vector<328x4xbf16>, vector<4x128xbf16>, vector<328x128xf32> -> vector<328x128xf32>
    %c0_12 = arith.constant 0 : index
    %c0_13 = arith.constant 0 : index
    %14 = vector.load %arg7[%c0_12, %c0_13] : memref<328x128xf32, #tpu.memory_space<vmem>>, vector<328x128xf32>
    %15 = arith.addf %14, %13 : vector<328x128xf32>
    %c0_14 = arith.constant 0 : index
    %c0_15 = arith.constant 0 : index
    %16 = vector.load %arg7[%c0_14, %c0_15] : memref<328x128xf32, #tpu.memory_space<vmem>>, vector<328x128xf32>
    tpu.vector_store %arg7[%c0_14, %c0_15], %15 {strides = array<i32>} : memref<328x128xf32, #tpu.memory_space<vmem>>, vector<328x128xf32>,
    %c2 = arith.constant 2 : index
    %c0_16 = arith.constant 0 : index
    %17 = vector.load %arg6[%c2, %c0_16] : memref<366x4xf32, #tpu.memory_space<vmem>>, vector<328x4xf32>
    %18 = arith.truncf %17 : vector<328x4xf32> to vector<328x4xbf16>
    %c2_17 = arith.constant 2 : index
    %c0_18 = arith.constant 0 : index
    %c0_19 = arith.constant 0 : index
    %19 = vector.load %arg3[%c2_17, %c0_18, %c0_19] : memref<9x4x128xbf16, #tpu.memory_space<vmem>>, vector<1x4x128xbf16>
    %20 = vector.shape_cast %19 : vector<1x4x128xbf16> to vector<4x128xbf16>
    %cst_20 = arith.constant dense<0.000000e+00> : vector<328x128xf32>
    %21 = tpu.matmul %18, %20, %cst_20 {dimension_numbers = #tpu.dot_dimension_numbers<[1], [0], [0], [1], [0, 0, 1, 1], [], []>} : vector<328x4xbf16>, vector<4x128xbf16>, vector<328x128xf32> -> vector<328x128xf32>
    %c0_21 = arith.constant 0 : index
    %c0_22 = arith.constant 0 : index
    %22 = vector.load %arg7[%c0_21, %c0_22] : memref<328x128xf32, #tpu.memory_space<vmem>>, vector<328x128xf32>
    %23 = arith.addf %22, %21 : vector<328x128xf32>
    %c0_23 = arith.constant 0 : index
    %c0_24 = arith.constant 0 : index
    %24 = vector.load %arg7[%c0_23, %c0_24] : memref<328x128xf32, #tpu.memory_space<vmem>>, vector<328x128xf32>
    tpu.vector_store %arg7[%c0_23, %c0_24], %23 {strides = array<i32>} : memref<328x128xf32, #tpu.memory_space<vmem>>, vector<328x128xf32>,
    %c18 = arith.constant 18 : index
    %c0_25 = arith.constant 0 : index
    %25 = vector.load %arg6[%c18, %c0_25] : memref<366x4xf32, #tpu.memory_space<vmem>>, vector<328x4xf32>
    %26 = arith.truncf %25 : vector<328x4xf32> to vector<328x4xbf16>
    %c3 = arith.constant 3 : index
    %c0_26 = arith.constant 0 : index
    %c0_27 = arith.constant 0 : index
    %27 = vector.load %arg3[%c3, %c0_26, %c0_27] : memref<9x4x128xbf16, #tpu.memory_space<vmem>>, vector<1x4x128xbf16>
    %28 = vector.shape_cast %27 : vector<1x4x128xbf16> to vector<4x128xbf16>
    %cst_28 = arith.constant dense<0.000000e+00> : vector<328x128xf32>
    %29 = tpu.matmul %26, %28, %cst_28 {dimension_numbers = #tpu.dot_dimension_numbers<[1], [0], [0], [1], [0, 0, 1, 1], [], []>} : vector<328x4xbf16>, vector<4x128xbf16>, vector<328x128xf32> -> vector<328x128xf32>
    %c0_29 = arith.constant 0 : index
    %c0_30 = arith.constant 0 : index
    %30 = vector.load %arg7[%c0_29, %c0_30] : memref<328x128xf32, #tpu.memory_space<vmem>>, vector<328x128xf32>
    %31 = arith.addf %30, %29 : vector<328x128xf32>
    %c0_31 = arith.constant 0 : index
    %c0_32 = arith.constant 0 : index
    %32 = vector.load %arg7[%c0_31, %c0_32] : memref<328x128xf32, #tpu.memory_space<vmem>>, vector<328x128xf32>
    tpu.vector_store %arg7[%c0_31, %c0_32], %31 {strides = array<i32>} : memref<328x128xf32, #tpu.memory_space<vmem>>, vector<328x128xf32>,
    %c19 = arith.constant 19 : index
    %c0_33 = arith.constant 0 : index
    %33 = vector.load %arg6[%c19, %c0_33] : memref<366x4xf32, #tpu.memory_space<vmem>>, vector<328x4xf32>
    %34 = arith.truncf %33 : vector<328x4xf32> to vector<328x4xbf16>
    %c4 = arith.constant 4 : index
    %c0_34 = arith.constant 0 : index
    %c0_35 = arith.constant 0 : index
    %35 = vector.load %arg3[%c4, %c0_34, %c0_35] : memref<9x4x128xbf16, #tpu.memory_space<vmem>>, vector<1x4x128xbf16>
    %36 = vector.shape_cast %35 : vector<1x4x128xbf16> to vector<4x128xbf16>
    %cst_36 = arith.constant dense<0.000000e+00> : vector<328x128xf32>
    %37 = tpu.matmul %34, %36, %cst_36 {dimension_numbers = #tpu.dot_dimension_numbers<[1], [0], [0], [1], [0, 0, 1, 1], [], []>} : vector<328x4xbf16>, vector<4x128xbf16>, vector<328x128xf32> -> vector<328x128xf32>
    %c0_37 = arith.constant 0 : index
    %c0_38 = arith.constant 0 : index
    %38 = vector.load %arg7[%c0_37, %c0_38] : memref<328x128xf32, #tpu.memory_space<vmem>>, vector<328x128xf32>
    %39 = arith.addf %38, %37 : vector<328x128xf32>
    %c0_39 = arith.constant 0 : index
    %c0_40 = arith.constant 0 : index
    %40 = vector.load %arg7[%c0_39, %c0_40] : memref<328x128xf32, #tpu.memory_space<vmem>>, vector<328x128xf32>
    tpu.vector_store %arg7[%c0_39, %c0_40], %39 {strides = array<i32>} : memref<328x128xf32, #tpu.memory_space<vmem>>, vector<328x128xf32>,
    %c20 = arith.constant 20 : index
    %c0_41 = arith.constant 0 : index
    %41 = vector.load %arg6[%c20, %c0_41] : memref<366x4xf32, #tpu.memory_space<vmem>>, vector<328x4xf32>
    %42 = arith.truncf %41 : vector<328x4xf32> to vector<328x4xbf16>
    %c5 = arith.constant 5 : index
    %c0_42 = arith.constant 0 : index
    %c0_43 = arith.constant 0 : index
    %43 = vector.load %arg3[%c5, %c0_42, %c0_43] : memref<9x4x128xbf16, #tpu.memory_space<vmem>>, vector<1x4x128xbf16>
    %44 = vector.shape_cast %43 : vector<1x4x128xbf16> to vector<4x128xbf16>
    %cst_44 = arith.constant dense<0.000000e+00> : vector<328x128xf32>
    %45 = tpu.matmul %42, %44, %cst_44 {dimension_numbers = #tpu.dot_dimension_numbers<[1], [0], [0], [1], [0, 0, 1, 1], [], []>} : vector<328x4xbf16>, vector<4x128xbf16>, vector<328x128xf32> -> vector<328x128xf32>
    %c0_45 = arith.constant 0 : index
    %c0_46 = arith.constant 0 : index
    %46 = vector.load %arg7[%c0_45, %c0_46] : memref<328x128xf32, #tpu.memory_space<vmem>>, vector<328x128xf32>
    %47 = arith.addf %46, %45 : vector<328x128xf32>
    %c0_47 = arith.constant 0 : index
    %c0_48 = arith.constant 0 : index
    %48 = vector.load %arg7[%c0_47, %c0_48] : memref<328x128xf32, #tpu.memory_space<vmem>>, vector<328x128xf32>
    tpu.vector_store %arg7[%c0_47, %c0_48], %47 {strides = array<i32>} : memref<328x128xf32, #tpu.memory_space<vmem>>, vector<328x128xf32>,
    %c36 = arith.constant 36 : index
    %c0_49 = arith.constant 0 : index
    %49 = vector.load %arg6[%c36, %c0_49] : memref<366x4xf32, #tpu.memory_space<vmem>>, vector<328x4xf32>
    %50 = arith.truncf %49 : vector<328x4xf32> to vector<328x4xbf16>
    %c6 = arith.constant 6 : index
    %c0_50 = arith.constant 0 : index
    %c0_51 = arith.constant 0 : index
    %51 = vector.load %arg3[%c6, %c0_50, %c0_51] : memref<9x4x128xbf16, #tpu.memory_space<vmem>>, vector<1x4x128xbf16>
    %52 = vector.shape_cast %51 : vector<1x4x128xbf16> to vector<4x128xbf16>
    %cst_52 = arith.constant dense<0.000000e+00> : vector<328x128xf32>
    %53 = tpu.matmul %50, %52, %cst_52 {dimension_numbers = #tpu.dot_dimension_numbers<[1], [0], [0], [1], [0, 0, 1, 1], [], []>} : vector<328x4xbf16>, vector<4x128xbf16>, vector<328x128xf32> -> vector<328x128xf32>
    %c0_53 = arith.constant 0 : index
    %c0_54 = arith.constant 0 : index
    %54 = vector.load %arg7[%c0_53, %c0_54] : memref<328x128xf32, #tpu.memory_space<vmem>>, vector<328x128xf32>
    %55 = arith.addf %54, %53 : vector<328x128xf32>
    %c0_55 = arith.constant 0 : index
    %c0_56 = arith.constant 0 : index
    %56 = vector.load %arg7[%c0_55, %c0_56] : memref<328x128xf32, #tpu.memory_space<vmem>>, vector<328x128xf32>
    tpu.vector_store %arg7[%c0_55, %c0_56], %55 {strides = array<i32>} : memref<328x128xf32, #tpu.memory_space<vmem>>, vector<328x128xf32>,
    %c37 = arith.constant 37 : index
    %c0_57 = arith.constant 0 : index
    %57 = vector.load %arg6[%c37, %c0_57] : memref<366x4xf32, #tpu.memory_space<vmem>>, vector<328x4xf32>
    %58 = arith.truncf %57 : vector<328x4xf32> to vector<328x4xbf16>
    %c7 = arith.constant 7 : index
    %c0_58 = arith.constant 0 : index
    %c0_59 = arith.constant 0 : index
    %59 = vector.load %arg3[%c7, %c0_58, %c0_59] : memref<9x4x128xbf16, #tpu.memory_space<vmem>>, vector<1x4x128xbf16>
    %60 = vector.shape_cast %59 : vector<1x4x128xbf16> to vector<4x128xbf16>
    %cst_60 = arith.constant dense<0.000000e+00> : vector<328x128xf32>
    %61 = tpu.matmul %58, %60, %cst_60 {dimension_numbers = #tpu.dot_dimension_numbers<[1], [0], [0], [1], [0, 0, 1, 1], [], []>} : vector<328x4xbf16>, vector<4x128xbf16>, vector<328x128xf32> -> vector<328x128xf32>
    %c0_61 = arith.constant 0 : index
    %c0_62 = arith.constant 0 : index
    %62 = vector.load %arg7[%c0_61, %c0_62] : memref<328x128xf32, #tpu.memory_space<vmem>>, vector<328x128xf32>
    %63 = arith.addf %62, %61 : vector<328x128xf32>
    %c0_63 = arith.constant 0 : index
    %c0_64 = arith.constant 0 : index
    %64 = vector.load %arg7[%c0_63, %c0_64] : memref<328x128xf32, #tpu.memory_space<vmem>>, vector<328x128xf32>
    tpu.vector_store %arg7[%c0_63, %c0_64], %63 {strides = array<i32>} : memref<328x128xf32, #tpu.memory_space<vmem>>, vector<328x128xf32>,
    %c38 = arith.constant 38 : index
    %c0_65 = arith.constant 0 : index
    %65 = vector.load %arg6[%c38, %c0_65] : memref<366x4xf32, #tpu.memory_space<vmem>>, vector<328x4xf32>
    %66 = arith.truncf %65 : vector<328x4xf32> to vector<328x4xbf16>
    %c8 = arith.constant 8 : index
    %c0_66 = arith.constant 0 : index
    %c0_67 = arith.constant 0 : index
    %67 = vector.load %arg3[%c8, %c0_66, %c0_67] : memref<9x4x128xbf16, #tpu.memory_space<vmem>>, vector<1x4x128xbf16>
    %68 = vector.shape_cast %67 : vector<1x4x128xbf16> to vector<4x128xbf16>
    %cst_68 = arith.constant dense<0.000000e+00> : vector<328x128xf32>
    %69 = tpu.matmul %66, %68, %cst_68 {dimension_numbers = #tpu.dot_dimension_numbers<[1], [0], [0], [1], [0, 0, 1, 1], [], []>} : vector<328x4xbf16>, vector<4x128xbf16>, vector<328x128xf32> -> vector<328x128xf32>
    %c0_69 = arith.constant 0 : index
    %c0_70 = arith.constant 0 : index
    %70 = vector.load %arg7[%c0_69, %c0_70] : memref<328x128xf32, #tpu.memory_space<vmem>>, vector<328x128xf32>
    %71 = arith.addf %70, %69 : vector<328x128xf32>
    %c0_71 = arith.constant 0 : index
    %c0_72 = arith.constant 0 : index
    %72 = vector.load %arg7[%c0_71, %c0_72] : memref<328x128xf32, #tpu.memory_space<vmem>>, vector<328x128xf32>
    tpu.vector_store %arg7[%c0_71, %c0_72], %71 {strides = array<i32>} : memref<328x128xf32, #tpu.memory_space<vmem>>, vector<328x128xf32>,
    %c0_73 = arith.constant 0 : index
    %c0_74 = arith.constant 0 : index
    %73 = vector.load %arg7[%c0_73, %c0_74] : memref<328x128xf32, #tpu.memory_space<vmem>>, vector<328x128xf32>
    %c0_75 = arith.constant 0 : index
    %c0_76 = arith.constant 0 : index
    %74 = vector.load %arg4[%c0_75, %c0_76] : memref<1x128xf32, #tpu.memory_space<vmem>>, vector<1x128xf32>
    %75 = vector.broadcast %74 : vector<1x128xf32> to vector<328x128xf32>
    %76 = arith.addf %73, %75 : vector<328x128xf32>
    %cst_77 = arith.constant 0.000000e+00 : f32
    %77 = vector.broadcast %cst_77 : f32 to vector<328x128xf32>
    %78 = arith.maximumf %76, %77 : vector<328x128xf32>
    %c0_78 = arith.constant 0 : index
    %c0_79 = arith.constant 0 : index
    %79 = vector.load %arg5[%c0_78, %c0_79] : memref<328x128xf32, #tpu.memory_space<vmem>>, vector<328x128xf32>
    tpu.vector_store %arg5[%c0_78, %c0_79], %78 {strides = array<i32>} : memref<328x128xf32, #tpu.memory_space<vmem>>, vector<328x128xf32>,
    return
  }
  func.func @transform_1(%arg0: i32, %arg1: i32) -> (i32, i32, i32) {
    %c0_i32 = arith.constant 0 : i32
    %c0_i32_0 = arith.constant 0 : i32
    %c0_i32_1 = arith.constant 0 : i32
    return %c0_i32, %c0_i32_0, %arg1 : i32, i32, i32
  }
  func.func @transform_2(%arg0: i32, %arg1: i32) -> (i32, i32) {
    %c0_i32 = arith.constant 0 : i32
    %c0_i32_0 = arith.constant 0 : i32
    return %c0_i32, %arg1 : i32, i32
  }
  func.func @transform_3(%arg0: i32, %arg1: i32) -> (i32, i32) {
    %c0_i32 = arith.constant 0 : i32
    return %arg0, %arg1 : i32, i32
  }
}

</mosaic_0001>

<llo_original>
// kernel: _conv_bn_relu_forward.1
$region0: #{_conv_bn_relu_forward.1}
  #allocation0 [shape = 'u32[]', space=smem, size = 0x4, offset = 0x4, fixed_abs, tag = 'smem constant byte address 0x4 - core index']
  #allocation1 [shape = 'u32[144,128]{1,0:T(1,128)}', space=vmem, size = 0x12000, scoped, tag = 'internal scratch']
  #allocation2 [shape = 'f32[366,4]{1,0:T(8,128)}', space=vmem, size = 0x2e000, scoped, tag = 'scratch operand']
  #allocation3 [shape = 'f32[328,128]{1,0:T(8,128)}', space=vmem, size = 0x29000, scoped, tag = 'scratch operand']
  #allocation4 [shape = 's32[1]{0}', space=sflag, size = 0x4, scoped, tag = 'scratch operand']
  #allocation5 [shape = 's32[]', space=sflag, size = 0x4, offset = 0, fixed_abs, tag = 'sflag constant byte address 0x0 - dummy sync flag']
  %s0 = inlined_call_operand.vmem [shape: f32[694,4], index: 0, kind: input, shape index: {}]
  %s1 = inlined_call_operand.vmem [shape: bf16[9,4,128], index: 1, kind: input, shape index: {}]
  %s2 = inlined_call_operand.vmem [shape: f32[1,128], index: 2, kind: input, shape index: {}]
  %s3 = inlined_call_operand.vmem [shape: f32[656,128], index: 3, kind: output, shape index: {}]
  %s4 = sld [smem:[#allocation0]]
  $region82: #{_conv_bn_relu_forward.1} parent=0
    _
  %s6 = ssub.s32 1, %s4
  %s7 = scalar_select 0, %s6, %s4
  loop: start=0, step=1, limit=4
  $region2: #{_conv_bn_relu_forward.1} parent=0 // loop_pre_header
    _
  $region3: #{_conv_bn_relu_forward.1} parent=0 // loop_header
    %s9 = sphi 0, %s13
    %p10 = scmp.ge.s32.totalorder %s9, 4
    %s16 = sphi 0, %s28
    %s17 = sphi 0, %s24
    %s18 = sphi 0, %s16
    %s19 = sphi 0, %s17
    %s20 = sphi 0, %s18
    %s21 = sphi 0, %s19
    %s31 = sphi 0, %s33
    %s34 = sphi 0, %s31
    %s35 = sphi 0, %s34
    %s51 = sphi 0, %s35
    %s57 = sphi 0, %s59
    %s60 = sphi 0, %s57
    %s61 = sphi 0, %s60
    %s77 = sphi 0, %s61
    %s85 = sphi 0, %s87
    %s88 = sphi 0, %s85
    %s89 = sphi 0, %s88
    %s105 = sphi 0, %s89
  $region4: #{_conv_bn_relu_forward.1} parent=0 // loop_header_branch
    %12 = sbr.rel (%p10) target = $region8
  $region5: #{_conv_bn_relu_forward.1} parent=0 // loop_body
    %s14 = ssub.s32 %s9, 1
    %s15 = ssub.s32 %s9, 2
    %s22 = sadd.s32 1, %s17
    %p23 = scmp.ge.s32.totalorder %s22, 1
    %s24 = scalar_select %p23, 0, %s22
    %s25 = sadd.s32 1, %s16
    %s26 = scalar_select %p23, %s25, %s16
    %p27 = scmp.ge.s32.totalorder %s26, 2
    %s28 = scalar_select %p27, 0, %s26
    %s29 = ssub.s32 %s17, %s24
    %p30 = scmp.eq.s32.totalorder %s29, 0
    %s32 = sadd.s32 %s31, 1
    %s33 = scalar_select %p30, %s31, %s32
    %p36 = pneg %p30
    %p37 = scmp.eq.s32.totalorder %s9, 1
    %p38 = por %p36, %p37
    %p39 = scmp.ne.s32.totalorder %s31, %s34
    %p40 = scmp.eq.s32.totalorder %s9, 0
    %p41 = por %p39, %p40
    %p42 = scmp.ne.s32.totalorder %s31, %s34
    %p43 = scmp.eq.s32.totalorder %s14, 1
    %p44 = por %p42, %p43
    %p45 = scmp.ne.s32.totalorder %s34, %s35
    %p46 = scmp.eq.s32.totalorder %s14, 0
    %p47 = por %p45, %p46
    %p48 = scmp.ne.s32.totalorder %s34, %s35
    %p49 = scmp.eq.s32.totalorder %s15, 1
    %p50 = por %p48, %p49
    %p52 = scmp.ne.s32.totalorder %s35, %s51
    %p53 = scmp.eq.s32.totalorder %s15, 0
    %p54 = por %p52, %p53
    %s55 = ssub.s32 %s17, %s24
    %p56 = scmp.eq.s32.totalorder %s55, 0
    %s58 = sadd.s32 %s57, 1
    %s59 = scalar_select %p56, %s57, %s58
    %p62 = pneg %p56
    %p63 = scmp.eq.s32.totalorder %s9, 1
    %p64 = por %p62, %p63
    %p65 = scmp.ne.s32.totalorder %s57, %s60
    %p66 = scmp.eq.s32.totalorder %s9, 0
    %p67 = por %p65, %p66
    %p68 = scmp.ne.s32.totalorder %s57, %s60
    %p69 = scmp.eq.s32.totalorder %s14, 1
    %p70 = por %p68, %p69
    %p71 = scmp.ne.s32.totalorder %s60, %s61
    %p72 = scmp.eq.s32.totalorder %s14, 0
    %p73 = por %p71, %p72
    %p74 = scmp.ne.s32.totalorder %s60, %s61
    %p75 = scmp.eq.s32.totalorder %s15, 1
    %p76 = por %p74, %p75
    %p78 = scmp.ne.s32.totalorder %s61, %s77
    %p79 = scmp.eq.s32.totalorder %s15, 0
    %p80 = por %p78, %p79
    %s81 = ssub.s32 %s16, %s28
    %s82 = ssub.s32 %s17, %s24
    %s83 = sor.u32 %s81, %s82
    %p84 = scmp.eq.s32.totalorder %s83, 0
    %s86 = sadd.s32 %s85, 1
    %s87 = scalar_select %p84, %s85, %s86
    %p90 = pneg %p84
    %p91 = scmp.eq.s32.totalorder %s9, 1
    %p92 = por %p90, %p91
    %p93 = scmp.ne.s32.totalorder %s85, %s88
    %p94 = scmp.eq.s32.totalorder %s9, 0
    %p95 = por %p93, %p94
    %p96 = scmp.ne.s32.totalorder %s85, %s88
    %p97 = scmp.eq.s32.totalorder %s14, 1
    %p98 = por %p96, %p97
    %p99 = scmp.ne.s32.totalorder %s88, %s89
    %p100 = scmp.eq.s32.totalorder %s14, 0
    %p101 = por %p99, %p100
    %p102 = scmp.ne.s32.totalorder %s88, %s89
    %p103 = scmp.eq.s32.totalorder %s15, 1
    %p104 = por %p102, %p103
    %p106 = scmp.ne.s32.totalorder %s89, %s105
    %p107 = scmp.eq.s32.totalorder %s15, 0
    %p108 = por %p106, %p107
    %p109 = scmp.le.s32.totalorder 1, %s9
    %p110 = scmp.lt.s32.totalorder %s9, 3
    %p111 = pnand %p109, %p110
    %p112 = pneg %p111
    // Predicated region
    $region9: #{_conv_bn_relu_forward.1} parent=5 // pred_check
      _
    $region10: #{_conv_bn_relu_forward.1} parent=5 // pred_check_branch
      %114 = sbr.rel (%p111) target = $region12
    $region11: #{_conv_bn_relu_forward.1} parent=5 // pred_region
      %s115 = ssub.s32 %s9, 1
      // Predicated region
      $region13: #{_conv_bn_relu_forward.1} parent=11 // pred_check
        %p116 = pneg %p47
      $region14: #{_conv_bn_relu_forward.1} parent=11 // pred_check_branch
        %118 = sbr.rel (%p116) target = $region16
      $region15: #{_conv_bn_relu_forward.1} parent=11 // pred_region
        %p119 = scmp.lt.s32.totalorder %s19, 0
        %s120 = scalar_select %p119, %s19, 0
        %s121 = smul.addr %s120, 2
        %s122 = scalar_lea.vmem %s1, %s121
      $region16: #{_conv_bn_relu_forward.1} parent=11 // pred_fallthru
        _
      // Predicated region
      $region17: #{_conv_bn_relu_forward.1} parent=11 // pred_check
        %p123 = pneg %p73
      $region18: #{_conv_bn_relu_forward.1} parent=11 // pred_check_branch
        %125 = sbr.rel (%p123) target = $region20
      $region19: #{_conv_bn_relu_forward.1} parent=11 // pred_region
        %p126 = scmp.lt.s32.totalorder %s19, 0
        %s127 = scalar_select %p126, %s19, 0
        %s128 = scalar_lea.vmem %s2, %s127
      $region20: #{_conv_bn_relu_forward.1} parent=11 // pred_fallthru
        _
    $region12: #{_conv_bn_relu_forward.1} parent=5 // pred_fallthru
      _
    %p129 = scmp.lt.s32.totalorder %s9, 2
    // Predicated region
    $region21: #{_conv_bn_relu_forward.1} parent=5 // pred_check
      %p130 = pneg %p129
    $region22: #{_conv_bn_relu_forward.1} parent=5 // pred_check_branch
      %132 = sbr.rel (%p130) target = $region24
    $region23: #{_conv_bn_relu_forward.1} parent=5 // pred_region
      _
    $region24: #{_conv_bn_relu_forward.1} parent=5 // pred_fallthru
      _
    %p133 = scmp.le.s32.totalorder 1, %s9
    %p134 = scmp.lt.s32.totalorder %s9, 3
    %p135 = pnand %p133, %p134
    %p136 = pneg %p135
    // Predicated region
    $region25: #{_conv_bn_relu_forward.1} parent=5 // pred_check
      _
    $region26: #{_conv_bn_relu_forward.1} parent=5 // pred_check_branch
      %138 = sbr.rel (%p135) target = $region28
    $region27: #{_conv_bn_relu_forward.1} parent=5 // pred_region
      %s139 = ssub.s32 %s9, 1
      %p140 = scmp.lt.s32.totalorder %s19, 0
      %s141 = scalar_select %p140, %s19, 0
      %s142 = smul.addr %s141, 2
      %s143 = scalar_lea.vmem %s1, %s142
      %p144 = pneg %p47
      %p145 = pneg %p44
      %p146 = scmp.lt.s32.totalorder %s19, 0
      %s147 = scalar_select %p146, %s19, 0
      %s148 = scalar_lea.vmem %s2, %s147
      %p149 = pneg %p73
      %p150 = pneg %p70
      %p151 = pneg %p101
      %p152 = pneg %p98
      %s153 = smul.u32 41, %s18
      %p154 = scmp.lt.s32.totalorder %s153, 81
      %s155 = scalar_select %p154, %s153, 81
      %p156 = scmp.lt.s32.totalorder %s19, 0
      %s157 = scalar_select %p156, %s19, 0
      %s158 = sadd.s32 %s157, %s155
      %s159 = smul.addr %s158, 8
      %s160 = scalar_lea.vmem %s3, %s159
      %p161 = scmp.lt.s32.totalorder %s19, 0
      %s162 = scalar_select %p161, %s19, 0
      %s163 = smul.addr %s162, 2
      %s164 = scalar_lea.vmem %s1, %s163
      %p165 = scmp.lt.s32.totalorder %s19, 0
      %s166 = scalar_select %p165, %s19, 0
      %s167 = scalar_lea.vmem %s2, %s166
      %s168 = smul.u32 41, %s18
      %p169 = scmp.lt.s32.totalorder %s168, 81
      %s170 = scalar_select %p169, %s168, 81
      %p171 = scmp.lt.s32.totalorder %s19, 0
      %s172 = scalar_select %p171, %s19, 0
      %s173 = sadd.s32 %s172, %s170
      %s174 = smul.addr %s173, 8
      %s175 = scalar_lea.vmem %s3, %s174
      %s176 = smul.u32 41, %s18
      %p178 = scmp.eq.s32.totalorder %s19, 0
      // Predicated region
      $region29: #{_conv_bn_relu_forward.1} parent=27 // pred_check
        %p179 = pneg %p178
      $region30: #{_conv_bn_relu_forward.1} parent=27 // pred_check_branch
        %181 = sbr.rel (%p179) target = $region32
      $region31: #{_conv_bn_relu_forward.1} parent=27 // pred_region
        %s182 = smul.u32 %s18, 328
        %s183 = scalar_lea.vmem %s0, %s182
        %p185 = scmp.lt.u32.totalorder 366, 8
        %p186 = pneg %p185
        // Predicated region
        $region33: #{_conv_bn_relu_forward.1} parent=31 // pred_check
          _
        $region34: #{_conv_bn_relu_forward.1} parent=31 // pred_check_branch
          %188 = sbr.rel (%p185) target = $region36
        $region35: #{_conv_bn_relu_forward.1} parent=31 // pred_region
          %s203 = sand.u32 366, 7
          %p204 = scmp.eq.s32.totalorder %s203, 0
          %p205 = pneg %p204
          // Predicated region
          $region48: #{_conv_bn_relu_forward.1} parent=35 // pred_check
            _
          $region49: #{_conv_bn_relu_forward.1} parent=35 // pred_check_branch
            %207 = sbr.rel (%p204) target = $region51
          $region50: #{_conv_bn_relu_forward.1} parent=35 // pred_region
            %s208 = sand.u32 366, 7
            %s209 = ssub.s32 366, %s208
            %s210 = scalar_lea.vmem %s183, %s209
            %s211 = ssub.s32 366, %s208
            %s212 = scalar_lea.vmem [#allocation2], %s211
            loop: start=0, step=1, limit=1
            $region52: #{_conv_bn_relu_forward.1} parent=50 // loop_pre_header
              _
            $region53: #{_conv_bn_relu_forward.1} parent=50 // loop_header
              %s214 = sphi 0, %s218
              %p215 = scmp.ge.s32.totalorder %s214, 1
              %s219 = sphi %s183, %s183
              %s220 = sphi [#allocation2], [#allocation2]
            $region54: #{_conv_bn_relu_forward.1} parent=50 // loop_header_branch
              %217 = sbr.rel (%p215) target = $region58
            $region55: #{_conv_bn_relu_forward.1} parent=50 // loop_body
              %v221 = vld [vmem:[%s219] sm:$0xff]
              %222 = vst [vmem:[%s220] sm:$0xff] %v221
              %v223 = vld [vmem:[%s219 + $0x8] sm:$0xff]
              %224 = vst [vmem:[%s220 + $0x8] sm:$0xff] %v223
              %v225 = vld [vmem:[%s219 + $0x10] sm:$0xff]
              %226 = vst [vmem:[%s220 + $0x10] sm:$0xff] %v225
              %v227 = vld [vmem:[%s219 + $0x18] sm:$0xff]
              %228 = vst [vmem:[%s220 + $0x18] sm:$0xff] %v227
              %v229 = vld [vmem:[%s219 + $0x20] sm:$0xff]
              %230 = vst [vmem:[%s220 + $0x20] sm:$0xff] %v229
              %v231 = vld [vmem:[%s219 + $0x28] sm:$0xff]
              %232 = vst [vmem:[%s220 + $0x28] sm:$0xff] %v231
              %v233 = vld [vmem:[%s219 + $0x30] sm:$0xff]
              %234 = vst [vmem:[%s220 + $0x30] sm:$0xff] %v233
              %v235 = vld [vmem:[%s219 + $0x38] sm:$0xff]
              %236 = vst [vmem:[%s220 + $0x38] sm:$0xff] %v235
              %v237 = vld [vmem:[%s219 + $0x40] sm:$0xff]
              %238 = vst [vmem:[%s220 + $0x40] sm:$0xff] %v237
              %v239 = vld [vmem:[%s219 + $0x48] sm:$0xff]
              %240 = vst [vmem:[%s220 + $0x48] sm:$0xff] %v239
              %v241 = vld [vmem:[%s219 + $0x50] sm:$0xff]
              %242 = vst [vmem:[%s220 + $0x50] sm:$0xff] %v241
              %v243 = vld [vmem:[%s219 + $0x58] sm:$0xff]
              %244 = vst [vmem:[%s220 + $0x58] sm:$0xff] %v243
              %v245 = vld [vmem:[%s219 + $0x60] sm:$0xff]
              %246 = vst [vmem:[%s220 + $0x60] sm:$0xff] %v245
              %v247 = vld [vmem:[%s219 + $0x68] sm:$0xff]
              %248 = vst [vmem:[%s220 + $0x68] sm:$0xff] %v247
              %v249 = vld [vmem:[%s219 + $0x70] sm:$0xff]
              %250 = vst [vmem:[%s220 + $0x70] sm:$0xff] %v249
              %v251 = vld [vmem:[%s219 + $0x78] sm:$0xff]
              %252 = vst [vmem:[%s220 + $0x78] sm:$0xff] %v251
              %v253 = vld [vmem:[%s219 + $0x80] sm:$0xff]
              %254 = vst [vmem:[%s220 + $0x80] sm:$0xff] %v253
              %v255 = vld [vmem:[%s219 + $0x88] sm:$0xff]
              %256 = vst [vmem:[%s220 + $0x88] sm:$0xff] %v255
              %v257 = vld [vmem:[%s219 + $0x90] sm:$0xff]
              %258 = vst [vmem:[%s220 + $0x90] sm:$0xff] %v257
              %v259 = vld [vmem:[%s219 + $0x98] sm:$0xff]
              %260 = vst [vmem:[%s220 + $0x98] sm:$0xff] %v259
              %v261 = vld [vmem:[%s219 + $0xa0] sm:$0xff]
              %262 = vst [vmem:[%s220 + $0xa0] sm:$0xff] %v261
              %v263 = vld [vmem:[%s219 + $0xa8] sm:$0xff]
              %264 = vst [vmem:[%s220 + $0xa8] sm:$0xff] %v263
              %v265 = vld [vmem:[%s219 + $0xb0] sm:$0xff]
              %266 = vst [vmem:[%s220 + $0xb0] sm:$0xff] %v265
              %v267 = vld [vmem:[%s219 + $0xb8] sm:$0xff]
              %268 = vst [vmem:[%s220 + $0xb8] sm:$0xff] %v267
              %v269 = vld [vmem:[%s219 + $0xc0] sm:$0xff]
              %270 = vst [vmem:[%s220 + $0xc0] sm:$0xff] %v269
              %v271 = vld [vmem:[%s219 + $0xc8] sm:$0xff]
              %272 = vst [vmem:[%s220 + $0xc8] sm:$0xff] %v271
              %v273 = vld [vmem:[%s219 + $0xd0] sm:$0xff]
              %274 = vst [vmem:[%s220 + $0xd0] sm:$0xff] %v273
              %v275 = vld [vmem:[%s219 + $0xd8] sm:$0xff]
              %276 = vst [vmem:[%s220 + $0xd8] sm:$0xff] %v275
              %v277 = vld [vmem:[%s219 + $0xe0] sm:$0xff]
              %278 = vst [vmem:[%s220 + $0xe0] sm:$0xff] %v277
              %v279 = vld [vmem:[%s219 + $0xe8] sm:$0xff]
              %280 = vst [vmem:[%s220 + $0xe8] sm:$0xff] %v279
              %v281 = vld [vmem:[%s219 + $0xf0] sm:$0xff]
              %282 = vst [vmem:[%s220 + $0xf0] sm:$0xff] %v281
              %v283 = vld [vmem:[%s219 + $0xf8] sm:$0xff]
              %284 = vst [vmem:[%s220 + $0xf8] sm:$0xff] %v283
              %v285 = vld [vmem:[%s219 + $0x100] sm:$0xff]
              %286 = vst [vmem:[%s220 + $0x100] sm:$0xff] %v285
              %v287 = vld [vmem:[%s219 + $0x108] sm:$0xff]
              %288 = vst [vmem:[%s220 + $0x108] sm:$0xff] %v287
              %v289 = vld [vmem:[%s219 + $0x110] sm:$0xff]
              %290 = vst [vmem:[%s220 + $0x110] sm:$0xff] %v289
              %v291 = vld [vmem:[%s219 + $0x118] sm:$0xff]
              %292 = vst [vmem:[%s220 + $0x118] sm:$0xff] %v291
              %v293 = vld [vmem:[%s219 + $0x120] sm:$0xff]
              %294 = vst [vmem:[%s220 + $0x120] sm:$0xff] %v293
              %v295 = vld [vmem:[%s219 + $0x128] sm:$0xff]
              %296 = vst [vmem:[%s220 + $0x128] sm:$0xff] %v295
              %v297 = vld [vmem:[%s219 + $0x130] sm:$0xff]
              %298 = vst [vmem:[%s220 + $0x130] sm:$0xff] %v297
              %v299 = vld [vmem:[%s219 + $0x138] sm:$0xff]
              %300 = vst [vmem:[%s220 + $0x138] sm:$0xff] %v299
              %v301 = vld [vmem:[%s219 + $0x140] sm:$0xff]
              %302 = vst [vmem:[%s220 + $0x140] sm:$0xff] %v301
              %v303 = vld [vmem:[%s219 + $0x148] sm:$0xff]
              %304 = vst [vmem:[%s220 + $0x148] sm:$0xff] %v303
              %v305 = vld [vmem:[%s219 + $0x150] sm:$0xff]
              %306 = vst [vmem:[%s220 + $0x150] sm:$0xff] %v305
              %v307 = vld [vmem:[%s219 + $0x158] sm:$0xff]
              %308 = vst [vmem:[%s220 + $0x158] sm:$0xff] %v307
              %v309 = vld [vmem:[%s219 + $0x160] sm:$0xff]
              %310 = vst [vmem:[%s220 + $0x160] sm:$0xff] %v309
            $region56: #{_conv_bn_relu_forward.1} parent=50 // loop_footer
              %s218 = sadd.s32 1, %s214
            $region57: #{_conv_bn_relu_forward.1} parent=50 // loop_footer_branch
              %213 = sbr.rel target = $region53
            $region58: #{_conv_bn_relu_forward.1} parent=50 // loop_exit
              _
            %s311 = sshllo.u32 0, %s208
            loop: start=0, step=1, limit=1
            $region59: #{_conv_bn_relu_forward.1} parent=50 // loop_pre_header
              _
            $region60: #{_conv_bn_relu_forward.1} parent=50 // loop_header
              %s313 = sphi 0, %s317
              %p314 = scmp.ge.s32.totalorder %s313, 1
              %s318 = sphi %s210, %s210
              %s319 = sphi %s212, %s212
            $region61: #{_conv_bn_relu_forward.1} parent=50 // loop_header_branch
              %316 = sbr.rel (%p314) target = $region65
            $region62: #{_conv_bn_relu_forward.1} parent=50 // loop_body
              %v320 = vld [vmem:[%s318] sm:%s311]
              %321 = vst [vmem:[%s319] sm:%s311] %v320
            $region63: #{_conv_bn_relu_forward.1} parent=50 // loop_footer
              %s317 = sadd.s32 1, %s313
            $region64: #{_conv_bn_relu_forward.1} parent=50 // loop_footer_branch
              %312 = sbr.rel target = $region60
            $region65: #{_conv_bn_relu_forward.1} parent=50 // loop_exit
              _
          $region51: #{_conv_bn_relu_forward.1} parent=35 // pred_fallthru
            _
        $region36: #{_conv_bn_relu_forward.1} parent=31 // pred_fallthru
          _
        // Predicated region
        $region37: #{_conv_bn_relu_forward.1} parent=31 // pred_check
          %p189 = pneg %p185
        $region38: #{_conv_bn_relu_forward.1} parent=31 // pred_check_branch
          %191 = sbr.rel (%p189) target = $region40
        $region39: #{_conv_bn_relu_forward.1} parent=31 // pred_region
          %s192 = sshllo.u32 0, 366
          loop: start=0, step=1, limit=1
          $region41: #{_conv_bn_relu_forward.1} parent=39 // loop_pre_header
            _
          $region42: #{_conv_bn_relu_forward.1} parent=39 // loop_header
            %s194 = sphi 0, %s198
            %p195 = scmp.ge.s32.totalorder %s194, 1
            %s199 = sphi %s183, %s183
            %s200 = sphi [#allocation2], [#allocation2]
          $region43: #{_conv_bn_relu_forward.1} parent=39 // loop_header_branch
            %197 = sbr.rel (%p195) target = $region47
          $region44: #{_conv_bn_relu_forward.1} parent=39 // loop_body
            %v201 = vld [vmem:[%s199] sm:%s192]
            %202 = vst [vmem:[%s200] sm:%s192] %v201
          $region45: #{_conv_bn_relu_forward.1} parent=39 // loop_footer
            %s198 = sadd.s32 1, %s194
          $region46: #{_conv_bn_relu_forward.1} parent=39 // loop_footer_branch
            %193 = sbr.rel target = $region42
          $region47: #{_conv_bn_relu_forward.1} parent=39 // loop_exit
            _
        $region40: #{_conv_bn_relu_forward.1} parent=31 // pred_fallthru
          _
        // Predicated region
        $region66: #{_conv_bn_relu_forward.1} parent=31 // pred_check
          _
        $region67: #{_conv_bn_relu_forward.1} parent=31 // pred_check_branch
          %324 = sbr.rel (0) target = $region69
        $region68: #{_conv_bn_relu_forward.1} parent=31 // pred_region
          %325 = vsyncadd [#allocation4], 5856
        $region69: #{_conv_bn_relu_forward.1} parent=31 // pred_fallthru
          _
        %s326 = smul.u32 366, 1
        %s327 = sshll.u32 %s326, 4
        %328 = dma.done [#allocation4], %s327
      $region32: #{_conv_bn_relu_forward.1} parent=27 // pred_fallthru
        _
      %v329 = vld [vmem:[#allocation2] sm:$0xff]
      %v330 = vld [vmem:[#allocation2 + $0x8] sm:$0xff]
      %v331 = vld [vmem:[#allocation2 + $0x10] sm:$0xff]
      %v332 = vld [vmem:[#allocation2 + $0x18] sm:$0xff]
      %v333 = vld [vmem:[#allocation2 + $0x20] sm:$0xff]
      %v334 = vld [vmem:[#allocation2 + $0x28] sm:$0xff]
      %v335 = vld [vmem:[#allocation2 + $0x30] sm:$0xff]
      %v336 = vld [vmem:[#allocation2 + $0x38] sm:$0xff]
      %v337 = vld [vmem:[#allocation2 + $0x40] sm:$0xff]
      %v338 = vld [vmem:[#allocation2 + $0x48] sm:$0xff]
      %v339 = vld [vmem:[#allocation2 + $0x50] sm:$0xff]
      %v340 = vld [vmem:[#allocation2 + $0x58] sm:$0xff]
      %v341 = vld [vmem:[#allocation2 + $0x60] sm:$0xff]
      %v342 = vld [vmem:[#allocation2 + $0x68] sm:$0xff]
      %v343 = vld [vmem:[#allocation2 + $0x70] sm:$0xff]
      %v344 = vld [vmem:[#allocation2 + $0x78] sm:$0xff]
      %v345 = vld [vmem:[#allocation2 + $0x80] sm:$0xff]
      %v346 = vld [vmem:[#allocation2 + $0x88] sm:$0xff]
      %v347 = vld [vmem:[#allocation2 + $0x90] sm:$0xff]
      %v348 = vld [vmem:[#allocation2 + $0x98] sm:$0xff]
      %v349 = vld [vmem:[#allocation2 + $0xa0] sm:$0xff]
      %v350 = vld [vmem:[#allocation2 + $0xa8] sm:$0xff]
      %v351 = vld [vmem:[#allocation2 + $0xb0] sm:$0xff]
      %v352 = vld [vmem:[#allocation2 + $0xb8] sm:$0xff]
      %v353 = vld [vmem:[#allocation2 + $0xc0] sm:$0xff]
      %v354 = vld [vmem:[#allocation2 + $0xc8] sm:$0xff]
      %v355 = vld [vmem:[#allocation2 + $0xd0] sm:$0xff]
      %v356 = vld [vmem:[#allocation2 + $0xd8] sm:$0xff]
      %v357 = vld [vmem:[#allocation2 + $0xe0] sm:$0xff]
      %v358 = vld [vmem:[#allocation2 + $0xe8] sm:$0xff]
      %v359 = vld [vmem:[#allocation2 + $0xf0] sm:$0xff]
      %v360 = vld [vmem:[#allocation2 + $0xf8] sm:$0xff]
      %v361 = vld [vmem:[#allocation2 + $0x100] sm:$0xff]
      %v362 = vld [vmem:[#allocation2 + $0x108] sm:$0xff]
      %v363 = vld [vmem:[#allocation2 + $0x110] sm:$0xff]
      %v364 = vld [vmem:[#allocation2 + $0x118] sm:$0xff]
      %v365 = vld [vmem:[#allocation2 + $0x120] sm:$0xff]
      %v366 = vld [vmem:[#allocation2 + $0x128] sm:$0xff]
      %v367 = vld [vmem:[#allocation2 + $0x130] sm:$0xff]
      %v368 = vld [vmem:[#allocation2 + $0x138] sm:$0xff]
      %v369 = vld [vmem:[#allocation2 + $0x140] sm:$0xff]
      %v370 = vpack.c.bf16 %v330, %v329
      %v371 = vpack.c.bf16 %v332, %v331
      %v372 = vpack.c.bf16 %v334, %v333
      %v373 = vpack.c.bf16 %v336, %v335
      %v374 = vpack.c.bf16 %v338, %v337
      %v375 = vpack.c.bf16 %v340, %v339
      %v376 = vpack.c.bf16 %v342, %v341
      %v377 = vpack.c.bf16 %v344, %v343
      %v378 = vpack.c.bf16 %v346, %v345
      %v379 = vpack.c.bf16 %v348, %v347
      %v380 = vpack.c.bf16 %v350, %v349
      %v381 = vpack.c.bf16 %v352, %v351
      %v382 = vpack.c.bf16 %v354, %v353
      %v383 = vpack.c.bf16 %v356, %v355
      %v384 = vpack.c.bf16 %v358, %v357
      %v385 = vpack.c.bf16 %v360, %v359
      %v386 = vpack.c.bf16 %v362, %v361
      %v387 = vpack.c.bf16 %v364, %v363
      %v388 = vpack.c.bf16 %v366, %v365
      %v389 = vpack.c.bf16 %v368, %v367
      %v390 = vpack.c.bf16 %v369, %v369
      %v391 = vld [vmem:[%s164] sm:$0x3]
      %vm392 = vcmask 31744
      %v394 = vsel %vm392, %v370, 0
      %v397 = vsel %vm392, %v371, 0
      %v400 = vsel %vm392, %v372, 0
      %v403 = vsel %vm392, %v373, 0
      %v406 = vsel %vm392, %v374, 0
      %v409 = vsel %vm392, %v375, 0
      %v412 = vsel %vm392, %v376, 0
      %v415 = vsel %vm392, %v377, 0
      %v418 = vsel %vm392, %v378, 0
      %v421 = vsel %vm392, %v379, 0
      %v424 = vsel %vm392, %v380, 0
      %v427 = vsel %vm392, %v381, 0
      %v430 = vsel %vm392, %v382, 0
      %v433 = vsel %vm392, %v383, 0
      %v436 = vsel %vm392, %v384, 0
      %v439 = vsel %vm392, %v385, 0
      %v442 = vsel %vm392, %v386, 0
      %v445 = vsel %vm392, %v387, 0
      %v448 = vsel %vm392, %v388, 0
      %v451 = vsel %vm392, %v389, 0
      %v454 = vsel %vm392, %v390, 0
      %vm456 = vcmask 1041408
      %v458 = vsel %vm456, %v391, 0
      %460 = vmatprep.subr.bf16.mxu0 0
      %461 = vmatpush1.bf16.msra.mxu0 %v458
      %462 = vmatprep.subr.bf16.mxu0 0
      %463 = vmatpush1.bf16.msra.mxu0 0
      %464 = vmatprep.subr.bf16.mxu0 0
      %465 = vmatpush1.bf16.msra.mxu0 0
      %466 = vmatprep.subr.bf16.mxu0 0
      %467 = vmatpush1.bf16.msra.mxu0 0
      %468 = vmatprep.subr.bf16.mxu0 0
      %469 = vmatpush1.bf16.msra.mxu0 0
      %470 = vmatprep.subr.bf16.mxu0 0
      %471 = vmatpush1.bf16.msra.mxu0 0
      %472 = vmatprep.subr.bf16.mxu0 0
      %473 = vmatpush1.bf16.msra.mxu0 0
      %474 = vmatprep.subr.bf16.mxu0 0
      %475 = vmatpush1.bf16.msra.mxu0 0
      %476 = vmatprep.subr.bf16.mxu0 0
      %477 = vmatpush1.bf16.msra.mxu0 0
      %478 = vmatprep.subr.bf16.mxu0 0
      %479 = vmatpush1.bf16.msra.mxu0 0
      %480 = vmatprep.subr.bf16.mxu0 0
      %481 = vmatpush1.bf16.msra.mxu0 0
      %482 = vmatprep.subr.bf16.mxu0 0
      %483 = vmatpush1.bf16.msra.mxu0 0
      %484 = vmatprep.subr.bf16.mxu0 0
      %485 = vmatpush1.bf16.msra.mxu0 0
      %486 = vmatprep.subr.bf16.mxu0 0
      %487 = vmatpush1.bf16.msra.mxu0 0
      %488 = vmatprep.subr.bf16.mxu0 0
      %489 = vmatpush1.bf16.msra.mxu0 0
      %490 = vmatprep.subr.bf16.mxu0 0
      %491 = vmatpush1.bf16.msra.mxu0 0
      %492 = vmatprep.mubr.bf16.mxu0 0
      %493 = vmatmul.mubr.bf16.gmra.mrb[0].mxu0 %v394
      %v494 = vpop.f32.mrb[0].mxu0
      %v495 = vadd.f32 0.0, %v494
      %v496 = vpop.f32.mrb[0].mxu0
      %v497 = vpop.f32.mrb[0].mxu0
      %v498 = vadd.f32 0.0, %v497
      %v499 = vpop.f32.mrb[0].mxu0
      %500 = vmatprep.mubr.bf16.mxu0 0
      %501 = vmatmul.mubr.bf16.gmra.mrb[0].mxu0 %v397
      %v502 = vpop.f32.mrb[0].mxu0
      %v503 = vadd.f32 0.0, %v502
      %v504 = vpop.f32.mrb[0].mxu0
      %v505 = vpop.f32.mrb[0].mxu0
      %v506 = vadd.f32 0.0, %v505
      %v507 = vpop.f32.mrb[0].mxu0
      %508 = vmatprep.mubr.bf16.mxu0 0
      %509 = vmatmul.mubr.bf16.gmra.mrb[0].mxu0 %v400
      %v510 = vpop.f32.mrb[0].mxu0
      %v511 = vadd.f32 0.0, %v510
      %v512 = vpop.f32.mrb[0].mxu0
      %v513 = vpop.f32.mrb[0].mxu0
      %v514 = vadd.f32 0.0, %v513
      %v515 = vpop.f32.mrb[0].mxu0
      %516 = vmatprep.mubr.bf16.mxu0 0
      %517 = vmatmul.mubr.bf16.gmra.mrb[0].mxu0 %v403
      %v518 = vpop.f32.mrb[0].mxu0
      %v519 = vadd.f32 0.0, %v518
      %v520 = vpop.f32.mrb[0].mxu0
      %v521 = vpop.f32.mrb[0].mxu0
      %v522 = vadd.f32 0.0, %v521
      %v523 = vpop.f32.mrb[0].mxu0
      %524 = vmatprep.mubr.bf16.mxu0 0
      %525 = vmatmul.mubr.bf16.gmra.mrb[0].mxu0 %v406
      %v526 = vpop.f32.mrb[0].mxu0
      %v527 = vadd.f32 0.0, %v526
      %v528 = vpop.f32.mrb[0].mxu0
      %v529 = vpop.f32.mrb[0].mxu0
      %v530 = vadd.f32 0.0, %v529
      %v531 = vpop.f32.mrb[0].mxu0
      %532 = vmatprep.mubr.bf16.mxu0 0
      %533 = vmatmul.mubr.bf16.gmra.mrb[0].mxu0 %v409
      %v534 = vpop.f32.mrb[0].mxu0
      %v535 = vadd.f32 0.0, %v534
      %v536 = vpop.f32.mrb[0].mxu0
      %v537 = vpop.f32.mrb[0].mxu0
      %v538 = vadd.f32 0.0, %v537
      %v539 = vpop.f32.mrb[0].mxu0
      %540 = vmatprep.mubr.bf16.mxu0 0
      %541 = vmatmul.mubr.bf16.gmra.mrb[0].mxu0 %v412
      %v542 = vpop.f32.mrb[0].mxu0
      %v543 = vadd.f32 0.0, %v542
      %v544 = vpop.f32.mrb[0].mxu0
      %v545 = vpop.f32.mrb[0].mxu0
      %v546 = vadd.f32 0.0, %v545
      %v547 = vpop.f32.mrb[0].mxu0
      %548 = vmatprep.mubr.bf16.mxu0 0
      %549 = vmatmul.mubr.bf16.gmra.mrb[0].mxu0 %v415
      %v550 = vpop.f32.mrb[0].mxu0
      %v551 = vadd.f32 0.0, %v550
      %v552 = vpop.f32.mrb[0].mxu0
      %v553 = vpop.f32.mrb[0].mxu0
      %v554 = vadd.f32 0.0, %v553
      %v555 = vpop.f32.mrb[0].mxu0
      %556 = vmatprep.mubr.bf16.mxu0 0
      %557 = vmatmul.mubr.bf16.gmra.mrb[0].mxu0 %v418
      %v558 = vpop.f32.mrb[0].mxu0
      %v559 = vadd.f32 0.0, %v558
      %v560 = vpop.f32.mrb[0].mxu0
      %v561 = vpop.f32.mrb[0].mxu0
      %v562 = vadd.f32 0.0, %v561
      %v563 = vpop.f32.mrb[0].mxu0
      %564 = vmatprep.mubr.bf16.mxu0 0
      %565 = vmatmul.mubr.bf16.gmra.mrb[0].mxu0 %v421
      %v566 = vpop.f32.mrb[0].mxu0
      %v567 = vadd.f32 0.0, %v566
      %v568 = vpop.f32.mrb[0].mxu0
      %v569 = vpop.f32.mrb[0].mxu0
      %v570 = vadd.f32 0.0, %v569
      %v571 = vpop.f32.mrb[0].mxu0
      %572 = vmatprep.mubr.bf16.mxu0 0
      %573 = vmatmul.mubr.bf16.gmra.mrb[0].mxu0 %v424
      %v574 = vpop.f32.mrb[0].mxu0
      %v575 = vadd.f32 0.0, %v574
      %v576 = vpop.f32.mrb[0].mxu0
      %v577 = vpop.f32.mrb[0].mxu0
      %v578 = vadd.f32 0.0, %v577
      %v579 = vpop.f32.mrb[0].mxu0
      %580 = vmatprep.mubr.bf16.mxu0 0
      %581 = vmatmul.mubr.bf16.gmra.mrb[0].mxu0 %v427
      %v582 = vpop.f32.mrb[0].mxu0
      %v583 = vadd.f32 0.0, %v582
      %v584 = vpop.f32.mrb[0].mxu0
      %v585 = vpop.f32.mrb[0].mxu0
      %v586 = vadd.f32 0.0, %v585
      %v587 = vpop.f32.mrb[0].mxu0
      %588 = vmatprep.mubr.bf16.mxu0 0
      %589 = vmatmul.mubr.bf16.gmra.mrb[0].mxu0 %v430
      %v590 = vpop.f32.mrb[0].mxu0
      %v591 = vadd.f32 0.0, %v590
      %v592 = vpop.f32.mrb[0].mxu0
      %v593 = vpop.f32.mrb[0].mxu0
      %v594 = vadd.f32 0.0, %v593
      %v595 = vpop.f32.mrb[0].mxu0
      %596 = vmatprep.mubr.bf16.mxu0 0
      %597 = vmatmul.mubr.bf16.gmra.mrb[0].mxu0 %v433
      %v598 = vpop.f32.mrb[0].mxu0
      %v599 = vadd.f32 0.0, %v598
      %v600 = vpop.f32.mrb[0].mxu0
      %v601 = vpop.f32.mrb[0].mxu0
      %v602 = vadd.f32 0.0, %v601
      %v603 = vpop.f32.mrb[0].mxu0
      %604 = vmatprep.mubr.bf16.mxu0 0
      %605 = vmatmul.mubr.bf16.gmra.mrb[0].mxu0 %v436
      %v606 = vpop.f32.mrb[0].mxu0
      %v607 = vadd.f32 0.0, %v606
      %v608 = vpop.f32.mrb[0].mxu0
      %v609 = vpop.f32.mrb[0].mxu0
      %v610 = vadd.f32 0.0, %v609
      %v611 = vpop.f32.mrb[0].mxu0
      %612 = vmatprep.mubr.bf16.mxu0 0
      %613 = vmatmul.mubr.bf16.gmra.mrb[0].mxu0 %v439
      %v614 = vpop.f32.mrb[0].mxu0
      %v615 = vadd.f32 0.0, %v614
      %v616 = vpop.f32.mrb[0].mxu0
      %v617 = vpop.f32.mrb[0].mxu0
      %v618 = vadd.f32 0.0, %v617
      %v619 = vpop.f32.mrb[0].mxu0
      %620 = vmatprep.mubr.bf16.mxu0 0
      %621 = vmatmul.mubr.bf16.gmra.mrb[0].mxu0 %v442
      %v622 = vpop.f32.mrb[0].mxu0
      %v623 = vadd.f32 0.0, %v622
      %v624 = vpop.f32.mrb[0].mxu0
      %v625 = vpop.f32.mrb[0].mxu0
      %v626 = vadd.f32 0.0, %v625
      %v627 = vpop.f32.mrb[0].mxu0
      %628 = vmatprep.mubr.bf16.mxu0 0
      %629 = vmatmul.mubr.bf16.gmra.mrb[0].mxu0 %v445
      %v630 = vpop.f32.mrb[0].mxu0
      %v631 = vadd.f32 0.0, %v630
      %v632 = vpop.f32.mrb[0].mxu0
      %v633 = vpop.f32.mrb[0].mxu0
      %v634 = vadd.f32 0.0, %v633
      %v635 = vpop.f32.mrb[0].mxu0
      %636 = vmatprep.mubr.bf16.mxu0 0
      %637 = vmatmul.mubr.bf16.gmra.mrb[0].mxu0 %v448
      %v638 = vpop.f32.mrb[0].mxu0
      %v639 = vadd.f32 0.0, %v638
      %v640 = vpop.f32.mrb[0].mxu0
      %v641 = vpop.f32.mrb[0].mxu0
      %v642 = vadd.f32 0.0, %v641
      %v643 = vpop.f32.mrb[0].mxu0
      %644 = vmatprep.mubr.bf16.mxu0 0
      %645 = vmatmul.mubr.bf16.gmra.mrb[0].mxu0 %v451
      %v646 = vpop.f32.mrb[0].mxu0
      %v647 = vadd.f32 0.0, %v646
      %v648 = vpop.f32.mrb[0].mxu0
      %v649 = vpop.f32.mrb[0].mxu0
      %v650 = vadd.f32 0.0, %v649
      %v651 = vpop.f32.mrb[0].mxu0
      %652 = vmatprep.mubr.bf16.mxu0 0
      %653 = vmatmul.mubr.bf16.gmra.mrb[0].mxu0 %v454
      %v654 = vpop.f32.mrb[0].mxu0
      %v655 = vadd.f32 0.0, %v654
      %v656 = vpop.f32.mrb[0].mxu0
      %v657 = vpop.f32.mrb[0].mxu0
      %v658 = vpop.f32.mrb[0].mxu0
      %659 = vdwg.mxu0
      %660 = vst [vmem:[#allocation3] sm:$0xff] %v495
      %661 = vst [vmem:[#allocation3 + $0x8] sm:$0xff] %v498
      %662 = vst [vmem:[#allocation3 + $0x10] sm:$0xff] %v503
      %663 = vst [vmem:[#allocation3 + $0x18] sm:$0xff] %v506
      %664 = vst [vmem:[#allocation3 + $0x20] sm:$0xff] %v511
      %665 = vst [vmem:[#allocation3 + $0x28] sm:$0xff] %v514
      %666 = vst [vmem:[#allocation3 + $0x30] sm:$0xff] %v519
      %667 = vst [vmem:[#allocation3 + $0x38] sm:$0xff] %v522
      %668 = vst [vmem:[#allocation3 + $0x40] sm:$0xff] %v527
      %669 = vst [vmem:[#allocation3 + $0x48] sm:$0xff] %v530
      %670 = vst [vmem:[#allocation3 + $0x50] sm:$0xff] %v535
      %671 = vst [vmem:[#allocation3 + $0x58] sm:$0xff] %v538
      %672 = vst [vmem:[#allocation3 + $0x60] sm:$0xff] %v543
      %673 = vst [vmem:[#allocation3 + $0x68] sm:$0xff] %v546
      %674 = vst [vmem:[#allocation3 + $0x70] sm:$0xff] %v551
      %675 = vst [vmem:[#allocation3 + $0x78] sm:$0xff] %v554
      %676 = vst [vmem:[#allocation3 + $0x80] sm:$0xff] %v559
      %677 = vst [vmem:[#allocation3 + $0x88] sm:$0xff] %v562
      %678 = vst [vmem:[#allocation3 + $0x90] sm:$0xff] %v567
      %679 = vst [vmem:[#allocation3 + $0x98] sm:$0xff] %v570
      %680 = vst [vmem:[#allocation3 + $0xa0] sm:$0xff] %v575
      %681 = vst [vmem:[#allocation3 + $0xa8] sm:$0xff] %v578
      %682 = vst [vmem:[#allocation3 + $0xb0] sm:$0xff] %v583
      %683 = vst [vmem:[#allocation3 + $0xb8] sm:$0xff] %v586
      %684 = vst [vmem:[#allocation3 + $0xc0] sm:$0xff] %v591
      %685 = vst [vmem:[#allocation3 + $0xc8] sm:$0xff] %v594
      %686 = vst [vmem:[#allocation3 + $0xd0] sm:$0xff] %v599
      %687 = vst [vmem:[#allocation3 + $0xd8] sm:$0xff] %v602
      %688 = vst [vmem:[#allocation3 + $0xe0] sm:$0xff] %v607
      %689 = vst [vmem:[#allocation3 + $0xe8] sm:$0xff] %v610
      %690 = vst [vmem:[#allocation3 + $0xf0] sm:$0xff] %v615
      %691 = vst [vmem:[#allocation3 + $0xf8] sm:$0xff] %v618
      %692 = vst [vmem:[#allocation3 + $0x100] sm:$0xff] %v623
      %693 = vst [vmem:[#allocation3 + $0x108] sm:$0xff] %v626
      %694 = vst [vmem:[#allocation3 + $0x110] sm:$0xff] %v631
      %695 = vst [vmem:[#allocation3 + $0x118] sm:$0xff] %v634
      %696 = vst [vmem:[#allocation3 + $0x120] sm:$0xff] %v639
      %697 = vst [vmem:[#allocation3 + $0x128] sm:$0xff] %v642
      %698 = vst [vmem:[#allocation3 + $0x130] sm:$0xff] %v647
      %699 = vst [vmem:[#allocation3 + $0x138] sm:$0xff] %v650
      %700 = vst [vmem:[#allocation3 + $0x140] sm:$0xff] %v655
      %v701 = vld [vmem:[#allocation2 + $0x1] sm:$0xff]
      %v702 = vld [vmem:[#allocation2 + $0x9] sm:$0xff]
      %v703 = vld [vmem:[#allocation2 + $0x11] sm:$0xff]
      %v704 = vld [vmem:[#allocation2 + $0x19] sm:$0xff]
      %v705 = vld [vmem:[#allocation2 + $0x21] sm:$0xff]
      %v706 = vld [vmem:[#allocation2 + $0x29] sm:$0xff]
      %v707 = vld [vmem:[#allocation2 + $0x31] sm:$0xff]
      %v708 = vld [vmem:[#allocation2 + $0x39] sm:$0xff]
      %v709 = vld [vmem:[#allocation2 + $0x41] sm:$0xff]
      %v710 = vld [vmem:[#allocation2 + $0x49] sm:$0xff]
      %v711 = vld [vmem:[#allocation2 + $0x51] sm:$0xff]
      %v712 = vld [vmem:[#allocation2 + $0x59] sm:$0xff]
      %v713 = vld [vmem:[#allocation2 + $0x61] sm:$0xff]
      %v714 = vld [vmem:[#allocation2 + $0x69] sm:$0xff]
      %v715 = vld [vmem:[#allocation2 + $0x71] sm:$0xff]
      %v716 = vld [vmem:[#allocation2 + $0x79] sm:$0xff]
      %v717 = vld [vmem:[#allocation2 + $0x81] sm:$0xff]
      %v718 = vld [vmem:[#allocation2 + $0x89] sm:$0xff]
      %v719 = vld [vmem:[#allocation2 + $0x91] sm:$0xff]
      %v720 = vld [vmem:[#allocation2 + $0x99] sm:$0xff]
      %v721 = vld [vmem:[#allocation2 + $0xa1] sm:$0xff]
      %v722 = vld [vmem:[#allocation2 + $0xa9] sm:$0xff]
      %v723 = vld [vmem:[#allocation2 + $0xb1] sm:$0xff]
      %v724 = vld [vmem:[#allocation2 + $0xb9] sm:$0xff]
      %v725 = vld [vmem:[#allocation2 + $0xc1] sm:$0xff]
      %v726 = vld [vmem:[#allocation2 + $0xc9] sm:$0xff]
      %v727 = vld [vmem:[#allocation2 + $0xd1] sm:$0xff]
      %v728 = vld [vmem:[#allocation2 + $0xd9] sm:$0xff]
      %v729 = vld [vmem:[#allocation2 + $0xe1] sm:$0xff]
      %v730 = vld [vmem:[#allocation2 + $0xe9] sm:$0xff]
      %v731 = vld [vmem:[#allocation2 + $0xf1] sm:$0xff]
      %v732 = vld [vmem:[#allocation2 + $0xf9] sm:$0xff]
      %v733 = vld [vmem:[#allocation2 + $0x101] sm:$0xff]
      %v734 = vld [vmem:[#allocation2 + $0x109] sm:$0xff]
      %v735 = vld [vmem:[#allocation2 + $0x111] sm:$0xff]
      %v736 = vld [vmem:[#allocation2 + $0x119] sm:$0xff]
      %v737 = vld [vmem:[#allocation2 + $0x121] sm:$0xff]
      %v738 = vld [vmem:[#allocation2 + $0x129] sm:$0xff]
      %v739 = vld [vmem:[#allocation2 + $0x131] sm:$0xff]
      %v740 = vld [vmem:[#allocation2 + $0x139] sm:$0xff]
      %v741 = vld [vmem:[#allocation2 + $0x141] sm:$0xff]
      %v742 = vpack.c.bf16 %v702, %v701
      %v743 = vpack.c.bf16 %v704, %v703
      %v744 = vpack.c.bf16 %v706, %v705
      %v745 = vpack.c.bf16 %v708, %v707
      %v746 = vpack.c.bf16 %v710, %v709
      %v747 = vpack.c.bf16 %v712, %v711
      %v748 = vpack.c.bf16 %v714, %v713
      %v749 = vpack.c.bf16 %v716, %v715
      %v750 = vpack.c.bf16 %v718, %v717
      %v751 = vpack.c.bf16 %v720, %v719
      %v752 = vpack.c.bf16 %v722, %v721
      %v753 = vpack.c.bf16 %v724, %v723
      %v754 = vpack.c.bf16 %v726, %v725
      %v755 = vpack.c.bf16 %v728, %v727
      %v756 = vpack.c.bf16 %v730, %v729
      %v757 = vpack.c.bf16 %v732, %v731
      %v758 = vpack.c.bf16 %v734, %v733
      %v759 = vpack.c.bf16 %v736, %v735
      %v760 = vpack.c.bf16 %v738, %v737
      %v761 = vpack.c.bf16 %v740, %v739
      %v762 = vpack.c.bf16 %v741, %v741
      %s763 = scalar_lea.vmem %s164, 2
      %v764 = vld [vmem:[%s763] sm:$0x3]
      %v766 = vsel %vm392, %v742, 0
      %v769 = vsel %vm392, %v743, 0
      %v772 = vsel %vm392, %v744, 0
      %v775 = vsel %vm392, %v745, 0
      %v778 = vsel %vm392, %v746, 0
      %v781 = vsel %vm392, %v747, 0
      %v784 = vsel %vm392, %v748, 0
      %v787 = vsel %vm392, %v749, 0
      %v790 = vsel %vm392, %v750, 0
      %v793 = vsel %vm392, %v751, 0
      %v796 = vsel %vm392, %v752, 0
      %v799 = vsel %vm392, %v753, 0
      %v802 = vsel %vm392, %v754, 0
      %v805 = vsel %vm392, %v755, 0
      %v808 = vsel %vm392, %v756, 0
      %v811 = vsel %vm392, %v757, 0
      %v814 = vsel %vm392, %v758, 0
      %v817 = vsel %vm392, %v759, 0
      %v820 = vsel %vm392, %v760, 0
      %v823 = vsel %vm392, %v761, 0
      %v826 = vsel %vm392, %v762, 0
      %v829 = vsel %vm456, %v764, 0
      %831 = vmatprep.subr.bf16.mxu0 0
      %832 = vmatpush1.bf16.msra.mxu0 %v829
      %833 = vmatprep.subr.bf16.mxu0 0
      %834 = vmatpush1.bf16.msra.mxu0 0
      %835 = vmatprep.subr.bf16.mxu0 0
      %836 = vmatpush1.bf16.msra.mxu0 0
      %837 = vmatprep.subr.bf16.mxu0 0
      %838 = vmatpush1.bf16.msra.mxu0 0
      %839 = vmatprep.subr.bf16.mxu0 0
      %840 = vmatpush1.bf16.msra.mxu0 0
      %841 = vmatprep.subr.bf16.mxu0 0
      %842 = vmatpush1.bf16.msra.mxu0 0
      %843 = vmatprep.subr.bf16.mxu0 0
      %844 = vmatpush1.bf16.msra.mxu0 0
      %845 = vmatprep.subr.bf16.mxu0 0
      %846 = vmatpush1.bf16.msra.mxu0 0
      %847 = vmatprep.subr.bf16.mxu0 0
      %848 = vmatpush1.bf16.msra.mxu0 0
      %849 = vmatprep.subr.bf16.mxu0 0
      %850 = vmatpush1.bf16.msra.mxu0 0
      %851 = vmatprep.subr.bf16.mxu0 0
      %852 = vmatpush1.bf16.msra.mxu0 0
      %853 = vmatprep.subr.bf16.mxu0 0
      %854 = vmatpush1.bf16.msra.mxu0 0
      %855 = vmatprep.subr.bf16.mxu0 0
      %856 = vmatpush1.bf16.msra.mxu0 0
      %857 = vmatprep.subr.bf16.mxu0 0
      %858 = vmatpush1.bf16.msra.mxu0 0
      %859 = vmatprep.subr.bf16.mxu0 0
      %860 = vmatpush1.bf16.msra.mxu0 0
      %861 = vmatprep.subr.bf16.mxu0 0
      %862 = vmatpush1.bf16.msra.mxu0 0
      %863 = vmatprep.mubr.bf16.mxu0 0
      %864 = vmatmul.mubr.bf16.gmra.mrb[0].mxu0 %v766
      %v865 = vpop.f32.mrb[0].mxu0
      %v866 = vadd.f32 0.0, %v865
      %v867 = vpop.f32.mrb[0].mxu0
      %v868 = vpop.f32.mrb[0].mxu0
      %v869 = vadd.f32 0.0, %v868
      %v870 = vpop.f32.mrb[0].mxu0
      %871 = vmatprep.mubr.bf16.mxu0 0
      %872 = vmatmul.mubr.bf16.gmra.mrb[0].mxu0 %v769
      %v873 = vpop.f32.mrb[0].mxu0
      %v874 = vadd.f32 0.0, %v873
      %v875 = vpop.f32.mrb[0].mxu0
      %v876 = vpop.f32.mrb[0].mxu0
      %v877 = vadd.f32 0.0, %v876
      %v878 = vpop.f32.mrb[0].mxu0
      %879 = vmatprep.mubr.bf16.mxu0 0
      %880 = vmatmul.mubr.bf16.gmra.mrb[0].mxu0 %v772
      %v881 = vpop.f32.mrb[0].mxu0
      %v882 = vadd.f32 0.0, %v881
      %v883 = vpop.f32.mrb[0].mxu0
      %v884 = vpop.f32.mrb[0].mxu0
      %v885 = vadd.f32 0.0, %v884
      %v886 = vpop.f32.mrb[0].mxu0
      %887 = vmatprep.mubr.bf16.mxu0 0
      %888 = vmatmul.mubr.bf16.gmra.mrb[0].mxu0 %v775
      %v889 = vpop.f32.mrb[0].mxu0
      %v890 = vadd.f32 0.0, %v889
      %v891 = vpop.f32.mrb[0].mxu0
      %v892 = vpop.f32.mrb[0].mxu0
      %v893 = vadd.f32 0.0, %v892
      %v894 = vpop.f32.mrb[0].mxu0
      %895 = vmatprep.mubr.bf16.mxu0 0
      %896 = vmatmul.mubr.bf16.gmra.mrb[0].mxu0 %v778
      %v897 = vpop.f32.mrb[0].mxu0
      %v898 = vadd.f32 0.0, %v897
      %v899 = vpop.f32.mrb[0].mxu0
      %v900 = vpop.f32.mrb[0].mxu0
      %v901 = vadd.f32 0.0, %v900
      %v902 = vpop.f32.mrb[0].mxu0
      %903 = vmatprep.mubr.bf16.mxu0 0
      %904 = vmatmul.mubr.bf16.gmra.mrb[0].mxu0 %v781
      %v905 = vpop.f32.mrb[0].mxu0
      %v906 = vadd.f32 0.0, %v905
      %v907 = vpop.f32.mrb[0].mxu0
      %v908 = vpop.f32.mrb[0].mxu0
      %v909 = vadd.f32 0.0, %v908
      %v910 = vpop.f32.mrb[0].mxu0
      %911 = vmatprep.mubr.bf16.mxu0 0
      %912 = vmatmul.mubr.bf16.gmra.mrb[0].mxu0 %v784
      %v913 = vpop.f32.mrb[0].mxu0
      %v914 = vadd.f32 0.0, %v913
      %v915 = vpop.f32.mrb[0].mxu0
      %v916 = vpop.f32.mrb[0].mxu0
      %v917 = vadd.f32 0.0, %v916
      %v918 = vpop.f32.mrb[0].mxu0
      %919 = vmatprep.mubr.bf16.mxu0 0
      %920 = vmatmul.mubr.bf16.gmra.mrb[0].mxu0 %v787
      %v921 = vpop.f32.mrb[0].mxu0
      %v922 = vadd.f32 0.0, %v921
      %v923 = vpop.f32.mrb[0].mxu0
      %v924 = vpop.f32.mrb[0].mxu0
      %v925 = vadd.f32 0.0, %v924
      %v926 = vpop.f32.mrb[0].mxu0
      %927 = vmatprep.mubr.bf16.mxu0 0
      %928 = vmatmul.mubr.bf16.gmra.mrb[0].mxu0 %v790
      %v929 = vpop.f32.mrb[0].mxu0
      %v930 = vadd.f32 0.0, %v929
      %v931 = vpop.f32.mrb[0].mxu0
      %v932 = vpop.f32.mrb[0].mxu0
      %v933 = vadd.f32 0.0, %v932
      %v934 = vpop.f32.mrb[0].mxu0
      %935 = vmatprep.mubr.bf16.mxu0 0
      %936 = vmatmul.mubr.bf16.gmra.mrb[0].mxu0 %v793
      %v937 = vpop.f32.mrb[0].mxu0
      %v938 = vadd.f32 0.0, %v937
      %v939 = vpop.f32.mrb[0].mxu0
      %v940 = vpop.f32.mrb[0].mxu0
      %v941 = vadd.f32 0.0, %v940
      %v942 = vpop.f32.mrb[0].mxu0
      %943 = vmatprep.mubr.bf16.mxu0 0
      %944 = vmatmul.mubr.bf16.gmra.mrb[0].mxu0 %v796
      %v945 = vpop.f32.mrb[0].mxu0
      %v946 = vadd.f32 0.0, %v945
      %v947 = vpop.f32.mrb[0].mxu0
      %v948 = vpop.f32.mrb[0].mxu0
      %v949 = vadd.f32 0.0, %v948
      %v950 = vpop.f32.mrb[0].mxu0
      %951 = vmatprep.mubr.bf16.mxu0 0
      %952 = vmatmul.mubr.bf16.gmra.mrb[0].mxu0 %v799
      %v953 = vpop.f32.mrb[0].mxu0
      %v954 = vadd.f32 0.0, %v953
      %v955 = vpop.f32.mrb[0].mxu0
      %v956 = vpop.f32.mrb[0].mxu0
      %v957 = vadd.f32 0.0, %v956
      %v958 = vpop.f32.mrb[0].mxu0
      %959 = vmatprep.mubr.bf16.mxu0 0
      %960 = vmatmul.mubr.bf16.gmra.mrb[0].mxu0 %v802
      %v961 = vpop.f32.mrb[0].mxu0
      %v962 = vadd.f32 0.0, %v961
      %v963 = vpop.f32.mrb[0].mxu0
      %v964 = vpop.f32.mrb[0].mxu0
      %v965 = vadd.f32 0.0, %v964
      %v966 = vpop.f32.mrb[0].mxu0
      %967 = vmatprep.mubr.bf16.mxu0 0
      %968 = vmatmul.mubr.bf16.gmra.mrb[0].mxu0 %v805
      %v969 = vpop.f32.mrb[0].mxu0
      %v970 = vadd.f32 0.0, %v969
      %v971 = vpop.f32.mrb[0].mxu0
      %v972 = vpop.f32.mrb[0].mxu0
      %v973 = vadd.f32 0.0, %v972
      %v974 = vpop.f32.mrb[0].mxu0
      %975 = vmatprep.mubr.bf16.mxu0 0
      %976 = vmatmul.mubr.bf16.gmra.mrb[0].mxu0 %v808
      %v977 = vpop.f32.mrb[0].mxu0
      %v978 = vadd.f32 0.0, %v977
      %v979 = vpop.f32.mrb[0].mxu0
      %v980 = vpop.f32.mrb[0].mxu0
      %v981 = vadd.f32 0.0, %v980
      %v982 = vpop.f32.mrb[0].mxu0
      %983 = vmatprep.mubr.bf16.mxu0 0
      %984 = vmatmul.mubr.bf16.gmra.mrb[0].mxu0 %v811
      %v985 = vpop.f32.mrb[0].mxu0
      %v986 = vadd.f32 0.0, %v985
      %v987 = vpop.f32.mrb[0].mxu0
      %v988 = vpop.f32.mrb[0].mxu0
      %v989 = vadd.f32 0.0, %v988
      %v990 = vpop.f32.mrb[0].mxu0
      %991 = vmatprep.mubr.bf16.mxu0 0
      %992 = vmatmul.mubr.bf16.gmra.mrb[0].mxu0 %v814
      %v993 = vpop.f32.mrb[0].mxu0
      %v994 = vadd.f32 0.0, %v993
      %v995 = vpop.f32.mrb[0].mxu0
      %v996 = vpop.f32.mrb[0].mxu0
      %v997 = vadd.f32 0.0, %v996
      %v998 = vpop.f32.mrb[0].mxu0
      %999 = vmatprep.mubr.bf16.mxu0 0
      %1000 = vmatmul.mubr.bf16.gmra.mrb[0].mxu0 %v817
      %v1001 = vpop.f32.mrb[0].mxu0
      %v1002 = vadd.f32 0.0, %v1001
      %v1003 = vpop.f32.mrb[0].mxu0
      %v1004 = vpop.f32.mrb[0].mxu0
      %v1005 = vadd.f32 0.0, %v1004
      %v1006 = vpop.f32.mrb[0].mxu0
      %1007 = vmatprep.mubr.bf16.mxu0 0
      %1008 = vmatmul.mubr.bf16.gmra.mrb[0].mxu0 %v820
      %v1009 = vpop.f32.mrb[0].mxu0
      %v1010 = vadd.f32 0.0, %v1009
      %v1011 = vpop.f32.mrb[0].mxu0
      %v1012 = vpop.f32.mrb[0].mxu0
      %v1013 = vadd.f32 0.0, %v1012
      %v1014 = vpop.f32.mrb[0].mxu0
      %1015 = vmatprep.mubr.bf16.mxu0 0
      %1016 = vmatmul.mubr.bf16.gmra.mrb[0].mxu0 %v823
      %v1017 = vpop.f32.mrb[0].mxu0
      %v1018 = vadd.f32 0.0, %v1017
      %v1019 = vpop.f32.mrb[0].mxu0
      %v1020 = vpop.f32.mrb[0].mxu0
      %v1021 = vadd.f32 0.0, %v1020
      %v1022 = vpop.f32.mrb[0].mxu0
      %1023 = vmatprep.mubr.bf16.mxu0 0
      %1024 = vmatmul.mubr.bf16.gmra.mrb[0].mxu0 %v826
      %v1025 = vpop.f32.mrb[0].mxu0
      %v1026 = vadd.f32 0.0, %v1025
      %v1027 = vpop.f32.mrb[0].mxu0
      %v1028 = vpop.f32.mrb[0].mxu0
      %v1029 = vpop.f32.mrb[0].mxu0
      %1030 = vdwg.mxu0
      %v1031 = vld [vmem:[#allocation3] sm:$0xff]
      %v1032 = vld [vmem:[#allocation3 + $0x8] sm:$0xff]
      %v1033 = vld [vmem:[#allocation3 + $0x10] sm:$0xff]
      %v1034 = vld [vmem:[#allocation3 + $0x18] sm:$0xff]
      %v1035 = vld [vmem:[#allocation3 + $0x20] sm:$0xff]
      %v1036 = vld [vmem:[#allocation3 + $0x28] sm:$0xff]
      %v1037 = vld [vmem:[#allocation3 + $0x30] sm:$0xff]
      %v1038 = vld [vmem:[#allocation3 + $0x38] sm:$0xff]
      %v1039 = vld [vmem:[#allocation3 + $0x40] sm:$0xff]
      %v1040 = vld [vmem:[#allocation3 + $0x48] sm:$0xff]
      %v1041 = vld [vmem:[#allocation3 + $0x50] sm:$0xff]
      %v1042 = vld [vmem:[#allocation3 + $0x58] sm:$0xff]
      %v1043 = vld [vmem:[#allocation3 + $0x60] sm:$0xff]
      %v1044 = vld [vmem:[#allocation3 + $0x68] sm:$0xff]
      %v1045 = vld [vmem:[#allocation3 + $0x70] sm:$0xff]
      %v1046 = vld [vmem:[#allocation3 + $0x78] sm:$0xff]
      %v1047 = vld [vmem:[#allocation3 + $0x80] sm:$0xff]
      %v1048 = vld [vmem:[#allocation3 + $0x88] sm:$0xff]
      %v1049 = vld [vmem:[#allocation3 + $0x90] sm:$0xff]
      %v1050 = vld [vmem:[#allocation3 + $0x98] sm:$0xff]
      %v1051 = vld [vmem:[#allocation3 + $0xa0] sm:$0xff]
      %v1052 = vld [vmem:[#allocation3 + $0xa8] sm:$0xff]
      %v1053 = vld [vmem:[#allocation3 + $0xb0] sm:$0xff]
      %v1054 = vld [vmem:[#allocation3 + $0xb8] sm:$0xff]
      %v1055 = vld [vmem:[#allocation3 + $0xc0] sm:$0xff]
      %v1056 = vld [vmem:[#allocation3 + $0xc8] sm:$0xff]
      %v1057 = vld [vmem:[#allocation3 + $0xd0] sm:$0xff]
      %v1058 = vld [vmem:[#allocation3 + $0xd8] sm:$0xff]
      %v1059 = vld [vmem:[#allocation3 + $0xe0] sm:$0xff]
      %v1060 = vld [vmem:[#allocation3 + $0xe8] sm:$0xff]
      %v1061 = vld [vmem:[#allocation3 + $0xf0] sm:$0xff]
      %v1062 = vld [vmem:[#allocation3 + $0xf8] sm:$0xff]
      %v1063 = vld [vmem:[#allocation3 + $0x100] sm:$0xff]
      %v1064 = vld [vmem:[#allocation3 + $0x108] sm:$0xff]
      %v1065 = vld [vmem:[#allocation3 + $0x110] sm:$0xff]
      %v1066 = vld [vmem:[#allocation3 + $0x118] sm:$0xff]
      %v1067 = vld [vmem:[#allocation3 + $0x120] sm:$0xff]
      %v1068 = vld [vmem:[#allocation3 + $0x128] sm:$0xff]
      %v1069 = vld [vmem:[#allocation3 + $0x130] sm:$0xff]
      %v1070 = vld [vmem:[#allocation3 + $0x138] sm:$0xff]
      %v1071 = vld [vmem:[#allocation3 + $0x140] sm:$0xff]
      %v1072 = vadd.f32 %v1031, %v866
      %v1073 = vadd.f32 %v1032, %v869
      %v1074 = vadd.f32 %v1033, %v874
      %v1075 = vadd.f32 %v1034, %v877
      %v1076 = vadd.f32 %v1035, %v882
      %v1077 = vadd.f32 %v1036, %v885
      %v1078 = vadd.f32 %v1037, %v890
      %v1079 = vadd.f32 %v1038, %v893
      %v1080 = vadd.f32 %v1039, %v898
      %v1081 = vadd.f32 %v1040, %v901
      %v1082 = vadd.f32 %v1041, %v906
      %v1083 = vadd.f32 %v1042, %v909
      %v1084 = vadd.f32 %v1043, %v914
      %v1085 = vadd.f32 %v1044, %v917
      %v1086 = vadd.f32 %v1045, %v922
      %v1087 = vadd.f32 %v1046, %v925
      %v1088 = vadd.f32 %v1047, %v930
      %v1089 = vadd.f32 %v1048, %v933
      %v1090 = vadd.f32 %v1049, %v938
      %v1091 = vadd.f32 %v1050, %v941
      %v1092 = vadd.f32 %v1051, %v946
      %v1093 = vadd.f32 %v1052, %v949
      %v1094 = vadd.f32 %v1053, %v954
      %v1095 = vadd.f32 %v1054, %v957
      %v1096 = vadd.f32 %v1055, %v962
      %v1097 = vadd.f32 %v1056, %v965
      %v1098 = vadd.f32 %v1057, %v970
      %v1099 = vadd.f32 %v1058, %v973
      %v1100 = vadd.f32 %v1059, %v978
      %v1101 = vadd.f32 %v1060, %v981
      %v1102 = vadd.f32 %v1061, %v986
      %v1103 = vadd.f32 %v1062, %v989
      %v1104 = vadd.f32 %v1063, %v994
      %v1105 = vadd.f32 %v1064, %v997
      %v1106 = vadd.f32 %v1065, %v1002
      %v1107 = vadd.f32 %v1066, %v1005
      %v1108 = vadd.f32 %v1067, %v1010
      %v1109 = vadd.f32 %v1068, %v1013
      %v1110 = vadd.f32 %v1069, %v1018
      %v1111 = vadd.f32 %v1070, %v1021
      %v1112 = vadd.f32 %v1071, %v1026
      %1113 = vst [vmem:[#allocation3] sm:$0xff] %v1072
      %1114 = vst [vmem:[#allocation3 + $0x8] sm:$0xff] %v1073
      %1115 = vst [vmem:[#allocation3 + $0x10] sm:$0xff] %v1074
      %1116 = vst [vmem:[#allocation3 + $0x18] sm:$0xff] %v1075
      %1117 = vst [vmem:[#allocation3 + $0x20] sm:$0xff] %v1076
      %1118 = vst [vmem:[#allocation3 + $0x28] sm:$0xff] %v1077
      %1119 = vst [vmem:[#allocation3 + $0x30] sm:$0xff] %v1078
      %1120 = vst [vmem:[#allocation3 + $0x38] sm:$0xff] %v1079
      %1121 = vst [vmem:[#allocation3 + $0x40] sm:$0xff] %v1080
      %1122 = vst [vmem:[#allocation3 + $0x48] sm:$0xff] %v1081
      %1123 = vst [vmem:[#allocation3 + $0x50] sm:$0xff] %v1082
      %1124 = vst [vmem:[#allocation3 + $0x58] sm:$0xff] %v1083
      %1125 = vst [vmem:[#allocation3 + $0x60] sm:$0xff] %v1084
      %1126 = vst [vmem:[#allocation3 + $0x68] sm:$0xff] %v1085
      %1127 = vst [vmem:[#allocation3 + $0x70] sm:$0xff] %v1086
      %1128 = vst [vmem:[#allocation3 + $0x78] sm:$0xff] %v1087
      %1129 = vst [vmem:[#allocation3 + $0x80] sm:$0xff] %v1088
      %1130 = vst [vmem:[#allocation3 + $0x88] sm:$0xff] %v1089
      %1131 = vst [vmem:[#allocation3 + $0x90] sm:$0xff] %v1090
      %1132 = vst [vmem:[#allocation3 + $0x98] sm:$0xff] %v1091
      %1133 = vst [vmem:[#allocation3 + $0xa0] sm:$0xff] %v1092
      %1134 = vst [vmem:[#allocation3 + $0xa8] sm:$0xff] %v1093
      %1135 = vst [vmem:[#allocation3 + $0xb0] sm:$0xff] %v1094
      %1136 = vst [vmem:[#allocation3 + $0xb8] sm:$0xff] %v1095
      %1137 = vst [vmem:[#allocation3 + $0xc0] sm:$0xff] %v1096
      %1138 = vst [vmem:[#allocation3 + $0xc8] sm:$0xff] %v1097
      %1139 = vst [vmem:[#allocation3 + $0xd0] sm:$0xff] %v1098
      %1140 = vst [vmem:[#allocation3 + $0xd8] sm:$0xff] %v1099
      %1141 = vst [vmem:[#allocation3 + $0xe0] sm:$0xff] %v1100
      %1142 = vst [vmem:[#allocation3 + $0xe8] sm:$0xff] %v1101
      %1143 = vst [vmem:[#allocation3 + $0xf0] sm:$0xff] %v1102
      %1144 = vst [vmem:[#allocation3 + $0xf8] sm:$0xff] %v1103
      %1145 = vst [vmem:[#allocation3 + $0x100] sm:$0xff] %v1104
      %1146 = vst [vmem:[#allocation3 + $0x108] sm:$0xff] %v1105
      %1147 = vst [vmem:[#allocation3 + $0x110] sm:$0xff] %v1106
      %1148 = vst [vmem:[#allocation3 + $0x118] sm:$0xff] %v1107
      %1149 = vst [vmem:[#allocation3 + $0x120] sm:$0xff] %v1108
      %1150 = vst [vmem:[#allocation3 + $0x128] sm:$0xff] %v1109
      %1151 = vst [vmem:[#allocation3 + $0x130] sm:$0xff] %v1110
      %1152 = vst [vmem:[#allocation3 + $0x138] sm:$0xff] %v1111
      %1153 = vst [vmem:[#allocation3 + $0x140] sm:$0xff] %v1112
      %v1154 = vld [vmem:[#allocation2 + $0x2] sm:$0xff]
      %v1155 = vld [vmem:[#allocation2 + $0xa] sm:$0xff]
      %v1156 = vld [vmem:[#allocation2 + $0x12] sm:$0xff]
      %v1157 = vld [vmem:[#allocation2 + $0x1a] sm:$0xff]
      %v1158 = vld [vmem:[#allocation2 + $0x22] sm:$0xff]
      %v1159 = vld [vmem:[#allocation2 + $0x2a] sm:$0xff]
      %v1160 = vld [vmem:[#allocation2 + $0x32] sm:$0xff]
      %v1161 = vld [vmem:[#allocation2 + $0x3a] sm:$0xff]
      %v1162 = vld [vmem:[#allocation2 + $0x42] sm:$0xff]
      %v1163 = vld [vmem:[#allocation2 + $0x4a] sm:$0xff]
      %v1164 = vld [vmem:[#allocation2 + $0x52] sm:$0xff]
      %v1165 = vld [vmem:[#allocation2 + $0x5a] sm:$0xff]
      %v1166 = vld [vmem:[#allocation2 + $0x62] sm:$0xff]
      %v1167 = vld [vmem:[#allocation2 + $0x6a] sm:$0xff]
      %v1168 = vld [vmem:[#allocation2 + $0x72] sm:$0xff]
      %v1169 = vld [vmem:[#allocation2 + $0x7a] sm:$0xff]
      %v1170 = vld [vmem:[#allocation2 + $0x82] sm:$0xff]
      %v1171 = vld [vmem:[#allocation2 + $0x8a] sm:$0xff]
      %v1172 = vld [vmem:[#allocation2 + $0x92] sm:$0xff]
      %v1173 = vld [vmem:[#allocation2 + $0x9a] sm:$0xff]
      %v1174 = vld [vmem:[#allocation2 + $0xa2] sm:$0xff]
      %v1175 = vld [vmem:[#allocation2 + $0xaa] sm:$0xff]
      %v1176 = vld [vmem:[#allocation2 + $0xb2] sm:$0xff]
      %v1177 = vld [vmem:[#allocation2 + $0xba] sm:$0xff]
      %v1178 = vld [vmem:[#allocation2 + $0xc2] sm:$0xff]
      %v1179 = vld [vmem:[#allocation2 + $0xca] sm:$0xff]
      %v1180 = vld [vmem:[#allocation2 + $0xd2] sm:$0xff]
      %v1181 = vld [vmem:[#allocation2 + $0xda] sm:$0xff]
      %v1182 = vld [vmem:[#allocation2 + $0xe2] sm:$0xff]
      %v1183 = vld [vmem:[#allocation2 + $0xea] sm:$0xff]
      %v1184 = vld [vmem:[#allocation2 + $0xf2] sm:$0xff]
      %v1185 = vld [vmem:[#allocation2 + $0xfa] sm:$0xff]
      %v1186 = vld [vmem:[#allocation2 + $0x102] sm:$0xff]
      %v1187 = vld [vmem:[#allocation2 + $0x10a] sm:$0xff]
      %v1188 = vld [vmem:[#allocation2 + $0x112] sm:$0xff]
      %v1189 = vld [vmem:[#allocation2 + $0x11a] sm:$0xff]
      %v1190 = vld [vmem:[#allocation2 + $0x122] sm:$0xff]
      %v1191 = vld [vmem:[#allocation2 + $0x12a] sm:$0xff]
      %v1192 = vld [vmem:[#allocation2 + $0x132] sm:$0xff]
      %v1193 = vld [vmem:[#allocation2 + $0x13a] sm:$0xff]
      %v1194 = vld [vmem:[#allocation2 + $0x142] sm:$0xff]
      %v1195 = vpack.c.bf16 %v1155, %v1154
      %v1196 = vpack.c.bf16 %v1157, %v1156
      %v1197 = vpack.c.bf16 %v1159, %v1158
      %v1198 = vpack.c.bf16 %v1161, %v1160
      %v1199 = vpack.c.bf16 %v1163, %v1162
      %v1200 = vpack.c.bf16 %v1165, %v1164
      %v1201 = vpack.c.bf16 %v1167, %v1166
      %v1202 = vpack.c.bf16 %v1169, %v1168
      %v1203 = vpack.c.bf16 %v1171, %v1170
      %v1204 = vpack.c.bf16 %v1173, %v1172
      %v1205 = vpack.c.bf16 %v1175, %v1174
      %v1206 = vpack.c.bf16 %v1177, %v1176
      %v1207 = vpack.c.bf16 %v1179, %v1178
      %v1208 = vpack.c.bf16 %v1181, %v1180
      %v1209 = vpack.c.bf16 %v1183, %v1182
      %v1210 = vpack.c.bf16 %v1185, %v1184
      %v1211 = vpack.c.bf16 %v1187, %v1186
      %v1212 = vpack.c.bf16 %v1189, %v1188
      %v1213 = vpack.c.bf16 %v1191, %v1190
      %v1214 = vpack.c.bf16 %v1193, %v1192
      %v1215 = vpack.c.bf16 %v1194, %v1194
      %s1216 = scalar_lea.vmem %s164, 4
      %v1217 = vld [vmem:[%s1216] sm:$0x3]
      %v1219 = vsel %vm392, %v1195, 0
      %v1222 = vsel %vm392, %v1196, 0
      %v1225 = vsel %vm392, %v1197, 0
      %v1228 = vsel %vm392, %v1198, 0
      %v1231 = vsel %vm392, %v1199, 0
      %v1234 = vsel %vm392, %v1200, 0
      %v1237 = vsel %vm392, %v1201, 0
      %v1240 = vsel %vm392, %v1202, 0
      %v1243 = vsel %vm392, %v1203, 0
      %v1246 = vsel %vm392, %v1204, 0
      %v1249 = vsel %vm392, %v1205, 0
      %v1252 = vsel %vm392, %v1206, 0
      %v1255 = vsel %vm392, %v1207, 0
      %v1258 = vsel %vm392, %v1208, 0
      %v1261 = vsel %vm392, %v1209, 0
      %v1264 = vsel %vm392, %v1210, 0
      %v1267 = vsel %vm392, %v1211, 0
      %v1270 = vsel %vm392, %v1212, 0
      %v1273 = vsel %vm392, %v1213, 0
      %v1276 = vsel %vm392, %v1214, 0
      %v1279 = vsel %vm392, %v1215, 0
      %v1282 = vsel %vm456, %v1217, 0
      %1284 = vmatprep.subr.bf16.mxu0 0
      %1285 = vmatpush1.bf16.msra.mxu0 %v1282
      %1286 = vmatprep.subr.bf16.mxu0 0
      %1287 = vmatpush1.bf16.msra.mxu0 0
      %1288 = vmatprep.subr.bf16.mxu0 0
      %1289 = vmatpush1.bf16.msra.mxu0 0
      %1290 = vmatprep.subr.bf16.mxu0 0
      %1291 = vmatpush1.bf16.msra.mxu0 0
      %1292 = vmatprep.subr.bf16.mxu0 0
      %1293 = vmatpush1.bf16.msra.mxu0 0
      %1294 = vmatprep.subr.bf16.mxu0 0
      %1295 = vmatpush1.bf16.msra.mxu0 0
      %1296 = vmatprep.subr.bf16.mxu0 0
      %1297 = vmatpush1.bf16.msra.mxu0 0
      %1298 = vmatprep.subr.bf16.mxu0 0
      %1299 = vmatpush1.bf16.msra.mxu0 0
      %1300 = vmatprep.subr.bf16.mxu0 0
      %1301 = vmatpush1.bf16.msra.mxu0 0
      %1302 = vmatprep.subr.bf16.mxu0 0
      %1303 = vmatpush1.bf16.msra.mxu0 0
      %1304 = vmatprep.subr.bf16.mxu0 0
      %1305 = vmatpush1.bf16.msra.mxu0 0
      %1306 = vmatprep.subr.bf16.mxu0 0
      %1307 = vmatpush1.bf16.msra.mxu0 0
      %1308 = vmatprep.subr.bf16.mxu0 0
      %1309 = vmatpush1.bf16.msra.mxu0 0
      %1310 = vmatprep.subr.bf16.mxu0 0
      %1311 = vmatpush1.bf16.msra.mxu0 0
      %1312 = vmatprep.subr.bf16.mxu0 0
      %1313 = vmatpush1.bf16.msra.mxu0 0
      %1314 = vmatprep.subr.bf16.mxu0 0
      %1315 = vmatpush1.bf16.msra.mxu0 0
      %1316 = vmatprep.mubr.bf16.mxu0 0
      %1317 = vmatmul.mubr.bf16.gmra.mrb[0].mxu0 %v1219
      %v1318 = vpop.f32.mrb[0].mxu0
      %v1319 = vadd.f32 0.0, %v1318
      %v1320 = vpop.f32.mrb[0].mxu0
      %v1321 = vpop.f32.mrb[0].mxu0
      %v1322 = vadd.f32 0.0, %v1321
      %v1323 = vpop.f32.mrb[0].mxu0
      %1324 = vmatprep.mubr.bf16.mxu0 0
      %1325 = vmatmul.mubr.bf16.gmra.mrb[0].mxu0 %v1222
      %v1326 = vpop.f32.mrb[0].mxu0
      %v1327 = vadd.f32 0.0, %v1326
      %v1328 = vpop.f32.mrb[0].mxu0
      %v1329 = vpop.f32.mrb[0].mxu0
      %v1330 = vadd.f32 0.0, %v1329
      %v1331 = vpop.f32.mrb[0].mxu0
      %1332 = vmatprep.mubr.bf16.mxu0 0
      %1333 = vmatmul.mubr.bf16.gmra.mrb[0].mxu0 %v1225
      %v1334 = vpop.f32.mrb[0].mxu0
      %v1335 = vadd.f32 0.0, %v1334
      %v1336 = vpop.f32.mrb[0].mxu0
      %v1337 = vpop.f32.mrb[0].mxu0
      %v1338 = vadd.f32 0.0, %v1337
      %v1339 = vpop.f32.mrb[0].mxu0
      %1340 = vmatprep.mubr.bf16.mxu0 0
      %1341 = vmatmul.mubr.bf16.gmra.mrb[0].mxu0 %v1228
      %v1342 = vpop.f32.mrb[0].mxu0
      %v1343 = vadd.f32 0.0, %v1342
      %v1344 = vpop.f32.mrb[0].mxu0
      %v1345 = vpop.f32.mrb[0].mxu0
      %v1346 = vadd.f32 0.0, %v1345
      %v1347 = vpop.f32.mrb[0].mxu0
      %1348 = vmatprep.mubr.bf16.mxu0 0
      %1349 = vmatmul.mubr.bf16.gmra.mrb[0].mxu0 %v1231
      %v1350 = vpop.f32.mrb[0].mxu0
      %v1351 = vadd.f32 0.0, %v1350
      %v1352 = vpop.f32.mrb[0].mxu0
      %v1353 = vpop.f32.mrb[0].mxu0
      %v1354 = vadd.f32 0.0, %v1353
      %v1355 = vpop.f32.mrb[0].mxu0
      %1356 = vmatprep.mubr.bf16.mxu0 0
      %1357 = vmatmul.mubr.bf16.gmra.mrb[0].mxu0 %v1234
      %v1358 = vpop.f32.mrb[0].mxu0
      %v1359 = vadd.f32 0.0, %v1358
      %v1360 = vpop.f32.mrb[0].mxu0
      %v1361 = vpop.f32.mrb[0].mxu0
      %v1362 = vadd.f32 0.0, %v1361
      %v1363 = vpop.f32.mrb[0].mxu0
      %1364 = vmatprep.mubr.bf16.mxu0 0
      %1365 = vmatmul.mubr.bf16.gmra.mrb[0].mxu0 %v1237
      %v1366 = vpop.f32.mrb[0].mxu0
      %v1367 = vadd.f32 0.0, %v1366
      %v1368 = vpop.f32.mrb[0].mxu0
      %v1369 = vpop.f32.mrb[0].mxu0
      %v1370 = vadd.f32 0.0, %v1369
      %v1371 = vpop.f32.mrb[0].mxu0
      %1372 = vmatprep.mubr.bf16.mxu0 0
      %1373 = vmatmul.mubr.bf16.gmra.mrb[0].mxu0 %v1240
      %v1374 = vpop.f32.mrb[0].mxu0
      %v1375 = vadd.f32 0.0, %v1374
      %v1376 = vpop.f32.mrb[0].mxu0
      %v1377 = vpop.f32.mrb[0].mxu0
      %v1378 = vadd.f32 0.0, %v1377
      %v1379 = vpop.f32.mrb[0].mxu0
      %1380 = vmatprep.mubr.bf16.mxu0 0
      %1381 = vmatmul.mubr.bf16.gmra.mrb[0].mxu0 %v1243
      %v1382 = vpop.f32.mrb[0].mxu0
      %v1383 = vadd.f32 0.0, %v1382
      %v1384 = vpop.f32.mrb[0].mxu0
      %v1385 = vpop.f32.mrb[0].mxu0
      %v1386 = vadd.f32 0.0, %v1385
      %v1387 = vpop.f32.mrb[0].mxu0
      %1388 = vmatprep.mubr.bf16.mxu0 0
      %1389 = vmatmul.mubr.bf16.gmra.mrb[0].mxu0 %v1246
      %v1390 = vpop.f32.mrb[0].mxu0
      %v1391 = vadd.f32 0.0, %v1390
      %v1392 = vpop.f32.mrb[0].mxu0
      %v1393 = vpop.f32.mrb[0].mxu0
      %v1394 = vadd.f32 0.0, %v1393
      %v1395 = vpop.f32.mrb[0].mxu0
      %1396 = vmatprep.mubr.bf16.mxu0 0
      %1397 = vmatmul.mubr.bf16.gmra.mrb[0].mxu0 %v1249
      %v1398 = vpop.f32.mrb[0].mxu0
      %v1399 = vadd.f32 0.0, %v1398
      %v1400 = vpop.f32.mrb[0].mxu0
      %v1401 = vpop.f32.mrb[0].mxu0
      %v1402 = vadd.f32 0.0, %v1401
      %v1403 = vpop.f32.mrb[0].mxu0
      %1404 = vmatprep.mubr.bf16.mxu0 0
      %1405 = vmatmul.mubr.bf16.gmra.mrb[0].mxu0 %v1252
      %v1406 = vpop.f32.mrb[0].mxu0
      %v1407 = vadd.f32 0.0, %v1406
      %v1408 = vpop.f32.mrb[0].mxu0
      %v1409 = vpop.f32.mrb[0].mxu0
      %v1410 = vadd.f32 0.0, %v1409
      %v1411 = vpop.f32.mrb[0].mxu0
      %1412 = vmatprep.mubr.bf16.mxu0 0
      %1413 = vmatmul.mubr.bf16.gmra.mrb[0].mxu0 %v1255
      %v1414 = vpop.f32.mrb[0].mxu0
      %v1415 = vadd.f32 0.0, %v1414
      %v1416 = vpop.f32.mrb[0].mxu0
      %v1417 = vpop.f32.mrb[0].mxu0
      %v1418 = vadd.f32 0.0, %v1417
      %v1419 = vpop.f32.mrb[0].mxu0
      %1420 = vmatprep.mubr.bf16.mxu0 0
      %1421 = vmatmul.mubr.bf16.gmra.mrb[0].mxu0 %v1258
      %v1422 = vpop.f32.mrb[0].mxu0
      %v1423 = vadd.f32 0.0, %v1422
      %v1424 = vpop.f32.mrb[0].mxu0
      %v1425 = vpop.f32.mrb[0].mxu0
      %v1426 = vadd.f32 0.0, %v1425
      %v1427 = vpop.f32.mrb[0].mxu0
      %1428 = vmatprep.mubr.bf16.mxu0 0
      %1429 = vmatmul.mubr.bf16.gmra.mrb[0].mxu0 %v1261
      %v1430 = vpop.f32.mrb[0].mxu0
      %v1431 = vadd.f32 0.0, %v1430
      %v1432 = vpop.f32.mrb[0].mxu0
      %v1433 = vpop.f32.mrb[0].mxu0
      %v1434 = vadd.f32 0.0, %v1433
      %v1435 = vpop.f32.mrb[0].mxu0
      %1436 = vmatprep.mubr.bf16.mxu0 0
      %1437 = vmatmul.mubr.bf16.gmra.mrb[0].mxu0 %v1264
      %v1438 = vpop.f32.mrb[0].mxu0
      %v1439 = vadd.f32 0.0, %v1438
      %v1440 = vpop.f32.mrb[0].mxu0
      %v1441 = vpop.f32.mrb[0].mxu0
      %v1442 = vadd.f32 0.0, %v1441
      %v1443 = vpop.f32.mrb[0].mxu0
      %1444 = vmatprep.mubr.bf16.mxu0 0
      %1445 = vmatmul.mubr.bf16.gmra.mrb[0].mxu0 %v1267
      %v1446 = vpop.f32.mrb[0].mxu0
      %v1447 = vadd.f32 0.0, %v1446
      %v1448 = vpop.f32.mrb[0].mxu0
      %v1449 = vpop.f32.mrb[0].mxu0
      %v1450 = vadd.f32 0.0, %v1449
      %v1451 = vpop.f32.mrb[0].mxu0
      %1452 = vmatprep.mubr.bf16.mxu0 0
      %1453 = vmatmul.mubr.bf16.gmra.mrb[0].mxu0 %v1270
      %v1454 = vpop.f32.mrb[0].mxu0
      %v1455 = vadd.f32 0.0, %v1454
      %v1456 = vpop.f32.mrb[0].mxu0
      %v1457 = vpop.f32.mrb[0].mxu0
      %v1458 = vadd.f32 0.0, %v1457
      %v1459 = vpop.f32.mrb[0].mxu0
      %1460 = vmatprep.mubr.bf16.mxu0 0
      %1461 = vmatmul.mubr.bf16.gmra.mrb[0].mxu0 %v1273
      %v1462 = vpop.f32.mrb[0].mxu0
      %v1463 = vadd.f32 0.0, %v1462
      %v1464 = vpop.f32.mrb[0].mxu0
      %v1465 = vpop.f32.mrb[0].mxu0
      %v1466 = vadd.f32 0.0, %v1465
      %v1467 = vpop.f32.mrb[0].mxu0
      %1468 = vmatprep.mubr.bf16.mxu0 0
      %1469 = vmatmul.mubr.bf16.gmra.mrb[0].mxu0 %v1276
      %v1470 = vpop.f32.mrb[0].mxu0
      %v1471 = vadd.f32 0.0, %v1470
      %v1472 = vpop.f32.mrb[0].mxu0
      %v1473 = vpop.f32.mrb[0].mxu0
      %v1474 = vadd.f32 0.0, %v1473
      %v1475 = vpop.f32.mrb[0].mxu0
      %1476 = vmatprep.mubr.bf16.mxu0 0
      %1477 = vmatmul.mubr.bf16.gmra.mrb[0].mxu0 %v1279
      %v1478 = vpop.f32.mrb[0].mxu0
      %v1479 = vadd.f32 0.0, %v1478
      %v1480 = vpop.f32.mrb[0].mxu0
      %v1481 = vpop.f32.mrb[0].mxu0
      %v1482 = vpop.f32.mrb[0].mxu0
      %1483 = vdwg.mxu0
      %v1484 = vld [vmem:[#allocation3] sm:$0xff]
      %v1485 = vld [vmem:[#allocation3 + $0x8] sm:$0xff]
      %v1486 = vld [vmem:[#allocation3 + $0x10] sm:$0xff]
      %v1487 = vld [vmem:[#allocation3 + $0x18] sm:$0xff]
      %v1488 = vld [vmem:[#allocation3 + $0x20] sm:$0xff]
      %v1489 = vld [vmem:[#allocation3 + $0x28] sm:$0xff]
      %v1490 = vld [vmem:[#allocation3 + $0x30] sm:$0xff]
      %v1491 = vld [vmem:[#allocation3 + $0x38] sm:$0xff]
      %v1492 = vld [vmem:[#allocation3 + $0x40] sm:$0xff]
      %v1493 = vld [vmem:[#allocation3 + $0x48] sm:$0xff]
      %v1494 = vld [vmem:[#allocation3 + $0x50] sm:$0xff]
      %v1495 = vld [vmem:[#allocation3 + $0x58] sm:$0xff]
      %v1496 = vld [vmem:[#allocation3 + $0x60] sm:$0xff]
      %v1497 = vld [vmem:[#allocation3 + $0x68] sm:$0xff]
      %v1498 = vld [vmem:[#allocation3 + $0x70] sm:$0xff]
      %v1499 = vld [vmem:[#allocation3 + $0x78] sm:$0xff]
      %v1500 = vld [vmem:[#allocation3 + $0x80] sm:$0xff]
      %v1501 = vld [vmem:[#allocation3 + $0x88] sm:$0xff]
      %v1502 = vld [vmem:[#allocation3 + $0x90] sm:$0xff]
      %v1503 = vld [vmem:[#allocation3 + $0x98] sm:$0xff]
      %v1504 = vld [vmem:[#allocation3 + $0xa0] sm:$0xff]
      %v1505 = vld [vmem:[#allocation3 + $0xa8] sm:$0xff]
      %v1506 = vld [vmem:[#allocation3 + $0xb0] sm:$0xff]
      %v1507 = vld [vmem:[#allocation3 + $0xb8] sm:$0xff]
      %v1508 = vld [vmem:[#allocation3 + $0xc0] sm:$0xff]
      %v1509 = vld [vmem:[#allocation3 + $0xc8] sm:$0xff]
      %v1510 = vld [vmem:[#allocation3 + $0xd0] sm:$0xff]
      %v1511 = vld [vmem:[#allocation3 + $0xd8] sm:$0xff]
      %v1512 = vld [vmem:[#allocation3 + $0xe0] sm:$0xff]
      %v1513 = vld [vmem:[#allocation3 + $0xe8] sm:$0xff]
      %v1514 = vld [vmem:[#allocation3 + $0xf0] sm:$0xff]
      %v1515 = vld [vmem:[#allocation3 + $0xf8] sm:$0xff]
      %v1516 = vld [vmem:[#allocation3 + $0x100] sm:$0xff]
      %v1517 = vld [vmem:[#allocation3 + $0x108] sm:$0xff]
      %v1518 = vld [vmem:[#allocation3 + $0x110] sm:$0xff]
      %v1519 = vld [vmem:[#allocation3 + $0x118] sm:$0xff]
      %v1520 = vld [vmem:[#allocation3 + $0x120] sm:$0xff]
      %v1521 = vld [vmem:[#allocation3 + $0x128] sm:$0xff]
      %v1522 = vld [vmem:[#allocation3 + $0x130] sm:$0xff]
      %v1523 = vld [vmem:[#allocation3 + $0x138] sm:$0xff]
      %v1524 = vld [vmem:[#allocation3 + $0x140] sm:$0xff]
      %v1525 = vadd.f32 %v1484, %v1319
      %v1526 = vadd.f32 %v1485, %v1322
      %v1527 = vadd.f32 %v1486, %v1327
      %v1528 = vadd.f32 %v1487, %v1330
      %v1529 = vadd.f32 %v1488, %v1335
      %v1530 = vadd.f32 %v1489, %v1338
      %v1531 = vadd.f32 %v1490, %v1343
      %v1532 = vadd.f32 %v1491, %v1346
      %v1533 = vadd.f32 %v1492, %v1351
      %v1534 = vadd.f32 %v1493, %v1354
      %v1535 = vadd.f32 %v1494, %v1359
      %v1536 = vadd.f32 %v1495, %v1362
      %v1537 = vadd.f32 %v1496, %v1367
      %v1538 = vadd.f32 %v1497, %v1370
      %v1539 = vadd.f32 %v1498, %v1375
      %v1540 = vadd.f32 %v1499, %v1378
      %v1541 = vadd.f32 %v1500, %v1383
      %v1542 = vadd.f32 %v1501, %v1386
      %v1543 = vadd.f32 %v1502, %v1391
      %v1544 = vadd.f32 %v1503, %v1394
      %v1545 = vadd.f32 %v1504, %v1399
      %v1546 = vadd.f32 %v1505, %v1402
      %v1547 = vadd.f32 %v1506, %v1407
      %v1548 = vadd.f32 %v1507, %v1410
      %v1549 = vadd.f32 %v1508, %v1415
      %v1550 = vadd.f32 %v1509, %v1418
      %v1551 = vadd.f32 %v1510, %v1423
      %v1552 = vadd.f32 %v1511, %v1426
      %v1553 = vadd.f32 %v1512, %v1431
      %v1554 = vadd.f32 %v1513, %v1434
      %v1555 = vadd.f32 %v1514, %v1439
      %v1556 = vadd.f32 %v1515, %v1442
      %v1557 = vadd.f32 %v1516, %v1447
      %v1558 = vadd.f32 %v1517, %v1450
      %v1559 = vadd.f32 %v1518, %v1455
      %v1560 = vadd.f32 %v1519, %v1458
      %v1561 = vadd.f32 %v1520, %v1463
      %v1562 = vadd.f32 %v1521, %v1466
      %v1563 = vadd.f32 %v1522, %v1471
      %v1564 = vadd.f32 %v1523, %v1474
      %v1565 = vadd.f32 %v1524, %v1479
      %1566 = vst [vmem:[#allocation3] sm:$0xff] %v1525
      %1567 = vst [vmem:[#allocation3 + $0x8] sm:$0xff] %v1526
      %1568 = vst [vmem:[#allocation3 + $0x10] sm:$0xff] %v1527
      %1569 = vst [vmem:[#allocation3 + $0x18] sm:$0xff] %v1528
      %1570 = vst [vmem:[#allocation3 + $0x20] sm:$0xff] %v1529
      %1571 = vst [vmem:[#allocation3 + $0x28] sm:$0xff] %v1530
      %1572 = vst [vmem:[#allocation3 + $0x30] sm:$0xff] %v1531
      %1573 = vst [vmem:[#allocation3 + $0x38] sm:$0xff] %v1532
      %1574 = vst [vmem:[#allocation3 + $0x40] sm:$0xff] %v1533
      %1575 = vst [vmem:[#allocation3 + $0x48] sm:$0xff] %v1534
      %1576 = vst [vmem:[#allocation3 + $0x50] sm:$0xff] %v1535
      %1577 = vst [vmem:[#allocation3 + $0x58] sm:$0xff] %v1536
      %1578 = vst [vmem:[#allocation3 + $0x60] sm:$0xff] %v1537
      %1579 = vst [vmem:[#allocation3 + $0x68] sm:$0xff] %v1538
      %1580 = vst [vmem:[#allocation3 + $0x70] sm:$0xff] %v1539
      %1581 = vst [vmem:[#allocation3 + $0x78] sm:$0xff] %v1540
      %1582 = vst [vmem:[#allocation3 + $0x80] sm:$0xff] %v1541
      %1583 = vst [vmem:[#allocation3 + $0x88] sm:$0xff] %v1542
      %1584 = vst [vmem:[#allocation3 + $0x90] sm:$0xff] %v1543
      %1585 = vst [vmem:[#allocation3 + $0x98] sm:$0xff] %v1544
      %1586 = vst [vmem:[#allocation3 + $0xa0] sm:$0xff] %v1545
      %1587 = vst [vmem:[#allocation3 + $0xa8] sm:$0xff] %v1546
      %1588 = vst [vmem:[#allocation3 + $0xb0] sm:$0xff] %v1547
      %1589 = vst [vmem:[#allocation3 + $0xb8] sm:$0xff] %v1548
      %1590 = vst [vmem:[#allocation3 + $0xc0] sm:$0xff] %v1549
      %1591 = vst [vmem:[#allocation3 + $0xc8] sm:$0xff] %v1550
      %1592 = vst [vmem:[#allocation3 + $0xd0] sm:$0xff] %v1551
      %1593 = vst [vmem:[#allocation3 + $0xd8] sm:$0xff] %v1552
      %1594 = vst [vmem:[#allocation3 + $0xe0] sm:$0xff] %v1553
      %1595 = vst [vmem:[#allocation3 + $0xe8] sm:$0xff] %v1554
      %1596 = vst [vmem:[#allocation3 + $0xf0] sm:$0xff] %v1555
      %1597 = vst [vmem:[#allocation3 + $0xf8] sm:$0xff] %v1556
      %1598 = vst [vmem:[#allocation3 + $0x100] sm:$0xff] %v1557
      %1599 = vst [vmem:[#allocation3 + $0x108] sm:$0xff] %v1558
      %1600 = vst [vmem:[#allocation3 + $0x110] sm:$0xff] %v1559
      %1601 = vst [vmem:[#allocation3 + $0x118] sm:$0xff] %v1560
      %1602 = vst [vmem:[#allocation3 + $0x120] sm:$0xff] %v1561
      %1603 = vst [vmem:[#allocation3 + $0x128] sm:$0xff] %v1562
      %1604 = vst [vmem:[#allocation3 + $0x130] sm:$0xff] %v1563
      %1605 = vst [vmem:[#allocation3 + $0x138] sm:$0xff] %v1564
      %1606 = vst [vmem:[#allocation3 + $0x140] sm:$0xff] %v1565
      %v1607 = vld [vmem:[#allocation2 + $0x12] sm:$0xff]
      %v1608 = vld [vmem:[#allocation2 + $0x1a] sm:$0xff]
      %v1609 = vld [vmem:[#allocation2 + $0x22] sm:$0xff]
      %v1610 = vld [vmem:[#allocation2 + $0x2a] sm:$0xff]
      %v1611 = vld [vmem:[#allocation2 + $0x32] sm:$0xff]
      %v1612 = vld [vmem:[#allocation2 + $0x3a] sm:$0xff]
      %v1613 = vld [vmem:[#allocation2 + $0x42] sm:$0xff]
      %v1614 = vld [vmem:[#allocation2 + $0x4a] sm:$0xff]
      %v1615 = vld [vmem:[#allocation2 + $0x52] sm:$0xff]
      %v1616 = vld [vmem:[#allocation2 + $0x5a] sm:$0xff]
      %v1617 = vld [vmem:[#allocation2 + $0x62] sm:$0xff]
      %v1618 = vld [vmem:[#allocation2 + $0x6a] sm:$0xff]
      %v1619 = vld [vmem:[#allocation2 + $0x72] sm:$0xff]
      %v1620 = vld [vmem:[#allocation2 + $0x7a] sm:$0xff]
      %v1621 = vld [vmem:[#allocation2 + $0x82] sm:$0xff]
      %v1622 = vld [vmem:[#allocation2 + $0x8a] sm:$0xff]
      %v1623 = vld [vmem:[#allocation2 + $0x92] sm:$0xff]
      %v1624 = vld [vmem:[#allocation2 + $0x9a] sm:$0xff]
      %v1625 = vld [vmem:[#allocation2 + $0xa2] sm:$0xff]
      %v1626 = vld [vmem:[#allocation2 + $0xaa] sm:$0xff]
      %v1627 = vld [vmem:[#allocation2 + $0xb2] sm:$0xff]
      %v1628 = vld [vmem:[#allocation2 + $0xba] sm:$0xff]
      %v1629 = vld [vmem:[#allocation2 + $0xc2] sm:$0xff]
      %v1630 = vld [vmem:[#allocation2 + $0xca] sm:$0xff]
      %v1631 = vld [vmem:[#allocation2 + $0xd2] sm:$0xff]
      %v1632 = vld [vmem:[#allocation2 + $0xda] sm:$0xff]
      %v1633 = vld [vmem:[#allocation2 + $0xe2] sm:$0xff]
      %v1634 = vld [vmem:[#allocation2 + $0xea] sm:$0xff]
      %v1635 = vld [vmem:[#allocation2 + $0xf2] sm:$0xff]
      %v1636 = vld [vmem:[#allocation2 + $0xfa] sm:$0xff]
      %v1637 = vld [vmem:[#allocation2 + $0x102] sm:$0xff]
      %v1638 = vld [vmem:[#allocation2 + $0x10a] sm:$0xff]
      %v1639 = vld [vmem:[#allocation2 + $0x112] sm:$0xff]
      %v1640 = vld [vmem:[#allocation2 + $0x11a] sm:$0xff]
      %v1641 = vld [vmem:[#allocation2 + $0x122] sm:$0xff]
      %v1642 = vld [vmem:[#allocation2 + $0x12a] sm:$0xff]
      %v1643 = vld [vmem:[#allocation2 + $0x132] sm:$0xff]
      %v1644 = vld [vmem:[#allocation2 + $0x13a] sm:$0xff]
      %v1645 = vld [vmem:[#allocation2 + $0x142] sm:$0xff]
      %v1646 = vld [vmem:[#allocation2 + $0x14a] sm:$0xff]
      %v1647 = vld [vmem:[#allocation2 + $0x152] sm:$0xff]
      %v1648 = vpack.c.bf16 %v1608, %v1607
      %v1649 = vpack.c.bf16 %v1610, %v1609
      %v1650 = vpack.c.bf16 %v1612, %v1611
      %v1651 = vpack.c.bf16 %v1614, %v1613
      %v1652 = vpack.c.bf16 %v1616, %v1615
      %v1653 = vpack.c.bf16 %v1618, %v1617
      %v1654 = vpack.c.bf16 %v1620, %v1619
      %v1655 = vpack.c.bf16 %v1622, %v1621
      %v1656 = vpack.c.bf16 %v1624, %v1623
      %v1657 = vpack.c.bf16 %v1626, %v1625
      %v1658 = vpack.c.bf16 %v1628, %v1627
      %v1659 = vpack.c.bf16 %v1630, %v1629
      %v1660 = vpack.c.bf16 %v1632, %v1631
      %v1661 = vpack.c.bf16 %v1634, %v1633
      %v1662 = vpack.c.bf16 %v1636, %v1635
      %v1663 = vpack.c.bf16 %v1638, %v1637
      %v1664 = vpack.c.bf16 %v1640, %v1639
      %v1665 = vpack.c.bf16 %v1642, %v1641
      %v1666 = vpack.c.bf16 %v1644, %v1643
      %v1667 = vpack.c.bf16 %v1646, %v1645
      %v1668 = vpack.c.bf16 %v1647, %v1647
      %s1669 = scalar_lea.vmem %s164, 6
      %v1670 = vld [vmem:[%s1669] sm:$0x3]
      %v1672 = vsel %vm392, %v1648, 0
      %v1675 = vsel %vm392, %v1649, 0
      %v1678 = vsel %vm392, %v1650, 0
      %v1681 = vsel %vm392, %v1651, 0
      %v1684 = vsel %vm392, %v1652, 0
      %v1687 = vsel %vm392, %v1653, 0
      %v1690 = vsel %vm392, %v1654, 0
      %v1693 = vsel %vm392, %v1655, 0
      %v1696 = vsel %vm392, %v1656, 0
      %v1699 = vsel %vm392, %v1657, 0
      %v1702 = vsel %vm392, %v1658, 0
      %v1705 = vsel %vm392, %v1659, 0
      %v1708 = vsel %vm392, %v1660, 0
      %v1711 = vsel %vm392, %v1661, 0
      %v1714 = vsel %vm392, %v1662, 0
      %v1717 = vsel %vm392, %v1663, 0
      %v1720 = vsel %vm392, %v1664, 0
      %v1723 = vsel %vm392, %v1665, 0
      %v1726 = vsel %vm392, %v1666, 0
      %v1729 = vsel %vm392, %v1667, 0
      %v1732 = vsel %vm392, %v1668, 0
      %v1735 = vsel %vm456, %v1670, 0
      %1737 = vmatprep.subr.bf16.mxu0 0
      %1738 = vmatpush1.bf16.msra.mxu0 %v1735
      %1739 = vmatprep.subr.bf16.mxu0 0
      %1740 = vmatpush1.bf16.msra.mxu0 0
      %1741 = vmatprep.subr.bf16.mxu0 0
      %1742 = vmatpush1.bf16.msra.mxu0 0
      %1743 = vmatprep.subr.bf16.mxu0 0
      %1744 = vmatpush1.bf16.msra.mxu0 0
      %1745 = vmatprep.subr.bf16.mxu0 0
      %1746 = vmatpush1.bf16.msra.mxu0 0
      %1747 = vmatprep.subr.bf16.mxu0 0
      %1748 = vmatpush1.bf16.msra.mxu0 0
      %1749 = vmatprep.subr.bf16.mxu0 0
      %1750 = vmatpush1.bf16.msra.mxu0 0
      %1751 = vmatprep.subr.bf16.mxu0 0
      %1752 = vmatpush1.bf16.msra.mxu0 0
      %1753 = vmatprep.subr.bf16.mxu0 0
      %1754 = vmatpush1.bf16.msra.mxu0 0
      %1755 = vmatprep.subr.bf16.mxu0 0
      %1756 = vmatpush1.bf16.msra.mxu0 0
      %1757 = vmatprep.subr.bf16.mxu0 0
      %1758 = vmatpush1.bf16.msra.mxu0 0
      %1759 = vmatprep.subr.bf16.mxu0 0
      %1760 = vmatpush1.bf16.msra.mxu0 0
      %1761 = vmatprep.subr.bf16.mxu0 0
      %1762 = vmatpush1.bf16.msra.mxu0 0
      %1763 = vmatprep.subr.bf16.mxu0 0
      %1764 = vmatpush1.bf16.msra.mxu0 0
      %1765 = vmatprep.subr.bf16.mxu0 0
      %1766 = vmatpush1.bf16.msra.mxu0 0
      %1767 = vmatprep.subr.bf16.mxu0 0
      %1768 = vmatpush1.bf16.msra.mxu0 0
      %1769 = vmatprep.mubr.bf16.mxu0 0
      %1770 = vmatmul.mubr.bf16.gmra.mrb[0].mxu0 %v1672
      %v1771 = vpop.f32.mrb[0].mxu0
      %v1772 = vadd.f32 0.0, %v1771
      %v1773 = vpop.f32.mrb[0].mxu0
      %v1774 = vpop.f32.mrb[0].mxu0
      %v1775 = vadd.f32 0.0, %v1774
      %v1776 = vpop.f32.mrb[0].mxu0
      %1777 = vmatprep.mubr.bf16.mxu0 0
      %1778 = vmatmul.mubr.bf16.gmra.mrb[0].mxu0 %v1675
      %v1779 = vpop.f32.mrb[0].mxu0
      %v1780 = vadd.f32 0.0, %v1779
      %v1781 = vpop.f32.mrb[0].mxu0
      %v1782 = vpop.f32.mrb[0].mxu0
      %v1783 = vadd.f32 0.0, %v1782
      %v1784 = vpop.f32.mrb[0].mxu0
      %1785 = vmatprep.mubr.bf16.mxu0 0
      %1786 = vmatmul.mubr.bf16.gmra.mrb[0].mxu0 %v1678
      %v1787 = vpop.f32.mrb[0].mxu0
      %v1788 = vadd.f32 0.0, %v1787
      %v1789 = vpop.f32.mrb[0].mxu0
      %v1790 = vpop.f32.mrb[0].mxu0
      %v1791 = vadd.f32 0.0, %v1790
      %v1792 = vpop.f32.mrb[0].mxu0
      %1793 = vmatprep.mubr.bf16.mxu0 0
      %1794 = vmatmul.mubr.bf16.gmra.mrb[0].mxu0 %v1681
      %v1795 = vpop.f32.mrb[0].mxu0
      %v1796 = vadd.f32 0.0, %v1795
      %v1797 = vpop.f32.mrb[0].mxu0
      %v1798 = vpop.f32.mrb[0].mxu0
      %v1799 = vadd.f32 0.0, %v1798
      %v1800 = vpop.f32.mrb[0].mxu0
      %1801 = vmatprep.mubr.bf16.mxu0 0
      %1802 = vmatmul.mubr.bf16.gmra.mrb[0].mxu0 %v1684
      %v1803 = vpop.f32.mrb[0].mxu0
      %v1804 = vadd.f32 0.0, %v1803
      %v1805 = vpop.f32.mrb[0].mxu0
      %v1806 = vpop.f32.mrb[0].mxu0
      %v1807 = vadd.f32 0.0, %v1806
      %v1808 = vpop.f32.mrb[0].mxu0
      %1809 = vmatprep.mubr.bf16.mxu0 0
      %1810 = vmatmul.mubr.bf16.gmra.mrb[0].mxu0 %v1687
      %v1811 = vpop.f32.mrb[0].mxu0
      %v1812 = vadd.f32 0.0, %v1811
      %v1813 = vpop.f32.mrb[0].mxu0
      %v1814 = vpop.f32.mrb[0].mxu0
      %v1815 = vadd.f32 0.0, %v1814
      %v1816 = vpop.f32.mrb[0].mxu0
      %1817 = vmatprep.mubr.bf16.mxu0 0
      %1818 = vmatmul.mubr.bf16.gmra.mrb[0].mxu0 %v1690
      %v1819 = vpop.f32.mrb[0].mxu0
      %v1820 = vadd.f32 0.0, %v1819
      %v1821 = vpop.f32.mrb[0].mxu0
      %v1822 = vpop.f32.mrb[0].mxu0
      %v1823 = vadd.f32 0.0, %v1822
      %v1824 = vpop.f32.mrb[0].mxu0
      %1825 = vmatprep.mubr.bf16.mxu0 0
      %1826 = vmatmul.mubr.bf16.gmra.mrb[0].mxu0 %v1693
      %v1827 = vpop.f32.mrb[0].mxu0
      %v1828 = vadd.f32 0.0, %v1827
      %v1829 = vpop.f32.mrb[0].mxu0
      %v1830 = vpop.f32.mrb[0].mxu0
      %v1831 = vadd.f32 0.0, %v1830
      %v1832 = vpop.f32.mrb[0].mxu0
      %1833 = vmatprep.mubr.bf16.mxu0 0
      %1834 = vmatmul.mubr.bf16.gmra.mrb[0].mxu0 %v1696
      %v1835 = vpop.f32.mrb[0].mxu0
      %v1836 = vadd.f32 0.0, %v1835
      %v1837 = vpop.f32.mrb[0].mxu0
      %v1838 = vpop.f32.mrb[0].mxu0
      %v1839 = vadd.f32 0.0, %v1838
      %v1840 = vpop.f32.mrb[0].mxu0
      %1841 = vmatprep.mubr.bf16.mxu0 0
      %1842 = vmatmul.mubr.bf16.gmra.mrb[0].mxu0 %v1699
      %v1843 = vpop.f32.mrb[0].mxu0
      %v1844 = vadd.f32 0.0, %v1843
      %v1845 = vpop.f32.mrb[0].mxu0
      %v1846 = vpop.f32.mrb[0].mxu0
      %v1847 = vadd.f32 0.0, %v1846
      %v1848 = vpop.f32.mrb[0].mxu0
      %1849 = vmatprep.mubr.bf16.mxu0 0
      %1850 = vmatmul.mubr.bf16.gmra.mrb[0].mxu0 %v1702
      %v1851 = vpop.f32.mrb[0].mxu0
      %v1852 = vadd.f32 0.0, %v1851
      %v1853 = vpop.f32.mrb[0].mxu0
      %v1854 = vpop.f32.mrb[0].mxu0
      %v1855 = vadd.f32 0.0, %v1854
      %v1856 = vpop.f32.mrb[0].mxu0
      %1857 = vmatprep.mubr.bf16.mxu0 0
      %1858 = vmatmul.mubr.bf16.gmra.mrb[0].mxu0 %v1705
      %v1859 = vpop.f32.mrb[0].mxu0
      %v1860 = vadd.f32 0.0, %v1859
      %v1861 = vpop.f32.mrb[0].mxu0
      %v1862 = vpop.f32.mrb[0].mxu0
      %v1863 = vadd.f32 0.0, %v1862
      %v1864 = vpop.f32.mrb[0].mxu0
      %1865 = vmatprep.mubr.bf16.mxu0 0
      %1866 = vmatmul.mubr.bf16.gmra.mrb[0].mxu0 %v1708
      %v1867 = vpop.f32.mrb[0].mxu0
      %v1868 = vadd.f32 0.0, %v1867
      %v1869 = vpop.f32.mrb[0].mxu0
      %v1870 = vpop.f32.mrb[0].mxu0
      %v1871 = vadd.f32 0.0, %v1870
      %v1872 = vpop.f32.mrb[0].mxu0
      %1873 = vmatprep.mubr.bf16.mxu0 0
      %1874 = vmatmul.mubr.bf16.gmra.mrb[0].mxu0 %v1711
      %v1875 = vpop.f32.mrb[0].mxu0
      %v1876 = vadd.f32 0.0, %v1875
      %v1877 = vpop.f32.mrb[0].mxu0
      %v1878 = vpop.f32.mrb[0].mxu0
      %v1879 = vadd.f32 0.0, %v1878
      %v1880 = vpop.f32.mrb[0].mxu0
      %1881 = vmatprep.mubr.bf16.mxu0 0
      %1882 = vmatmul.mubr.bf16.gmra.mrb[0].mxu0 %v1714
      %v1883 = vpop.f32.mrb[0].mxu0
      %v1884 = vadd.f32 0.0, %v1883
      %v1885 = vpop.f32.mrb[0].mxu0
      %v1886 = vpop.f32.mrb[0].mxu0
      %v1887 = vadd.f32 0.0, %v1886
      %v1888 = vpop.f32.mrb[0].mxu0
      %1889 = vmatprep.mubr.bf16.mxu0 0
      %1890 = vmatmul.mubr.bf16.gmra.mrb[0].mxu0 %v1717
      %v1891 = vpop.f32.mrb[0].mxu0
      %v1892 = vadd.f32 0.0, %v1891
      %v1893 = vpop.f32.mrb[0].mxu0
      %v1894 = vpop.f32.mrb[0].mxu0
      %v1895 = vadd.f32 0.0, %v1894
      %v1896 = vpop.f32.mrb[0].mxu0
      %1897 = vmatprep.mubr.bf16.mxu0 0
      %1898 = vmatmul.mubr.bf16.gmra.mrb[0].mxu0 %v1720
      %v1899 = vpop.f32.mrb[0].mxu0
      %v1900 = vadd.f32 0.0, %v1899
      %v1901 = vpop.f32.mrb[0].mxu0
      %v1902 = vpop.f32.mrb[0].mxu0
      %v1903 = vadd.f32 0.0, %v1902
      %v1904 = vpop.f32.mrb[0].mxu0
      %1905 = vmatprep.mubr.bf16.mxu0 0
      %1906 = vmatmul.mubr.bf16.gmra.mrb[0].mxu0 %v1723
      %v1907 = vpop.f32.mrb[0].mxu0
      %v1908 = vadd.f32 0.0, %v1907
      %v1909 = vpop.f32.mrb[0].mxu0
      %v1910 = vpop.f32.mrb[0].mxu0
      %v1911 = vadd.f32 0.0, %v1910
      %v1912 = vpop.f32.mrb[0].mxu0
      %1913 = vmatprep.mubr.bf16.mxu0 0
      %1914 = vmatmul.mubr.bf16.gmra.mrb[0].mxu0 %v1726
      %v1915 = vpop.f32.mrb[0].mxu0
      %v1916 = vadd.f32 0.0, %v1915
      %v1917 = vpop.f32.mrb[0].mxu0
      %v1918 = vpop.f32.mrb[0].mxu0
      %v1919 = vadd.f32 0.0, %v1918
      %v1920 = vpop.f32.mrb[0].mxu0
      %1921 = vmatprep.mubr.bf16.mxu0 0
      %1922 = vmatmul.mubr.bf16.gmra.mrb[0].mxu0 %v1729
      %v1923 = vpop.f32.mrb[0].mxu0
      %v1924 = vadd.f32 0.0, %v1923
      %v1925 = vpop.f32.mrb[0].mxu0
      %v1926 = vpop.f32.mrb[0].mxu0
      %v1927 = vadd.f32 0.0, %v1926
      %v1928 = vpop.f32.mrb[0].mxu0
      %1929 = vmatprep.mubr.bf16.mxu0 0
      %1930 = vmatmul.mubr.bf16.gmra.mrb[0].mxu0 %v1732
      %v1931 = vpop.f32.mrb[0].mxu0
      %v1932 = vadd.f32 0.0, %v1931
      %v1933 = vpop.f32.mrb[0].mxu0
      %v1934 = vpop.f32.mrb[0].mxu0
      %v1935 = vpop.f32.mrb[0].mxu0
      %1936 = vdwg.mxu0
      %v1937 = vld [vmem:[#allocation3] sm:$0xff]
      %v1938 = vld [vmem:[#allocation3 + $0x8] sm:$0xff]
      %v1939 = vld [vmem:[#allocation3 + $0x10] sm:$0xff]
      %v1940 = vld [vmem:[#allocation3 + $0x18] sm:$0xff]
      %v1941 = vld [vmem:[#allocation3 + $0x20] sm:$0xff]
      %v1942 = vld [vmem:[#allocation3 + $0x28] sm:$0xff]
      %v1943 = vld [vmem:[#allocation3 + $0x30] sm:$0xff]
      %v1944 = vld [vmem:[#allocation3 + $0x38] sm:$0xff]
      %v1945 = vld [vmem:[#allocation3 + $0x40] sm:$0xff]
      %v1946 = vld [vmem:[#allocation3 + $0x48] sm:$0xff]
      %v1947 = vld [vmem:[#allocation3 + $0x50] sm:$0xff]
      %v1948 = vld [vmem:[#allocation3 + $0x58] sm:$0xff]
      %v1949 = vld [vmem:[#allocation3 + $0x60] sm:$0xff]
      %v1950 = vld [vmem:[#allocation3 + $0x68] sm:$0xff]
      %v1951 = vld [vmem:[#allocation3 + $0x70] sm:$0xff]
      %v1952 = vld [vmem:[#allocation3 + $0x78] sm:$0xff]
      %v1953 = vld [vmem:[#allocation3 + $0x80] sm:$0xff]
      %v1954 = vld [vmem:[#allocation3 + $0x88] sm:$0xff]
      %v1955 = vld [vmem:[#allocation3 + $0x90] sm:$0xff]
      %v1956 = vld [vmem:[#allocation3 + $0x98] sm:$0xff]
      %v1957 = vld [vmem:[#allocation3 + $0xa0] sm:$0xff]
      %v1958 = vld [vmem:[#allocation3 + $0xa8] sm:$0xff]
      %v1959 = vld [vmem:[#allocation3 + $0xb0] sm:$0xff]
      %v1960 = vld [vmem:[#allocation3 + $0xb8] sm:$0xff]
      %v1961 = vld [vmem:[#allocation3 + $0xc0] sm:$0xff]
      %v1962 = vld [vmem:[#allocation3 + $0xc8] sm:$0xff]
      %v1963 = vld [vmem:[#allocation3 + $0xd0] sm:$0xff]
      %v1964 = vld [vmem:[#allocation3 + $0xd8] sm:$0xff]
      %v1965 = vld [vmem:[#allocation3 + $0xe0] sm:$0xff]
      %v1966 = vld [vmem:[#allocation3 + $0xe8] sm:$0xff]
      %v1967 = vld [vmem:[#allocation3 + $0xf0] sm:$0xff]
      %v1968 = vld [vmem:[#allocation3 + $0xf8] sm:$0xff]
      %v1969 = vld [vmem:[#allocation3 + $0x100] sm:$0xff]
      %v1970 = vld [vmem:[#allocation3 + $0x108] sm:$0xff]
      %v1971 = vld [vmem:[#allocation3 + $0x110] sm:$0xff]
      %v1972 = vld [vmem:[#allocation3 + $0x118] sm:$0xff]
      %v1973 = vld [vmem:[#allocation3 + $0x120] sm:$0xff]
      %v1974 = vld [vmem:[#allocation3 + $0x128] sm:$0xff]
      %v1975 = vld [vmem:[#allocation3 + $0x130] sm:$0xff]
      %v1976 = vld [vmem:[#allocation3 + $0x138] sm:$0xff]
      %v1977 = vld [vmem:[#allocation3 + $0x140] sm:$0xff]
      %v1978 = vadd.f32 %v1937, %v1772
      %v1979 = vadd.f32 %v1938, %v1775
      %v1980 = vadd.f32 %v1939, %v1780
      %v1981 = vadd.f32 %v1940, %v1783
      %v1982 = vadd.f32 %v1941, %v1788
      %v1983 = vadd.f32 %v1942, %v1791
      %v1984 = vadd.f32 %v1943, %v1796
      %v1985 = vadd.f32 %v1944, %v1799
      %v1986 = vadd.f32 %v1945, %v1804
      %v1987 = vadd.f32 %v1946, %v1807
      %v1988 = vadd.f32 %v1947, %v1812
      %v1989 = vadd.f32 %v1948, %v1815
      %v1990 = vadd.f32 %v1949, %v1820
      %v1991 = vadd.f32 %v1950, %v1823
      %v1992 = vadd.f32 %v1951, %v1828
      %v1993 = vadd.f32 %v1952, %v1831
      %v1994 = vadd.f32 %v1953, %v1836
      %v1995 = vadd.f32 %v1954, %v1839
      %v1996 = vadd.f32 %v1955, %v1844
      %v1997 = vadd.f32 %v1956, %v1847
      %v1998 = vadd.f32 %v1957, %v1852
      %v1999 = vadd.f32 %v1958, %v1855
      %v2000 = vadd.f32 %v1959, %v1860
      %v2001 = vadd.f32 %v1960, %v1863
      %v2002 = vadd.f32 %v1961, %v1868
      %v2003 = vadd.f32 %v1962, %v1871
      %v2004 = vadd.f32 %v1963, %v1876
      %v2005 = vadd.f32 %v1964, %v1879
      %v2006 = vadd.f32 %v1965, %v1884
      %v2007 = vadd.f32 %v1966, %v1887
      %v2008 = vadd.f32 %v1967, %v1892
      %v2009 = vadd.f32 %v1968, %v1895
      %v2010 = vadd.f32 %v1969, %v1900
      %v2011 = vadd.f32 %v1970, %v1903
      %v2012 = vadd.f32 %v1971, %v1908
      %v2013 = vadd.f32 %v1972, %v1911
      %v2014 = vadd.f32 %v1973, %v1916
      %v2015 = vadd.f32 %v1974, %v1919
      %v2016 = vadd.f32 %v1975, %v1924
      %v2017 = vadd.f32 %v1976, %v1927
      %v2018 = vadd.f32 %v1977, %v1932
      %2019 = vst [vmem:[#allocation3] sm:$0xff] %v1978
      %2020 = vst [vmem:[#allocation3 + $0x8] sm:$0xff] %v1979
      %2021 = vst [vmem:[#allocation3 + $0x10] sm:$0xff] %v1980
      %2022 = vst [vmem:[#allocation3 + $0x18] sm:$0xff] %v1981
      %2023 = vst [vmem:[#allocation3 + $0x20] sm:$0xff] %v1982
      %2024 = vst [vmem:[#allocation3 + $0x28] sm:$0xff] %v1983
      %2025 = vst [vmem:[#allocation3 + $0x30] sm:$0xff] %v1984
      %2026 = vst [vmem:[#allocation3 + $0x38] sm:$0xff] %v1985
      %2027 = vst [vmem:[#allocation3 + $0x40] sm:$0xff] %v1986
      %2028 = vst [vmem:[#allocation3 + $0x48] sm:$0xff] %v1987
      %2029 = vst [vmem:[#allocation3 + $0x50] sm:$0xff] %v1988
      %2030 = vst [vmem:[#allocation3 + $0x58] sm:$0xff] %v1989
      %2031 = vst [vmem:[#allocation3 + $0x60] sm:$0xff] %v1990
      %2032 = vst [vmem:[#allocation3 + $0x68] sm:$0xff] %v1991
      %2033 = vst [vmem:[#allocation3 + $0x70] sm:$0xff] %v1992
      %2034 = vst [vmem:[#allocation3 + $0x78] sm:$0xff] %v1993
      %2035 = vst [vmem:[#allocation3 + $0x80] sm:$0xff] %v1994
      %2036 = vst [vmem:[#allocation3 + $0x88] sm:$0xff] %v1995
      %2037 = vst [vmem:[#allocation3 + $0x90] sm:$0xff] %v1996
      %2038 = vst [vmem:[#allocation3 + $0x98] sm:$0xff] %v1997
      %2039 = vst [vmem:[#allocation3 + $0xa0] sm:$0xff] %v1998
      %2040 = vst [vmem:[#allocation3 + $0xa8] sm:$0xff] %v1999
      %2041 = vst [vmem:[#allocation3 + $0xb0] sm:$0xff] %v2000
      %2042 = vst [vmem:[#allocation3 + $0xb8] sm:$0xff] %v2001
      %2043 = vst [vmem:[#allocation3 + $0xc0] sm:$0xff] %v2002
      %2044 = vst [vmem:[#allocation3 + $0xc8] sm:$0xff] %v2003
      %2045 = vst [vmem:[#allocation3 + $0xd0] sm:$0xff] %v2004
      %2046 = vst [vmem:[#allocation3 + $0xd8] sm:$0xff] %v2005
      %2047 = vst [vmem:[#allocation3 + $0xe0] sm:$0xff] %v2006
      %2048 = vst [vmem:[#allocation3 + $0xe8] sm:$0xff] %v2007
      %2049 = vst [vmem:[#allocation3 + $0xf0] sm:$0xff] %v2008
      %2050 = vst [vmem:[#allocation3 + $0xf8] sm:$0xff] %v2009
      %2051 = vst [vmem:[#allocation3 + $0x100] sm:$0xff] %v2010
      %2052 = vst [vmem:[#allocation3 + $0x108] sm:$0xff] %v2011
      %2053 = vst [vmem:[#allocation3 + $0x110] sm:$0xff] %v2012
      %2054 = vst [vmem:[#allocation3 + $0x118] sm:$0xff] %v2013
      %2055 = vst [vmem:[#allocation3 + $0x120] sm:$0xff] %v2014
      %2056 = vst [vmem:[#allocation3 + $0x128] sm:$0xff] %v2015
      %2057 = vst [vmem:[#allocation3 + $0x130] sm:$0xff] %v2016
      %2058 = vst [vmem:[#allocation3 + $0x138] sm:$0xff] %v2017
      %2059 = vst [vmem:[#allocation3 + $0x140] sm:$0xff] %v2018
      %v2060 = vld [vmem:[#allocation2 + $0x13] sm:$0xff]
      %v2061 = vld [vmem:[#allocation2 + $0x1b] sm:$0xff]
      %v2062 = vld [vmem:[#allocation2 + $0x23] sm:$0xff]
      %v2063 = vld [vmem:[#allocation2 + $0x2b] sm:$0xff]
      %v2064 = vld [vmem:[#allocation2 + $0x33] sm:$0xff]
      %v2065 = vld [vmem:[#allocation2 + $0x3b] sm:$0xff]
      %v2066 = vld [vmem:[#allocation2 + $0x43] sm:$0xff]
      %v2067 = vld [vmem:[#allocation2 + $0x4b] sm:$0xff]
      %v2068 = vld [vmem:[#allocation2 + $0x53] sm:$0xff]
      %v2069 = vld [vmem:[#allocation2 + $0x5b] sm:$0xff]
      %v2070 = vld [vmem:[#allocation2 + $0x63] sm:$0xff]
      %v2071 = vld [vmem:[#allocation2 + $0x6b] sm:$0xff]
      %v2072 = vld [vmem:[#allocation2 + $0x73] sm:$0xff]
      %v2073 = vld [vmem:[#allocation2 + $0x7b] sm:$0xff]
      %v2074 = vld [vmem:[#allocation2 + $0x83] sm:$0xff]
      %v2075 = vld [vmem:[#allocation2 + $0x8b] sm:$0xff]
      %v2076 = vld [vmem:[#allocation2 + $0x93] sm:$0xff]
      %v2077 = vld [vmem:[#allocation2 + $0x9b] sm:$0xff]
      %v2078 = vld [vmem:[#allocation2 + $0xa3] sm:$0xff]
      %v2079 = vld [vmem:[#allocation2 + $0xab] sm:$0xff]
      %v2080 = vld [vmem:[#allocation2 + $0xb3] sm:$0xff]
      %v2081 = vld [vmem:[#allocation2 + $0xbb] sm:$0xff]
      %v2082 = vld [vmem:[#allocation2 + $0xc3] sm:$0xff]
      %v2083 = vld [vmem:[#allocation2 + $0xcb] sm:$0xff]
      %v2084 = vld [vmem:[#allocation2 + $0xd3] sm:$0xff]
      %v2085 = vld [vmem:[#allocation2 + $0xdb] sm:$0xff]
      %v2086 = vld [vmem:[#allocation2 + $0xe3] sm:$0xff]
      %v2087 = vld [vmem:[#allocation2 + $0xeb] sm:$0xff]
      %v2088 = vld [vmem:[#allocation2 + $0xf3] sm:$0xff]
      %v2089 = vld [vmem:[#allocation2 + $0xfb] sm:$0xff]
      %v2090 = vld [vmem:[#allocation2 + $0x103] sm:$0xff]
      %v2091 = vld [vmem:[#allocation2 + $0x10b] sm:$0xff]
      %v2092 = vld [vmem:[#allocation2 + $0x113] sm:$0xff]
      %v2093 = vld [vmem:[#allocation2 + $0x11b] sm:$0xff]
      %v2094 = vld [vmem:[#allocation2 + $0x123] sm:$0xff]
      %v2095 = vld [vmem:[#allocation2 + $0x12b] sm:$0xff]
      %v2096 = vld [vmem:[#allocation2 + $0x133] sm:$0xff]
      %v2097 = vld [vmem:[#allocation2 + $0x13b] sm:$0xff]
      %v2098 = vld [vmem:[#allocation2 + $0x143] sm:$0xff]
      %v2099 = vld [vmem:[#allocation2 + $0x14b] sm:$0xff]
      %v2100 = vld [vmem:[#allocation2 + $0x153] sm:$0xff]
      %v2101 = vpack.c.bf16 %v2061, %v2060
      %v2102 = vpack.c.bf16 %v2063, %v2062
      %v2103 = vpack.c.bf16 %v2065, %v2064
      %v2104 = vpack.c.bf16 %v2067, %v2066
      %v2105 = vpack.c.bf16 %v2069, %v2068
      %v2106 = vpack.c.bf16 %v2071, %v2070
      %v2107 = vpack.c.bf16 %v2073, %v2072
      %v2108 = vpack.c.bf16 %v2075, %v2074
      %v2109 = vpack.c.bf16 %v2077, %v2076
      %v2110 = vpack.c.bf16 %v2079, %v2078
      %v2111 = vpack.c.bf16 %v2081, %v2080
      %v2112 = vpack.c.bf16 %v2083, %v2082
      %v2113 = vpack.c.bf16 %v2085, %v2084
      %v2114 = vpack.c.bf16 %v2087, %v2086
      %v2115 = vpack.c.bf16 %v2089, %v2088
      %v2116 = vpack.c.bf16 %v2091, %v2090
      %v2117 = vpack.c.bf16 %v2093, %v2092
      %v2118 = vpack.c.bf16 %v2095, %v2094
      %v2119 = vpack.c.bf16 %v2097, %v2096
      %v2120 = vpack.c.bf16 %v2099, %v2098
      %v2121 = vpack.c.bf16 %v2100, %v2100
      %s2122 = scalar_lea.vmem %s164, 8
      %v2123 = vld [vmem:[%s2122] sm:$0x3]
      %v2125 = vsel %vm392, %v2101, 0
      %v2128 = vsel %vm392, %v2102, 0
      %v2131 = vsel %vm392, %v2103, 0
      %v2134 = vsel %vm392, %v2104, 0
      %v2137 = vsel %vm392, %v2105, 0
      %v2140 = vsel %vm392, %v2106, 0
      %v2143 = vsel %vm392, %v2107, 0
      %v2146 = vsel %vm392, %v2108, 0
      %v2149 = vsel %vm392, %v2109, 0
      %v2152 = vsel %vm392, %v2110, 0
      %v2155 = vsel %vm392, %v2111, 0
      %v2158 = vsel %vm392, %v2112, 0
      %v2161 = vsel %vm392, %v2113, 0
      %v2164 = vsel %vm392, %v2114, 0
      %v2167 = vsel %vm392, %v2115, 0
      %v2170 = vsel %vm392, %v2116, 0
      %v2173 = vsel %vm392, %v2117, 0
      %v2176 = vsel %vm392, %v2118, 0
      %v2179 = vsel %vm392, %v2119, 0
      %v2182 = vsel %vm392, %v2120, 0
      %v2185 = vsel %vm392, %v2121, 0
      %v2188 = vsel %vm456, %v2123, 0
      %2190 = vmatprep.subr.bf16.mxu0 0
      %2191 = vmatpush1.bf16.msra.mxu0 %v2188
      %2192 = vmatprep.subr.bf16.mxu0 0
      %2193 = vmatpush1.bf16.msra.mxu0 0
      %2194 = vmatprep.subr.bf16.mxu0 0
      %2195 = vmatpush1.bf16.msra.mxu0 0
      %2196 = vmatprep.subr.bf16.mxu0 0
      %2197 = vmatpush1.bf16.msra.mxu0 0
      %2198 = vmatprep.subr.bf16.mxu0 0
      %2199 = vmatpush1.bf16.msra.mxu0 0
      %2200 = vmatprep.subr.bf16.mxu0 0
      %2201 = vmatpush1.bf16.msra.mxu0 0
      %2202 = vmatprep.subr.bf16.mxu0 0
      %2203 = vmatpush1.bf16.msra.mxu0 0
      %2204 = vmatprep.subr.bf16.mxu0 0
      %2205 = vmatpush1.bf16.msra.mxu0 0
      %2206 = vmatprep.subr.bf16.mxu0 0
      %2207 = vmatpush1.bf16.msra.mxu0 0
      %2208 = vmatprep.subr.bf16.mxu0 0
      %2209 = vmatpush1.bf16.msra.mxu0 0
      %2210 = vmatprep.subr.bf16.mxu0 0
      %2211 = vmatpush1.bf16.msra.mxu0 0
      %2212 = vmatprep.subr.bf16.mxu0 0
      %2213 = vmatpush1.bf16.msra.mxu0 0
      %2214 = vmatprep.subr.bf16.mxu0 0
      %2215 = vmatpush1.bf16.msra.mxu0 0
      %2216 = vmatprep.subr.bf16.mxu0 0
      %2217 = vmatpush1.bf16.msra.mxu0 0
      %2218 = vmatprep.subr.bf16.mxu0 0
      %2219 = vmatpush1.bf16.msra.mxu0 0
      %2220 = vmatprep.subr.bf16.mxu0 0
      %2221 = vmatpush1.bf16.msra.mxu0 0
      %2222 = vmatprep.mubr.bf16.mxu0 0
      %2223 = vmatmul.mubr.bf16.gmra.mrb[0].mxu0 %v2125
      %v2224 = vpop.f32.mrb[0].mxu0
      %v2225 = vadd.f32 0.0, %v2224
      %v2226 = vpop.f32.mrb[0].mxu0
      %v2227 = vpop.f32.mrb[0].mxu0
      %v2228 = vadd.f32 0.0, %v2227
      %v2229 = vpop.f32.mrb[0].mxu0
      %2230 = vmatprep.mubr.bf16.mxu0 0
      %2231 = vmatmul.mubr.bf16.gmra.mrb[0].mxu0 %v2128
      %v2232 = vpop.f32.mrb[0].mxu0
      %v2233 = vadd.f32 0.0, %v2232
      %v2234 = vpop.f32.mrb[0].mxu0
      %v2235 = vpop.f32.mrb[0].mxu0
      %v2236 = vadd.f32 0.0, %v2235
      %v2237 = vpop.f32.mrb[0].mxu0
      %2238 = vmatprep.mubr.bf16.mxu0 0
      %2239 = vmatmul.mubr.bf16.gmra.mrb[0].mxu0 %v2131
      %v2240 = vpop.f32.mrb[0].mxu0
      %v2241 = vadd.f32 0.0, %v2240
      %v2242 = vpop.f32.mrb[0].mxu0
      %v2243 = vpop.f32.mrb[0].mxu0
      %v2244 = vadd.f32 0.0, %v2243
      %v2245 = vpop.f32.mrb[0].mxu0
      %2246 = vmatprep.mubr.bf16.mxu0 0
      %2247 = vmatmul.mubr.bf16.gmra.mrb[0].mxu0 %v2134
      %v2248 = vpop.f32.mrb[0].mxu0
      %v2249 = vadd.f32 0.0, %v2248
      %v2250 = vpop.f32.mrb[0].mxu0
      %v2251 = vpop.f32.mrb[0].mxu0
      %v2252 = vadd.f32 0.0, %v2251
      %v2253 = vpop.f32.mrb[0].mxu0
      %2254 = vmatprep.mubr.bf16.mxu0 0
      %2255 = vmatmul.mubr.bf16.gmra.mrb[0].mxu0 %v2137
      %v2256 = vpop.f32.mrb[0].mxu0
      %v2257 = vadd.f32 0.0, %v2256
      %v2258 = vpop.f32.mrb[0].mxu0
      %v2259 = vpop.f32.mrb[0].mxu0
      %v2260 = vadd.f32 0.0, %v2259
      %v2261 = vpop.f32.mrb[0].mxu0
      %2262 = vmatprep.mubr.bf16.mxu0 0
      %2263 = vmatmul.mubr.bf16.gmra.mrb[0].mxu0 %v2140
      %v2264 = vpop.f32.mrb[0].mxu0
      %v2265 = vadd.f32 0.0, %v2264
      %v2266 = vpop.f32.mrb[0].mxu0
      %v2267 = vpop.f32.mrb[0].mxu0
      %v2268 = vadd.f32 0.0, %v2267
      %v2269 = vpop.f32.mrb[0].mxu0
      %2270 = vmatprep.mubr.bf16.mxu0 0
      %2271 = vmatmul.mubr.bf16.gmra.mrb[0].mxu0 %v2143
      %v2272 = vpop.f32.mrb[0].mxu0
      %v2273 = vadd.f32 0.0, %v2272
      %v2274 = vpop.f32.mrb[0].mxu0
      %v2275 = vpop.f32.mrb[0].mxu0
      %v2276 = vadd.f32 0.0, %v2275
      %v2277 = vpop.f32.mrb[0].mxu0
      %2278 = vmatprep.mubr.bf16.mxu0 0
      %2279 = vmatmul.mubr.bf16.gmra.mrb[0].mxu0 %v2146
      %v2280 = vpop.f32.mrb[0].mxu0
      %v2281 = vadd.f32 0.0, %v2280
      %v2282 = vpop.f32.mrb[0].mxu0
      %v2283 = vpop.f32.mrb[0].mxu0
      %v2284 = vadd.f32 0.0, %v2283
      %v2285 = vpop.f32.mrb[0].mxu0
      %2286 = vmatprep.mubr.bf16.mxu0 0
      %2287 = vmatmul.mubr.bf16.gmra.mrb[0].mxu0 %v2149
      %v2288 = vpop.f32.mrb[0].mxu0
      %v2289 = vadd.f32 0.0, %v2288
      %v2290 = vpop.f32.mrb[0].mxu0
      %v2291 = vpop.f32.mrb[0].mxu0
      %v2292 = vadd.f32 0.0, %v2291
      %v2293 = vpop.f32.mrb[0].mxu0
      %2294 = vmatprep.mubr.bf16.mxu0 0
      %2295 = vmatmul.mubr.bf16.gmra.mrb[0].mxu0 %v2152
      %v2296 = vpop.f32.mrb[0].mxu0
      %v2297 = vadd.f32 0.0, %v2296
      %v2298 = vpop.f32.mrb[0].mxu0
      %v2299 = vpop.f32.mrb[0].mxu0
      %v2300 = vadd.f32 0.0, %v2299
      %v2301 = vpop.f32.mrb[0].mxu0
      %2302 = vmatprep.mubr.bf16.mxu0 0
      %2303 = vmatmul.mubr.bf16.gmra.mrb[0].mxu0 %v2155
      %v2304 = vpop.f32.mrb[0].mxu0
      %v2305 = vadd.f32 0.0, %v2304
      %v2306 = vpop.f32.mrb[0].mxu0
      %v2307 = vpop.f32.mrb[0].mxu0
      %v2308 = vadd.f32 0.0, %v2307
      %v2309 = vpop.f32.mrb[0].mxu0
      %2310 = vmatprep.mubr.bf16.mxu0 0
      %2311 = vmatmul.mubr.bf16.gmra.mrb[0].mxu0 %v2158
      %v2312 = vpop.f32.mrb[0].mxu0
      %v2313 = vadd.f32 0.0, %v2312
      %v2314 = vpop.f32.mrb[0].mxu0
      %v2315 = vpop.f32.mrb[0].mxu0
      %v2316 = vadd.f32 0.0, %v2315
      %v2317 = vpop.f32.mrb[0].mxu0
      %2318 = vmatprep.mubr.bf16.mxu0 0
      %2319 = vmatmul.mubr.bf16.gmra.mrb[0].mxu0 %v2161
      %v2320 = vpop.f32.mrb[0].mxu0
      %v2321 = vadd.f32 0.0, %v2320
      %v2322 = vpop.f32.mrb[0].mxu0
      %v2323 = vpop.f32.mrb[0].mxu0
      %v2324 = vadd.f32 0.0, %v2323
      %v2325 = vpop.f32.mrb[0].mxu0
      %2326 = vmatprep.mubr.bf16.mxu0 0
      %2327 = vmatmul.mubr.bf16.gmra.mrb[0].mxu0 %v2164
      %v2328 = vpop.f32.mrb[0].mxu0
      %v2329 = vadd.f32 0.0, %v2328
      %v2330 = vpop.f32.mrb[0].mxu0
      %v2331 = vpop.f32.mrb[0].mxu0
      %v2332 = vadd.f32 0.0, %v2331
      %v2333 = vpop.f32.mrb[0].mxu0
      %2334 = vmatprep.mubr.bf16.mxu0 0
      %2335 = vmatmul.mubr.bf16.gmra.mrb[0].mxu0 %v2167
      %v2336 = vpop.f32.mrb[0].mxu0
      %v2337 = vadd.f32 0.0, %v2336
      %v2338 = vpop.f32.mrb[0].mxu0
      %v2339 = vpop.f32.mrb[0].mxu0
      %v2340 = vadd.f32 0.0, %v2339
      %v2341 = vpop.f32.mrb[0].mxu0
      %2342 = vmatprep.mubr.bf16.mxu0 0
      %2343 = vmatmul.mubr.bf16.gmra.mrb[0].mxu0 %v2170
      %v2344 = vpop.f32.mrb[0].mxu0
      %v2345 = vadd.f32 0.0, %v2344
      %v2346 = vpop.f32.mrb[0].mxu0
      %v2347 = vpop.f32.mrb[0].mxu0
      %v2348 = vadd.f32 0.0, %v2347
      %v2349 = vpop.f32.mrb[0].mxu0
      %2350 = vmatprep.mubr.bf16.mxu0 0
      %2351 = vmatmul.mubr.bf16.gmra.mrb[0].mxu0 %v2173
      %v2352 = vpop.f32.mrb[0].mxu0
      %v2353 = vadd.f32 0.0, %v2352
      %v2354 = vpop.f32.mrb[0].mxu0
      %v2355 = vpop.f32.mrb[0].mxu0
      %v2356 = vadd.f32 0.0, %v2355
      %v2357 = vpop.f32.mrb[0].mxu0
      %2358 = vmatprep.mubr.bf16.mxu0 0
      %2359 = vmatmul.mubr.bf16.gmra.mrb[0].mxu0 %v2176
      %v2360 = vpop.f32.mrb[0].mxu0
      %v2361 = vadd.f32 0.0, %v2360
      %v2362 = vpop.f32.mrb[0].mxu0
      %v2363 = vpop.f32.mrb[0].mxu0
      %v2364 = vadd.f32 0.0, %v2363
      %v2365 = vpop.f32.mrb[0].mxu0
      %2366 = vmatprep.mubr.bf16.mxu0 0
      %2367 = vmatmul.mubr.bf16.gmra.mrb[0].mxu0 %v2179
      %v2368 = vpop.f32.mrb[0].mxu0
      %v2369 = vadd.f32 0.0, %v2368
      %v2370 = vpop.f32.mrb[0].mxu0
      %v2371 = vpop.f32.mrb[0].mxu0
      %v2372 = vadd.f32 0.0, %v2371
      %v2373 = vpop.f32.mrb[0].mxu0
      %2374 = vmatprep.mubr.bf16.mxu0 0
      %2375 = vmatmul.mubr.bf16.gmra.mrb[0].mxu0 %v2182
      %v2376 = vpop.f32.mrb[0].mxu0
      %v2377 = vadd.f32 0.0, %v2376
      %v2378 = vpop.f32.mrb[0].mxu0
      %v2379 = vpop.f32.mrb[0].mxu0
      %v2380 = vadd.f32 0.0, %v2379
      %v2381 = vpop.f32.mrb[0].mxu0
      %2382 = vmatprep.mubr.bf16.mxu0 0
      %2383 = vmatmul.mubr.bf16.gmra.mrb[0].mxu0 %v2185
      %v2384 = vpop.f32.mrb[0].mxu0
      %v2385 = vadd.f32 0.0, %v2384
      %v2386 = vpop.f32.mrb[0].mxu0
      %v2387 = vpop.f32.mrb[0].mxu0
      %v2388 = vpop.f32.mrb[0].mxu0
      %2389 = vdwg.mxu0
      %v2390 = vld [vmem:[#allocation3] sm:$0xff]
      %v2391 = vld [vmem:[#allocation3 + $0x8] sm:$0xff]
      %v2392 = vld [vmem:[#allocation3 + $0x10] sm:$0xff]
      %v2393 = vld [vmem:[#allocation3 + $0x18] sm:$0xff]
      %v2394 = vld [vmem:[#allocation3 + $0x20] sm:$0xff]
      %v2395 = vld [vmem:[#allocation3 + $0x28] sm:$0xff]
      %v2396 = vld [vmem:[#allocation3 + $0x30] sm:$0xff]
      %v2397 = vld [vmem:[#allocation3 + $0x38] sm:$0xff]
      %v2398 = vld [vmem:[#allocation3 + $0x40] sm:$0xff]
      %v2399 = vld [vmem:[#allocation3 + $0x48] sm:$0xff]
      %v2400 = vld [vmem:[#allocation3 + $0x50] sm:$0xff]
      %v2401 = vld [vmem:[#allocation3 + $0x58] sm:$0xff]
      %v2402 = vld [vmem:[#allocation3 + $0x60] sm:$0xff]
      %v2403 = vld [vmem:[#allocation3 + $0x68] sm:$0xff]
      %v2404 = vld [vmem:[#allocation3 + $0x70] sm:$0xff]
      %v2405 = vld [vmem:[#allocation3 + $0x78] sm:$0xff]
      %v2406 = vld [vmem:[#allocation3 + $0x80] sm:$0xff]
      %v2407 = vld [vmem:[#allocation3 + $0x88] sm:$0xff]
      %v2408 = vld [vmem:[#allocation3 + $0x90] sm:$0xff]
      %v2409 = vld [vmem:[#allocation3 + $0x98] sm:$0xff]
      %v2410 = vld [vmem:[#allocation3 + $0xa0] sm:$0xff]
      %v2411 = vld [vmem:[#allocation3 + $0xa8] sm:$0xff]
      %v2412 = vld [vmem:[#allocation3 + $0xb0] sm:$0xff]
      %v2413 = vld [vmem:[#allocation3 + $0xb8] sm:$0xff]
      %v2414 = vld [vmem:[#allocation3 + $0xc0] sm:$0xff]
      %v2415 = vld [vmem:[#allocation3 + $0xc8] sm:$0xff]
      %v2416 = vld [vmem:[#allocation3 + $0xd0] sm:$0xff]
      %v2417 = vld [vmem:[#allocation3 + $0xd8] sm:$0xff]
      %v2418 = vld [vmem:[#allocation3 + $0xe0] sm:$0xff]
      %v2419 = vld [vmem:[#allocation3 + $0xe8] sm:$0xff]
      %v2420 = vld [vmem:[#allocation3 + $0xf0] sm:$0xff]
      %v2421 = vld [vmem:[#allocation3 + $0xf8] sm:$0xff]
      %v2422 = vld [vmem:[#allocation3 + $0x100] sm:$0xff]
      %v2423 = vld [vmem:[#allocation3 + $0x108] sm:$0xff]
      %v2424 = vld [vmem:[#allocation3 + $0x110] sm:$0xff]
      %v2425 = vld [vmem:[#allocation3 + $0x118] sm:$0xff]
      %v2426 = vld [vmem:[#allocation3 + $0x120] sm:$0xff]
      %v2427 = vld [vmem:[#allocation3 + $0x128] sm:$0xff]
      %v2428 = vld [vmem:[#allocation3 + $0x130] sm:$0xff]
      %v2429 = vld [vmem:[#allocation3 + $0x138] sm:$0xff]
      %v2430 = vld [vmem:[#allocation3 + $0x140] sm:$0xff]
      %v2431 = vadd.f32 %v2390, %v2225
      %v2432 = vadd.f32 %v2391, %v2228
      %v2433 = vadd.f32 %v2392, %v2233
      %v2434 = vadd.f32 %v2393, %v2236
      %v2435 = vadd.f32 %v2394, %v2241
      %v2436 = vadd.f32 %v2395, %v2244
      %v2437 = vadd.f32 %v2396, %v2249
      %v2438 = vadd.f32 %v2397, %v2252
      %v2439 = vadd.f32 %v2398, %v2257
      %v2440 = vadd.f32 %v2399, %v2260
      %v2441 = vadd.f32 %v2400, %v2265
      %v2442 = vadd.f32 %v2401, %v2268
      %v2443 = vadd.f32 %v2402, %v2273
      %v2444 = vadd.f32 %v2403, %v2276
      %v2445 = vadd.f32 %v2404, %v2281
      %v2446 = vadd.f32 %v2405, %v2284
      %v2447 = vadd.f32 %v2406, %v2289
      %v2448 = vadd.f32 %v2407, %v2292
      %v2449 = vadd.f32 %v2408, %v2297
      %v2450 = vadd.f32 %v2409, %v2300
      %v2451 = vadd.f32 %v2410, %v2305
      %v2452 = vadd.f32 %v2411, %v2308
      %v2453 = vadd.f32 %v2412, %v2313
      %v2454 = vadd.f32 %v2413, %v2316
      %v2455 = vadd.f32 %v2414, %v2321
      %v2456 = vadd.f32 %v2415, %v2324
      %v2457 = vadd.f32 %v2416, %v2329
      %v2458 = vadd.f32 %v2417, %v2332
      %v2459 = vadd.f32 %v2418, %v2337
      %v2460 = vadd.f32 %v2419, %v2340
      %v2461 = vadd.f32 %v2420, %v2345
      %v2462 = vadd.f32 %v2421, %v2348
      %v2463 = vadd.f32 %v2422, %v2353
      %v2464 = vadd.f32 %v2423, %v2356
      %v2465 = vadd.f32 %v2424, %v2361
      %v2466 = vadd.f32 %v2425, %v2364
      %v2467 = vadd.f32 %v2426, %v2369
      %v2468 = vadd.f32 %v2427, %v2372
      %v2469 = vadd.f32 %v2428, %v2377
      %v2470 = vadd.f32 %v2429, %v2380
      %v2471 = vadd.f32 %v2430, %v2385
      %2472 = vst [vmem:[#allocation3] sm:$0xff] %v2431
      %2473 = vst [vmem:[#allocation3 + $0x8] sm:$0xff] %v2432
      %2474 = vst [vmem:[#allocation3 + $0x10] sm:$0xff] %v2433
      %2475 = vst [vmem:[#allocation3 + $0x18] sm:$0xff] %v2434
      %2476 = vst [vmem:[#allocation3 + $0x20] sm:$0xff] %v2435
      %2477 = vst [vmem:[#allocation3 + $0x28] sm:$0xff] %v2436
      %2478 = vst [vmem:[#allocation3 + $0x30] sm:$0xff] %v2437
      %2479 = vst [vmem:[#allocation3 + $0x38] sm:$0xff] %v2438
      %2480 = vst [vmem:[#allocation3 + $0x40] sm:$0xff] %v2439
      %2481 = vst [vmem:[#allocation3 + $0x48] sm:$0xff] %v2440
      %2482 = vst [vmem:[#allocation3 + $0x50] sm:$0xff] %v2441
      %2483 = vst [vmem:[#allocation3 + $0x58] sm:$0xff] %v2442
      %2484 = vst [vmem:[#allocation3 + $0x60] sm:$0xff] %v2443
      %2485 = vst [vmem:[#allocation3 + $0x68] sm:$0xff] %v2444
      %2486 = vst [vmem:[#allocation3 + $0x70] sm:$0xff] %v2445
      %2487 = vst [vmem:[#allocation3 + $0x78] sm:$0xff] %v2446
      %2488 = vst [vmem:[#allocation3 + $0x80] sm:$0xff] %v2447
      %2489 = vst [vmem:[#allocation3 + $0x88] sm:$0xff] %v2448
      %2490 = vst [vmem:[#allocation3 + $0x90] sm:$0xff] %v2449
      %2491 = vst [vmem:[#allocation3 + $0x98] sm:$0xff] %v2450
      %2492 = vst [vmem:[#allocation3 + $0xa0] sm:$0xff] %v2451
      %2493 = vst [vmem:[#allocation3 + $0xa8] sm:$0xff] %v2452
      %2494 = vst [vmem:[#allocation3 + $0xb0] sm:$0xff] %v2453
      %2495 = vst [vmem:[#allocation3 + $0xb8] sm:$0xff] %v2454
      %2496 = vst [vmem:[#allocation3 + $0xc0] sm:$0xff] %v2455
      %2497 = vst [vmem:[#allocation3 + $0xc8] sm:$0xff] %v2456
      %2498 = vst [vmem:[#allocation3 + $0xd0] sm:$0xff] %v2457
      %2499 = vst [vmem:[#allocation3 + $0xd8] sm:$0xff] %v2458
      %2500 = vst [vmem:[#allocation3 + $0xe0] sm:$0xff] %v2459
      %2501 = vst [vmem:[#allocation3 + $0xe8] sm:$0xff] %v2460
      %2502 = vst [vmem:[#allocation3 + $0xf0] sm:$0xff] %v2461
      %2503 = vst [vmem:[#allocation3 + $0xf8] sm:$0xff] %v2462
      %2504 = vst [vmem:[#allocation3 + $0x100] sm:$0xff] %v2463
      %2505 = vst [vmem:[#allocation3 + $0x108] sm:$0xff] %v2464
      %2506 = vst [vmem:[#allocation3 + $0x110] sm:$0xff] %v2465
      %2507 = vst [vmem:[#allocation3 + $0x118] sm:$0xff] %v2466
      %2508 = vst [vmem:[#allocation3 + $0x120] sm:$0xff] %v2467
      %2509 = vst [vmem:[#allocation3 + $0x128] sm:$0xff] %v2468
      %2510 = vst [vmem:[#allocation3 + $0x130] sm:$0xff] %v2469
      %2511 = vst [vmem:[#allocation3 + $0x138] sm:$0xff] %v2470
      %2512 = vst [vmem:[#allocation3 + $0x140] sm:$0xff] %v2471
      %v2513 = vld [vmem:[#allocation2 + $0x14] sm:$0xff]
      %v2514 = vld [vmem:[#allocation2 + $0x1c] sm:$0xff]
      %v2515 = vld [vmem:[#allocation2 + $0x24] sm:$0xff]
      %v2516 = vld [vmem:[#allocation2 + $0x2c] sm:$0xff]
      %v2517 = vld [vmem:[#allocation2 + $0x34] sm:$0xff]
      %v2518 = vld [vmem:[#allocation2 + $0x3c] sm:$0xff]
      %v2519 = vld [vmem:[#allocation2 + $0x44] sm:$0xff]
      %v2520 = vld [vmem:[#allocation2 + $0x4c] sm:$0xff]
      %v2521 = vld [vmem:[#allocation2 + $0x54] sm:$0xff]
      %v2522 = vld [vmem:[#allocation2 + $0x5c] sm:$0xff]
      %v2523 = vld [vmem:[#allocation2 + $0x64] sm:$0xff]
      %v2524 = vld [vmem:[#allocation2 + $0x6c] sm:$0xff]
      %v2525 = vld [vmem:[#allocation2 + $0x74] sm:$0xff]
      %v2526 = vld [vmem:[#allocation2 + $0x7c] sm:$0xff]
      %v2527 = vld [vmem:[#allocation2 + $0x84] sm:$0xff]
      %v2528 = vld [vmem:[#allocation2 + $0x8c] sm:$0xff]
      %v2529 = vld [vmem:[#allocation2 + $0x94] sm:$0xff]
      %v2530 = vld [vmem:[#allocation2 + $0x9c] sm:$0xff]
      %v2531 = vld [vmem:[#allocation2 + $0xa4] sm:$0xff]
      %v2532 = vld [vmem:[#allocation2 + $0xac] sm:$0xff]
      %v2533 = vld [vmem:[#allocation2 + $0xb4] sm:$0xff]
      %v2534 = vld [vmem:[#allocation2 + $0xbc] sm:$0xff]
      %v2535 = vld [vmem:[#allocation2 + $0xc4] sm:$0xff]
      %v2536 = vld [vmem:[#allocation2 + $0xcc] sm:$0xff]
      %v2537 = vld [vmem:[#allocation2 + $0xd4] sm:$0xff]
      %v2538 = vld [vmem:[#allocation2 + $0xdc] sm:$0xff]
      %v2539 = vld [vmem:[#allocation2 + $0xe4] sm:$0xff]
      %v2540 = vld [vmem:[#allocation2 + $0xec] sm:$0xff]
      %v2541 = vld [vmem:[#allocation2 + $0xf4] sm:$0xff]
      %v2542 = vld [vmem:[#allocation2 + $0xfc] sm:$0xff]
      %v2543 = vld [vmem:[#allocation2 + $0x104] sm:$0xff]
      %v2544 = vld [vmem:[#allocation2 + $0x10c] sm:$0xff]
      %v2545 = vld [vmem:[#allocation2 + $0x114] sm:$0xff]
      %v2546 = vld [vmem:[#allocation2 + $0x11c] sm:$0xff]
      %v2547 = vld [vmem:[#allocation2 + $0x124] sm:$0xff]
      %v2548 = vld [vmem:[#allocation2 + $0x12c] sm:$0xff]
      %v2549 = vld [vmem:[#allocation2 + $0x134] sm:$0xff]
      %v2550 = vld [vmem:[#allocation2 + $0x13c] sm:$0xff]
      %v2551 = vld [vmem:[#allocation2 + $0x144] sm:$0xff]
      %v2552 = vld [vmem:[#allocation2 + $0x14c] sm:$0xff]
      %v2553 = vld [vmem:[#allocation2 + $0x154] sm:$0xff]
      %v2554 = vpack.c.bf16 %v2514, %v2513
      %v2555 = vpack.c.bf16 %v2516, %v2515
      %v2556 = vpack.c.bf16 %v2518, %v2517
      %v2557 = vpack.c.bf16 %v2520, %v2519
      %v2558 = vpack.c.bf16 %v2522, %v2521
      %v2559 = vpack.c.bf16 %v2524, %v2523
      %v2560 = vpack.c.bf16 %v2526, %v2525
      %v2561 = vpack.c.bf16 %v2528, %v2527
      %v2562 = vpack.c.bf16 %v2530, %v2529
      %v2563 = vpack.c.bf16 %v2532, %v2531
      %v2564 = vpack.c.bf16 %v2534, %v2533
      %v2565 = vpack.c.bf16 %v2536, %v2535
      %v2566 = vpack.c.bf16 %v2538, %v2537
      %v2567 = vpack.c.bf16 %v2540, %v2539
      %v2568 = vpack.c.bf16 %v2542, %v2541
      %v2569 = vpack.c.bf16 %v2544, %v2543
      %v2570 = vpack.c.bf16 %v2546, %v2545
      %v2571 = vpack.c.bf16 %v2548, %v2547
      %v2572 = vpack.c.bf16 %v2550, %v2549
      %v2573 = vpack.c.bf16 %v2552, %v2551
      %v2574 = vpack.c.bf16 %v2553, %v2553
      %s2575 = scalar_lea.vmem %s164, 10
      %v2576 = vld [vmem:[%s2575] sm:$0x3]
      %v2578 = vsel %vm392, %v2554, 0
      %v2581 = vsel %vm392, %v2555, 0
      %v2584 = vsel %vm392, %v2556, 0
      %v2587 = vsel %vm392, %v2557, 0
      %v2590 = vsel %vm392, %v2558, 0
      %v2593 = vsel %vm392, %v2559, 0
      %v2596 = vsel %vm392, %v2560, 0
      %v2599 = vsel %vm392, %v2561, 0
      %v2602 = vsel %vm392, %v2562, 0
      %v2605 = vsel %vm392, %v2563, 0
      %v2608 = vsel %vm392, %v2564, 0
      %v2611 = vsel %vm392, %v2565, 0
      %v2614 = vsel %vm392, %v2566, 0
      %v2617 = vsel %vm392, %v2567, 0
      %v2620 = vsel %vm392, %v2568, 0
      %v2623 = vsel %vm392, %v2569, 0
      %v2626 = vsel %vm392, %v2570, 0
      %v2629 = vsel %vm392, %v2571, 0
      %v2632 = vsel %vm392, %v2572, 0
      %v2635 = vsel %vm392, %v2573, 0
      %v2638 = vsel %vm392, %v2574, 0
      %v2641 = vsel %vm456, %v2576, 0
      %2643 = vmatprep.subr.bf16.mxu0 0
      %2644 = vmatpush1.bf16.msra.mxu0 %v2641
      %2645 = vmatprep.subr.bf16.mxu0 0
      %2646 = vmatpush1.bf16.msra.mxu0 0
      %2647 = vmatprep.subr.bf16.mxu0 0
      %2648 = vmatpush1.bf16.msra.mxu0 0
      %2649 = vmatprep.subr.bf16.mxu0 0
      %2650 = vmatpush1.bf16.msra.mxu0 0
      %2651 = vmatprep.subr.bf16.mxu0 0
      %2652 = vmatpush1.bf16.msra.mxu0 0
      %2653 = vmatprep.subr.bf16.mxu0 0
      %2654 = vmatpush1.bf16.msra.mxu0 0
      %2655 = vmatprep.subr.bf16.mxu0 0
      %2656 = vmatpush1.bf16.msra.mxu0 0
      %2657 = vmatprep.subr.bf16.mxu0 0
      %2658 = vmatpush1.bf16.msra.mxu0 0
      %2659 = vmatprep.subr.bf16.mxu0 0
      %2660 = vmatpush1.bf16.msra.mxu0 0
      %2661 = vmatprep.subr.bf16.mxu0 0
      %2662 = vmatpush1.bf16.msra.mxu0 0
      %2663 = vmatprep.subr.bf16.mxu0 0
      %2664 = vmatpush1.bf16.msra.mxu0 0
      %2665 = vmatprep.subr.bf16.mxu0 0
      %2666 = vmatpush1.bf16.msra.mxu0 0
      %2667 = vmatprep.subr.bf16.mxu0 0
      %2668 = vmatpush1.bf16.msra.mxu0 0
      %2669 = vmatprep.subr.bf16.mxu0 0
      %2670 = vmatpush1.bf16.msra.mxu0 0
      %2671 = vmatprep.subr.bf16.mxu0 0
      %2672 = vmatpush1.bf16.msra.mxu0 0
      %2673 = vmatprep.subr.bf16.mxu0 0
      %2674 = vmatpush1.bf16.msra.mxu0 0
      %2675 = vmatprep.mubr.bf16.mxu0 0
      %2676 = vmatmul.mubr.bf16.gmra.mrb[0].mxu0 %v2578
      %v2677 = vpop.f32.mrb[0].mxu0
      %v2678 = vadd.f32 0.0, %v2677
      %v2679 = vpop.f32.mrb[0].mxu0
      %v2680 = vpop.f32.mrb[0].mxu0
      %v2681 = vadd.f32 0.0, %v2680
      %v2682 = vpop.f32.mrb[0].mxu0
      %2683 = vmatprep.mubr.bf16.mxu0 0
      %2684 = vmatmul.mubr.bf16.gmra.mrb[0].mxu0 %v2581
      %v2685 = vpop.f32.mrb[0].mxu0
      %v2686 = vadd.f32 0.0, %v2685
      %v2687 = vpop.f32.mrb[0].mxu0
      %v2688 = vpop.f32.mrb[0].mxu0
      %v2689 = vadd.f32 0.0, %v2688
      %v2690 = vpop.f32.mrb[0].mxu0
      %2691 = vmatprep.mubr.bf16.mxu0 0
      %2692 = vmatmul.mubr.bf16.gmra.mrb[0].mxu0 %v2584
      %v2693 = vpop.f32.mrb[0].mxu0
      %v2694 = vadd.f32 0.0, %v2693
      %v2695 = vpop.f32.mrb[0].mxu0
      %v2696 = vpop.f32.mrb[0].mxu0
      %v2697 = vadd.f32 0.0, %v2696
      %v2698 = vpop.f32.mrb[0].mxu0
      %2699 = vmatprep.mubr.bf16.mxu0 0
      %2700 = vmatmul.mubr.bf16.gmra.mrb[0].mxu0 %v2587
      %v2701 = vpop.f32.mrb[0].mxu0
      %v2702 = vadd.f32 0.0, %v2701
      %v2703 = vpop.f32.mrb[0].mxu0
      %v2704 = vpop.f32.mrb[0].mxu0
      %v2705 = vadd.f32 0.0, %v2704
      %v2706 = vpop.f32.mrb[0].mxu0
      %2707 = vmatprep.mubr.bf16.mxu0 0
      %2708 = vmatmul.mubr.bf16.gmra.mrb[0].mxu0 %v2590
      %v2709 = vpop.f32.mrb[0].mxu0
      %v2710 = vadd.f32 0.0, %v2709
      %v2711 = vpop.f32.mrb[0].mxu0
      %v2712 = vpop.f32.mrb[0].mxu0
      %v2713 = vadd.f32 0.0, %v2712
      %v2714 = vpop.f32.mrb[0].mxu0
      %2715 = vmatprep.mubr.bf16.mxu0 0
      %2716 = vmatmul.mubr.bf16.gmra.mrb[0].mxu0 %v2593
      %v2717 = vpop.f32.mrb[0].mxu0
      %v2718 = vadd.f32 0.0, %v2717
      %v2719 = vpop.f32.mrb[0].mxu0
      %v2720 = vpop.f32.mrb[0].mxu0
      %v2721 = vadd.f32 0.0, %v2720
      %v2722 = vpop.f32.mrb[0].mxu0
      %2723 = vmatprep.mubr.bf16.mxu0 0
      %2724 = vmatmul.mubr.bf16.gmra.mrb[0].mxu0 %v2596
      %v2725 = vpop.f32.mrb[0].mxu0
      %v2726 = vadd.f32 0.0, %v2725
      %v2727 = vpop.f32.mrb[0].mxu0
      %v2728 = vpop.f32.mrb[0].mxu0
      %v2729 = vadd.f32 0.0, %v2728
      %v2730 = vpop.f32.mrb[0].mxu0
      %2731 = vmatprep.mubr.bf16.mxu0 0
      %2732 = vmatmul.mubr.bf16.gmra.mrb[0].mxu0 %v2599
      %v2733 = vpop.f32.mrb[0].mxu0
      %v2734 = vadd.f32 0.0, %v2733
      %v2735 = vpop.f32.mrb[0].mxu0
      %v2736 = vpop.f32.mrb[0].mxu0
      %v2737 = vadd.f32 0.0, %v2736
      %v2738 = vpop.f32.mrb[0].mxu0
      %2739 = vmatprep.mubr.bf16.mxu0 0
      %2740 = vmatmul.mubr.bf16.gmra.mrb[0].mxu0 %v2602
      %v2741 = vpop.f32.mrb[0].mxu0
      %v2742 = vadd.f32 0.0, %v2741
      %v2743 = vpop.f32.mrb[0].mxu0
      %v2744 = vpop.f32.mrb[0].mxu0
      %v2745 = vadd.f32 0.0, %v2744
      %v2746 = vpop.f32.mrb[0].mxu0
      %2747 = vmatprep.mubr.bf16.mxu0 0
      %2748 = vmatmul.mubr.bf16.gmra.mrb[0].mxu0 %v2605
      %v2749 = vpop.f32.mrb[0].mxu0
      %v2750 = vadd.f32 0.0, %v2749
      %v2751 = vpop.f32.mrb[0].mxu0
      %v2752 = vpop.f32.mrb[0].mxu0
      %v2753 = vadd.f32 0.0, %v2752
      %v2754 = vpop.f32.mrb[0].mxu0
      %2755 = vmatprep.mubr.bf16.mxu0 0
      %2756 = vmatmul.mubr.bf16.gmra.mrb[0].mxu0 %v2608
      %v2757 = vpop.f32.mrb[0].mxu0
      %v2758 = vadd.f32 0.0, %v2757
      %v2759 = vpop.f32.mrb[0].mxu0
      %v2760 = vpop.f32.mrb[0].mxu0
      %v2761 = vadd.f32 0.0, %v2760
      %v2762 = vpop.f32.mrb[0].mxu0
      %2763 = vmatprep.mubr.bf16.mxu0 0
      %2764 = vmatmul.mubr.bf16.gmra.mrb[0].mxu0 %v2611
      %v2765 = vpop.f32.mrb[0].mxu0
      %v2766 = vadd.f32 0.0, %v2765
      %v2767 = vpop.f32.mrb[0].mxu0
      %v2768 = vpop.f32.mrb[0].mxu0
      %v2769 = vadd.f32 0.0, %v2768
      %v2770 = vpop.f32.mrb[0].mxu0
      %2771 = vmatprep.mubr.bf16.mxu0 0
      %2772 = vmatmul.mubr.bf16.gmra.mrb[0].mxu0 %v2614
      %v2773 = vpop.f32.mrb[0].mxu0
      %v2774 = vadd.f32 0.0, %v2773
      %v2775 = vpop.f32.mrb[0].mxu0
      %v2776 = vpop.f32.mrb[0].mxu0
      %v2777 = vadd.f32 0.0, %v2776
      %v2778 = vpop.f32.mrb[0].mxu0
      %2779 = vmatprep.mubr.bf16.mxu0 0
      %2780 = vmatmul.mubr.bf16.gmra.mrb[0].mxu0 %v2617
      %v2781 = vpop.f32.mrb[0].mxu0
      %v2782 = vadd.f32 0.0, %v2781
      %v2783 = vpop.f32.mrb[0].mxu0
      %v2784 = vpop.f32.mrb[0].mxu0
      %v2785 = vadd.f32 0.0, %v2784
      %v2786 = vpop.f32.mrb[0].mxu0
      %2787 = vmatprep.mubr.bf16.mxu0 0
      %2788 = vmatmul.mubr.bf16.gmra.mrb[0].mxu0 %v2620
      %v2789 = vpop.f32.mrb[0].mxu0
      %v2790 = vadd.f32 0.0, %v2789
      %v2791 = vpop.f32.mrb[0].mxu0
      %v2792 = vpop.f32.mrb[0].mxu0
      %v2793 = vadd.f32 0.0, %v2792
      %v2794 = vpop.f32.mrb[0].mxu0
      %2795 = vmatprep.mubr.bf16.mxu0 0
      %2796 = vmatmul.mubr.bf16.gmra.mrb[0].mxu0 %v2623
      %v2797 = vpop.f32.mrb[0].mxu0
      %v2798 = vadd.f32 0.0, %v2797
      %v2799 = vpop.f32.mrb[0].mxu0
      %v2800 = vpop.f32.mrb[0].mxu0
      %v2801 = vadd.f32 0.0, %v2800
      %v2802 = vpop.f32.mrb[0].mxu0
      %2803 = vmatprep.mubr.bf16.mxu0 0
      %2804 = vmatmul.mubr.bf16.gmra.mrb[0].mxu0 %v2626
      %v2805 = vpop.f32.mrb[0].mxu0
      %v2806 = vadd.f32 0.0, %v2805
      %v2807 = vpop.f32.mrb[0].mxu0
      %v2808 = vpop.f32.mrb[0].mxu0
      %v2809 = vadd.f32 0.0, %v2808
      %v2810 = vpop.f32.mrb[0].mxu0
      %2811 = vmatprep.mubr.bf16.mxu0 0
      %2812 = vmatmul.mubr.bf16.gmra.mrb[0].mxu0 %v2629
      %v2813 = vpop.f32.mrb[0].mxu0
      %v2814 = vadd.f32 0.0, %v2813
      %v2815 = vpop.f32.mrb[0].mxu0
      %v2816 = vpop.f32.mrb[0].mxu0
      %v2817 = vadd.f32 0.0, %v2816
      %v2818 = vpop.f32.mrb[0].mxu0
      %2819 = vmatprep.mubr.bf16.mxu0 0
      %2820 = vmatmul.mubr.bf16.gmra.mrb[0].mxu0 %v2632
      %v2821 = vpop.f32.mrb[0].mxu0
      %v2822 = vadd.f32 0.0, %v2821
      %v2823 = vpop.f32.mrb[0].mxu0
      %v2824 = vpop.f32.mrb[0].mxu0
      %v2825 = vadd.f32 0.0, %v2824
      %v2826 = vpop.f32.mrb[0].mxu0
      %2827 = vmatprep.mubr.bf16.mxu0 0
      %2828 = vmatmul.mubr.bf16.gmra.mrb[0].mxu0 %v2635
      %v2829 = vpop.f32.mrb[0].mxu0
      %v2830 = vadd.f32 0.0, %v2829
      %v2831 = vpop.f32.mrb[0].mxu0
      %v2832 = vpop.f32.mrb[0].mxu0
      %v2833 = vadd.f32 0.0, %v2832
      %v2834 = vpop.f32.mrb[0].mxu0
      %2835 = vmatprep.mubr.bf16.mxu0 0
      %2836 = vmatmul.mubr.bf16.gmra.mrb[0].mxu0 %v2638
      %v2837 = vpop.f32.mrb[0].mxu0
      %v2838 = vadd.f32 0.0, %v2837
      %v2839 = vpop.f32.mrb[0].mxu0
      %v2840 = vpop.f32.mrb[0].mxu0
      %v2841 = vpop.f32.mrb[0].mxu0
      %2842 = vdwg.mxu0
      %v2843 = vld [vmem:[#allocation3] sm:$0xff]
      %v2844 = vld [vmem:[#allocation3 + $0x8] sm:$0xff]
      %v2845 = vld [vmem:[#allocation3 + $0x10] sm:$0xff]
      %v2846 = vld [vmem:[#allocation3 + $0x18] sm:$0xff]
      %v2847 = vld [vmem:[#allocation3 + $0x20] sm:$0xff]
      %v2848 = vld [vmem:[#allocation3 + $0x28] sm:$0xff]
      %v2849 = vld [vmem:[#allocation3 + $0x30] sm:$0xff]
      %v2850 = vld [vmem:[#allocation3 + $0x38] sm:$0xff]
      %v2851 = vld [vmem:[#allocation3 + $0x40] sm:$0xff]
      %v2852 = vld [vmem:[#allocation3 + $0x48] sm:$0xff]
      %v2853 = vld [vmem:[#allocation3 + $0x50] sm:$0xff]
      %v2854 = vld [vmem:[#allocation3 + $0x58] sm:$0xff]
      %v2855 = vld [vmem:[#allocation3 + $0x60] sm:$0xff]
      %v2856 = vld [vmem:[#allocation3 + $0x68] sm:$0xff]
      %v2857 = vld [vmem:[#allocation3 + $0x70] sm:$0xff]
      %v2858 = vld [vmem:[#allocation3 + $0x78] sm:$0xff]
      %v2859 = vld [vmem:[#allocation3 + $0x80] sm:$0xff]
      %v2860 = vld [vmem:[#allocation3 + $0x88] sm:$0xff]
      %v2861 = vld [vmem:[#allocation3 + $0x90] sm:$0xff]
      %v2862 = vld [vmem:[#allocation3 + $0x98] sm:$0xff]
      %v2863 = vld [vmem:[#allocation3 + $0xa0] sm:$0xff]
      %v2864 = vld [vmem:[#allocation3 + $0xa8] sm:$0xff]
      %v2865 = vld [vmem:[#allocation3 + $0xb0] sm:$0xff]
      %v2866 = vld [vmem:[#allocation3 + $0xb8] sm:$0xff]
      %v2867 = vld [vmem:[#allocation3 + $0xc0] sm:$0xff]
      %v2868 = vld [vmem:[#allocation3 + $0xc8] sm:$0xff]
      %v2869 = vld [vmem:[#allocation3 + $0xd0] sm:$0xff]
      %v2870 = vld [vmem:[#allocation3 + $0xd8] sm:$0xff]
      %v2871 = vld [vmem:[#allocation3 + $0xe0] sm:$0xff]
      %v2872 = vld [vmem:[#allocation3 + $0xe8] sm:$0xff]
      %v2873 = vld [vmem:[#allocation3 + $0xf0] sm:$0xff]
      %v2874 = vld [vmem:[#allocation3 + $0xf8] sm:$0xff]
      %v2875 = vld [vmem:[#allocation3 + $0x100] sm:$0xff]
      %v2876 = vld [vmem:[#allocation3 + $0x108] sm:$0xff]
      %v2877 = vld [vmem:[#allocation3 + $0x110] sm:$0xff]
      %v2878 = vld [vmem:[#allocation3 + $0x118] sm:$0xff]
      %v2879 = vld [vmem:[#allocation3 + $0x120] sm:$0xff]
      %v2880 = vld [vmem:[#allocation3 + $0x128] sm:$0xff]
      %v2881 = vld [vmem:[#allocation3 + $0x130] sm:$0xff]
      %v2882 = vld [vmem:[#allocation3 + $0x138] sm:$0xff]
      %v2883 = vld [vmem:[#allocation3 + $0x140] sm:$0xff]
      %v2884 = vadd.f32 %v2843, %v2678
      %v2885 = vadd.f32 %v2844, %v2681
      %v2886 = vadd.f32 %v2845, %v2686
      %v2887 = vadd.f32 %v2846, %v2689
      %v2888 = vadd.f32 %v2847, %v2694
      %v2889 = vadd.f32 %v2848, %v2697
      %v2890 = vadd.f32 %v2849, %v2702
      %v2891 = vadd.f32 %v2850, %v2705
      %v2892 = vadd.f32 %v2851, %v2710
      %v2893 = vadd.f32 %v2852, %v2713
      %v2894 = vadd.f32 %v2853, %v2718
      %v2895 = vadd.f32 %v2854, %v2721
      %v2896 = vadd.f32 %v2855, %v2726
      %v2897 = vadd.f32 %v2856, %v2729
      %v2898 = vadd.f32 %v2857, %v2734
      %v2899 = vadd.f32 %v2858, %v2737
      %v2900 = vadd.f32 %v2859, %v2742
      %v2901 = vadd.f32 %v2860, %v2745
      %v2902 = vadd.f32 %v2861, %v2750
      %v2903 = vadd.f32 %v2862, %v2753
      %v2904 = vadd.f32 %v2863, %v2758
      %v2905 = vadd.f32 %v2864, %v2761
      %v2906 = vadd.f32 %v2865, %v2766
      %v2907 = vadd.f32 %v2866, %v2769
      %v2908 = vadd.f32 %v2867, %v2774
      %v2909 = vadd.f32 %v2868, %v2777
      %v2910 = vadd.f32 %v2869, %v2782
      %v2911 = vadd.f32 %v2870, %v2785
      %v2912 = vadd.f32 %v2871, %v2790
      %v2913 = vadd.f32 %v2872, %v2793
      %v2914 = vadd.f32 %v2873, %v2798
      %v2915 = vadd.f32 %v2874, %v2801
      %v2916 = vadd.f32 %v2875, %v2806
      %v2917 = vadd.f32 %v2876, %v2809
      %v2918 = vadd.f32 %v2877, %v2814
      %v2919 = vadd.f32 %v2878, %v2817
      %v2920 = vadd.f32 %v2879, %v2822
      %v2921 = vadd.f32 %v2880, %v2825
      %v2922 = vadd.f32 %v2881, %v2830
      %v2923 = vadd.f32 %v2882, %v2833
      %v2924 = vadd.f32 %v2883, %v2838
      %2925 = vst [vmem:[#allocation3] sm:$0xff] %v2884
      %2926 = vst [vmem:[#allocation3 + $0x8] sm:$0xff] %v2885
      %2927 = vst [vmem:[#allocation3 + $0x10] sm:$0xff] %v2886
      %2928 = vst [vmem:[#allocation3 + $0x18] sm:$0xff] %v2887
      %2929 = vst [vmem:[#allocation3 + $0x20] sm:$0xff] %v2888
      %2930 = vst [vmem:[#allocation3 + $0x28] sm:$0xff] %v2889
      %2931 = vst [vmem:[#allocation3 + $0x30] sm:$0xff] %v2890
      %2932 = vst [vmem:[#allocation3 + $0x38] sm:$0xff] %v2891
      %2933 = vst [vmem:[#allocation3 + $0x40] sm:$0xff] %v2892
      %2934 = vst [vmem:[#allocation3 + $0x48] sm:$0xff] %v2893
      %2935 = vst [vmem:[#allocation3 + $0x50] sm:$0xff] %v2894
      %2936 = vst [vmem:[#allocation3 + $0x58] sm:$0xff] %v2895
      %2937 = vst [vmem:[#allocation3 + $0x60] sm:$0xff] %v2896
      %2938 = vst [vmem:[#allocation3 + $0x68] sm:$0xff] %v2897
      %2939 = vst [vmem:[#allocation3 + $0x70] sm:$0xff] %v2898
      %2940 = vst [vmem:[#allocation3 + $0x78] sm:$0xff] %v2899
      %2941 = vst [vmem:[#allocation3 + $0x80] sm:$0xff] %v2900
      %2942 = vst [vmem:[#allocation3 + $0x88] sm:$0xff] %v2901
      %2943 = vst [vmem:[#allocation3 + $0x90] sm:$0xff] %v2902
      %2944 = vst [vmem:[#allocation3 + $0x98] sm:$0xff] %v2903
      %2945 = vst [vmem:[#allocation3 + $0xa0] sm:$0xff] %v2904
      %2946 = vst [vmem:[#allocation3 + $0xa8] sm:$0xff] %v2905
      %2947 = vst [vmem:[#allocation3 + $0xb0] sm:$0xff] %v2906
      %2948 = vst [vmem:[#allocation3 + $0xb8] sm:$0xff] %v2907
      %2949 = vst [vmem:[#allocation3 + $0xc0] sm:$0xff] %v2908
      %2950 = vst [vmem:[#allocation3 + $0xc8] sm:$0xff] %v2909
      %2951 = vst [vmem:[#allocation3 + $0xd0] sm:$0xff] %v2910
      %2952 = vst [vmem:[#allocation3 + $0xd8] sm:$0xff] %v2911
      %2953 = vst [vmem:[#allocation3 + $0xe0] sm:$0xff] %v2912
      %2954 = vst [vmem:[#allocation3 + $0xe8] sm:$0xff] %v2913
      %2955 = vst [vmem:[#allocation3 + $0xf0] sm:$0xff] %v2914
      %2956 = vst [vmem:[#allocation3 + $0xf8] sm:$0xff] %v2915
      %2957 = vst [vmem:[#allocation3 + $0x100] sm:$0xff] %v2916
      %2958 = vst [vmem:[#allocation3 + $0x108] sm:$0xff] %v2917
      %2959 = vst [vmem:[#allocation3 + $0x110] sm:$0xff] %v2918
      %2960 = vst [vmem:[#allocation3 + $0x118] sm:$0xff] %v2919
      %2961 = vst [vmem:[#allocation3 + $0x120] sm:$0xff] %v2920
      %2962 = vst [vmem:[#allocation3 + $0x128] sm:$0xff] %v2921
      %2963 = vst [vmem:[#allocation3 + $0x130] sm:$0xff] %v2922
      %2964 = vst [vmem:[#allocation3 + $0x138] sm:$0xff] %v2923
      %2965 = vst [vmem:[#allocation3 + $0x140] sm:$0xff] %v2924
      %v2966 = vld [vmem:[#allocation2 + $0x24] sm:$0xff]
      %v2967 = vld [vmem:[#allocation2 + $0x2c] sm:$0xff]
      %v2968 = vld [vmem:[#allocation2 + $0x34] sm:$0xff]
      %v2969 = vld [vmem:[#allocation2 + $0x3c] sm:$0xff]
      %v2970 = vld [vmem:[#allocation2 + $0x44] sm:$0xff]
      %v2971 = vld [vmem:[#allocation2 + $0x4c] sm:$0xff]
      %v2972 = vld [vmem:[#allocation2 + $0x54] sm:$0xff]
      %v2973 = vld [vmem:[#allocation2 + $0x5c] sm:$0xff]
      %v2974 = vld [vmem:[#allocation2 + $0x64] sm:$0xff]
      %v2975 = vld [vmem:[#allocation2 + $0x6c] sm:$0xff]
      %v2976 = vld [vmem:[#allocation2 + $0x74] sm:$0xff]
      %v2977 = vld [vmem:[#allocation2 + $0x7c] sm:$0xff]
      %v2978 = vld [vmem:[#allocation2 + $0x84] sm:$0xff]
      %v2979 = vld [vmem:[#allocation2 + $0x8c] sm:$0xff]
      %v2980 = vld [vmem:[#allocation2 + $0x94] sm:$0xff]
      %v2981 = vld [vmem:[#allocation2 + $0x9c] sm:$0xff]
      %v2982 = vld [vmem:[#allocation2 + $0xa4] sm:$0xff]
      %v2983 = vld [vmem:[#allocation2 + $0xac] sm:$0xff]
      %v2984 = vld [vmem:[#allocation2 + $0xb4] sm:$0xff]
      %v2985 = vld [vmem:[#allocation2 + $0xbc] sm:$0xff]
      %v2986 = vld [vmem:[#allocation2 + $0xc4] sm:$0xff]
      %v2987 = vld [vmem:[#allocation2 + $0xcc] sm:$0xff]
      %v2988 = vld [vmem:[#allocation2 + $0xd4] sm:$0xff]
      %v2989 = vld [vmem:[#allocation2 + $0xdc] sm:$0xff]
      %v2990 = vld [vmem:[#allocation2 + $0xe4] sm:$0xff]
      %v2991 = vld [vmem:[#allocation2 + $0xec] sm:$0xff]
      %v2992 = vld [vmem:[#allocation2 + $0xf4] sm:$0xff]
      %v2993 = vld [vmem:[#allocation2 + $0xfc] sm:$0xff]
      %v2994 = vld [vmem:[#allocation2 + $0x104] sm:$0xff]
      %v2995 = vld [vmem:[#allocation2 + $0x10c] sm:$0xff]
      %v2996 = vld [vmem:[#allocation2 + $0x114] sm:$0xff]
      %v2997 = vld [vmem:[#allocation2 + $0x11c] sm:$0xff]
      %v2998 = vld [vmem:[#allocation2 + $0x124] sm:$0xff]
      %v2999 = vld [vmem:[#allocation2 + $0x12c] sm:$0xff]
      %v3000 = vld [vmem:[#allocation2 + $0x134] sm:$0xff]
      %v3001 = vld [vmem:[#allocation2 + $0x13c] sm:$0xff]
      %v3002 = vld [vmem:[#allocation2 + $0x144] sm:$0xff]
      %v3003 = vld [vmem:[#allocation2 + $0x14c] sm:$0xff]
      %v3004 = vld [vmem:[#allocation2 + $0x154] sm:$0xff]
      %v3005 = vld [vmem:[#allocation2 + $0x15c] sm:$0xff]
      %v3006 = vld [vmem:[#allocation2 + $0x164] sm:$0xff]
      %v3007 = vpack.c.bf16 %v2967, %v2966
      %v3008 = vpack.c.bf16 %v2969, %v2968
      %v3009 = vpack.c.bf16 %v2971, %v2970
      %v3010 = vpack.c.bf16 %v2973, %v2972
      %v3011 = vpack.c.bf16 %v2975, %v2974
      %v3012 = vpack.c.bf16 %v2977, %v2976
      %v3013 = vpack.c.bf16 %v2979, %v2978
      %v3014 = vpack.c.bf16 %v2981, %v2980
      %v3015 = vpack.c.bf16 %v2983, %v2982
      %v3016 = vpack.c.bf16 %v2985, %v2984
      %v3017 = vpack.c.bf16 %v2987, %v2986
      %v3018 = vpack.c.bf16 %v2989, %v2988
      %v3019 = vpack.c.bf16 %v2991, %v2990
      %v3020 = vpack.c.bf16 %v2993, %v2992
      %v3021 = vpack.c.bf16 %v2995, %v2994
      %v3022 = vpack.c.bf16 %v2997, %v2996
      %v3023 = vpack.c.bf16 %v2999, %v2998
      %v3024 = vpack.c.bf16 %v3001, %v3000
      %v3025 = vpack.c.bf16 %v3003, %v3002
      %v3026 = vpack.c.bf16 %v3005, %v3004
      %v3027 = vpack.c.bf16 %v3006, %v3006
      %s3028 = scalar_lea.vmem %s164, 12
      %v3029 = vld [vmem:[%s3028] sm:$0x3]
      %v3031 = vsel %vm392, %v3007, 0
      %v3034 = vsel %vm392, %v3008, 0
      %v3037 = vsel %vm392, %v3009, 0
      %v3040 = vsel %vm392, %v3010, 0
      %v3043 = vsel %vm392, %v3011, 0
      %v3046 = vsel %vm392, %v3012, 0
      %v3049 = vsel %vm392, %v3013, 0
      %v3052 = vsel %vm392, %v3014, 0
      %v3055 = vsel %vm392, %v3015, 0
      %v3058 = vsel %vm392, %v3016, 0
      %v3061 = vsel %vm392, %v3017, 0
      %v3064 = vsel %vm392, %v3018, 0
      %v3067 = vsel %vm392, %v3019, 0
      %v3070 = vsel %vm392, %v3020, 0
      %v3073 = vsel %vm392, %v3021, 0
      %v3076 = vsel %vm392, %v3022, 0
      %v3079 = vsel %vm392, %v3023, 0
      %v3082 = vsel %vm392, %v3024, 0
      %v3085 = vsel %vm392, %v3025, 0
      %v3088 = vsel %vm392, %v3026, 0
      %v3091 = vsel %vm392, %v3027, 0
      %v3094 = vsel %vm456, %v3029, 0
      %3096 = vmatprep.subr.bf16.mxu0 0
      %3097 = vmatpush1.bf16.msra.mxu0 %v3094
      %3098 = vmatprep.subr.bf16.mxu0 0
      %3099 = vmatpush1.bf16.msra.mxu0 0
      %3100 = vmatprep.subr.bf16.mxu0 0
      %3101 = vmatpush1.bf16.msra.mxu0 0
      %3102 = vmatprep.subr.bf16.mxu0 0
      %3103 = vmatpush1.bf16.msra.mxu0 0
      %3104 = vmatprep.subr.bf16.mxu0 0
      %3105 = vmatpush1.bf16.msra.mxu0 0
      %3106 = vmatprep.subr.bf16.mxu0 0
      %3107 = vmatpush1.bf16.msra.mxu0 0
      %3108 = vmatprep.subr.bf16.mxu0 0
      %3109 = vmatpush1.bf16.msra.mxu0 0
      %3110 = vmatprep.subr.bf16.mxu0 0
      %3111 = vmatpush1.bf16.msra.mxu0 0
      %3112 = vmatprep.subr.bf16.mxu0 0
      %3113 = vmatpush1.bf16.msra.mxu0 0
      %3114 = vmatprep.subr.bf16.mxu0 0
      %3115 = vmatpush1.bf16.msra.mxu0 0
      %3116 = vmatprep.subr.bf16.mxu0 0
      %3117 = vmatpush1.bf16.msra.mxu0 0
      %3118 = vmatprep.subr.bf16.mxu0 0
      %3119 = vmatpush1.bf16.msra.mxu0 0
      %3120 = vmatprep.subr.bf16.mxu0 0
      %3121 = vmatpush1.bf16.msra.mxu0 0
      %3122 = vmatprep.subr.bf16.mxu0 0
      %3123 = vmatpush1.bf16.msra.mxu0 0
      %3124 = vmatprep.subr.bf16.mxu0 0
      %3125 = vmatpush1.bf16.msra.mxu0 0
      %3126 = vmatprep.subr.bf16.mxu0 0
      %3127 = vmatpush1.bf16.msra.mxu0 0
      %3128 = vmatprep.mubr.bf16.mxu0 0
      %3129 = vmatmul.mubr.bf16.gmra.mrb[0].mxu0 %v3031
      %v3130 = vpop.f32.mrb[0].mxu0
      %v3131 = vadd.f32 0.0, %v3130
      %v3132 = vpop.f32.mrb[0].mxu0
      %v3133 = vpop.f32.mrb[0].mxu0
      %v3134 = vadd.f32 0.0, %v3133
      %v3135 = vpop.f32.mrb[0].mxu0
      %3136 = vmatprep.mubr.bf16.mxu0 0
      %3137 = vmatmul.mubr.bf16.gmra.mrb[0].mxu0 %v3034
      %v3138 = vpop.f32.mrb[0].mxu0
      %v3139 = vadd.f32 0.0, %v3138
      %v3140 = vpop.f32.mrb[0].mxu0
      %v3141 = vpop.f32.mrb[0].mxu0
      %v3142 = vadd.f32 0.0, %v3141
      %v3143 = vpop.f32.mrb[0].mxu0
      %3144 = vmatprep.mubr.bf16.mxu0 0
      %3145 = vmatmul.mubr.bf16.gmra.mrb[0].mxu0 %v3037
      %v3146 = vpop.f32.mrb[0].mxu0
      %v3147 = vadd.f32 0.0, %v3146
      %v3148 = vpop.f32.mrb[0].mxu0
      %v3149 = vpop.f32.mrb[0].mxu0
      %v3150 = vadd.f32 0.0, %v3149
      %v3151 = vpop.f32.mrb[0].mxu0
      %3152 = vmatprep.mubr.bf16.mxu0 0
      %3153 = vmatmul.mubr.bf16.gmra.mrb[0].mxu0 %v3040
      %v3154 = vpop.f32.mrb[0].mxu0
      %v3155 = vadd.f32 0.0, %v3154
      %v3156 = vpop.f32.mrb[0].mxu0
      %v3157 = vpop.f32.mrb[0].mxu0
      %v3158 = vadd.f32 0.0, %v3157
      %v3159 = vpop.f32.mrb[0].mxu0
      %3160 = vmatprep.mubr.bf16.mxu0 0
      %3161 = vmatmul.mubr.bf16.gmra.mrb[0].mxu0 %v3043
      %v3162 = vpop.f32.mrb[0].mxu0
      %v3163 = vadd.f32 0.0, %v3162
      %v3164 = vpop.f32.mrb[0].mxu0
      %v3165 = vpop.f32.mrb[0].mxu0
      %v3166 = vadd.f32 0.0, %v3165
      %v3167 = vpop.f32.mrb[0].mxu0
      %3168 = vmatprep.mubr.bf16.mxu0 0
      %3169 = vmatmul.mubr.bf16.gmra.mrb[0].mxu0 %v3046
      %v3170 = vpop.f32.mrb[0].mxu0
      %v3171 = vadd.f32 0.0, %v3170
      %v3172 = vpop.f32.mrb[0].mxu0
      %v3173 = vpop.f32.mrb[0].mxu0
      %v3174 = vadd.f32 0.0, %v3173
      %v3175 = vpop.f32.mrb[0].mxu0
      %3176 = vmatprep.mubr.bf16.mxu0 0
      %3177 = vmatmul.mubr.bf16.gmra.mrb[0].mxu0 %v3049
      %v3178 = vpop.f32.mrb[0].mxu0
      %v3179 = vadd.f32 0.0, %v3178
      %v3180 = vpop.f32.mrb[0].mxu0
      %v3181 = vpop.f32.mrb[0].mxu0
      %v3182 = vadd.f32 0.0, %v3181
      %v3183 = vpop.f32.mrb[0].mxu0
      %3184 = vmatprep.mubr.bf16.mxu0 0
      %3185 = vmatmul.mubr.bf16.gmra.mrb[0].mxu0 %v3052
      %v3186 = vpop.f32.mrb[0].mxu0
      %v3187 = vadd.f32 0.0, %v3186
      %v3188 = vpop.f32.mrb[0].mxu0
      %v3189 = vpop.f32.mrb[0].mxu0
      %v3190 = vadd.f32 0.0, %v3189
      %v3191 = vpop.f32.mrb[0].mxu0
      %3192 = vmatprep.mubr.bf16.mxu0 0
      %3193 = vmatmul.mubr.bf16.gmra.mrb[0].mxu0 %v3055
      %v3194 = vpop.f32.mrb[0].mxu0
      %v3195 = vadd.f32 0.0, %v3194
      %v3196 = vpop.f32.mrb[0].mxu0
      %v3197 = vpop.f32.mrb[0].mxu0
      %v3198 = vadd.f32 0.0, %v3197
      %v3199 = vpop.f32.mrb[0].mxu0
      %3200 = vmatprep.mubr.bf16.mxu0 0
      %3201 = vmatmul.mubr.bf16.gmra.mrb[0].mxu0 %v3058
      %v3202 = vpop.f32.mrb[0].mxu0
      %v3203 = vadd.f32 0.0, %v3202
      %v3204 = vpop.f32.mrb[0].mxu0
      %v3205 = vpop.f32.mrb[0].mxu0
      %v3206 = vadd.f32 0.0, %v3205
      %v3207 = vpop.f32.mrb[0].mxu0
      %3208 = vmatprep.mubr.bf16.mxu0 0
      %3209 = vmatmul.mubr.bf16.gmra.mrb[0].mxu0 %v3061
      %v3210 = vpop.f32.mrb[0].mxu0
      %v3211 = vadd.f32 0.0, %v3210
      %v3212 = vpop.f32.mrb[0].mxu0
      %v3213 = vpop.f32.mrb[0].mxu0
      %v3214 = vadd.f32 0.0, %v3213
      %v3215 = vpop.f32.mrb[0].mxu0
      %3216 = vmatprep.mubr.bf16.mxu0 0
      %3217 = vmatmul.mubr.bf16.gmra.mrb[0].mxu0 %v3064
      %v3218 = vpop.f32.mrb[0].mxu0
      %v3219 = vadd.f32 0.0, %v3218
      %v3220 = vpop.f32.mrb[0].mxu0
      %v3221 = vpop.f32.mrb[0].mxu0
      %v3222 = vadd.f32 0.0, %v3221
      %v3223 = vpop.f32.mrb[0].mxu0
      %3224 = vmatprep.mubr.bf16.mxu0 0
      %3225 = vmatmul.mubr.bf16.gmra.mrb[0].mxu0 %v3067
      %v3226 = vpop.f32.mrb[0].mxu0
      %v3227 = vadd.f32 0.0, %v3226
      %v3228 = vpop.f32.mrb[0].mxu0
      %v3229 = vpop.f32.mrb[0].mxu0
      %v3230 = vadd.f32 0.0, %v3229
      %v3231 = vpop.f32.mrb[0].mxu0
      %3232 = vmatprep.mubr.bf16.mxu0 0
      %3233 = vmatmul.mubr.bf16.gmra.mrb[0].mxu0 %v3070
      %v3234 = vpop.f32.mrb[0].mxu0
      %v3235 = vadd.f32 0.0, %v3234
      %v3236 = vpop.f32.mrb[0].mxu0
      %v3237 = vpop.f32.mrb[0].mxu0
      %v3238 = vadd.f32 0.0, %v3237
      %v3239 = vpop.f32.mrb[0].mxu0
      %3240 = vmatprep.mubr.bf16.mxu0 0
      %3241 = vmatmul.mubr.bf16.gmra.mrb[0].mxu0 %v3073
      %v3242 = vpop.f32.mrb[0].mxu0
      %v3243 = vadd.f32 0.0, %v3242
      %v3244 = vpop.f32.mrb[0].mxu0
      %v3245 = vpop.f32.mrb[0].mxu0
      %v3246 = vadd.f32 0.0, %v3245
      %v3247 = vpop.f32.mrb[0].mxu0
      %3248 = vmatprep.mubr.bf16.mxu0 0
      %3249 = vmatmul.mubr.bf16.gmra.mrb[0].mxu0 %v3076
      %v3250 = vpop.f32.mrb[0].mxu0
      %v3251 = vadd.f32 0.0, %v3250
      %v3252 = vpop.f32.mrb[0].mxu0
      %v3253 = vpop.f32.mrb[0].mxu0
      %v3254 = vadd.f32 0.0, %v3253
      %v3255 = vpop.f32.mrb[0].mxu0
      %3256 = vmatprep.mubr.bf16.mxu0 0
      %3257 = vmatmul.mubr.bf16.gmra.mrb[0].mxu0 %v3079
      %v3258 = vpop.f32.mrb[0].mxu0
      %v3259 = vadd.f32 0.0, %v3258
      %v3260 = vpop.f32.mrb[0].mxu0
      %v3261 = vpop.f32.mrb[0].mxu0
      %v3262 = vadd.f32 0.0, %v3261
      %v3263 = vpop.f32.mrb[0].mxu0
      %3264 = vmatprep.mubr.bf16.mxu0 0
      %3265 = vmatmul.mubr.bf16.gmra.mrb[0].mxu0 %v3082
      %v3266 = vpop.f32.mrb[0].mxu0
      %v3267 = vadd.f32 0.0, %v3266
      %v3268 = vpop.f32.mrb[0].mxu0
      %v3269 = vpop.f32.mrb[0].mxu0
      %v3270 = vadd.f32 0.0, %v3269
      %v3271 = vpop.f32.mrb[0].mxu0
      %3272 = vmatprep.mubr.bf16.mxu0 0
      %3273 = vmatmul.mubr.bf16.gmra.mrb[0].mxu0 %v3085
      %v3274 = vpop.f32.mrb[0].mxu0
      %v3275 = vadd.f32 0.0, %v3274
      %v3276 = vpop.f32.mrb[0].mxu0
      %v3277 = vpop.f32.mrb[0].mxu0
      %v3278 = vadd.f32 0.0, %v3277
      %v3279 = vpop.f32.mrb[0].mxu0
      %3280 = vmatprep.mubr.bf16.mxu0 0
      %3281 = vmatmul.mubr.bf16.gmra.mrb[0].mxu0 %v3088
      %v3282 = vpop.f32.mrb[0].mxu0
      %v3283 = vadd.f32 0.0, %v3282
      %v3284 = vpop.f32.mrb[0].mxu0
      %v3285 = vpop.f32.mrb[0].mxu0
      %v3286 = vadd.f32 0.0, %v3285
      %v3287 = vpop.f32.mrb[0].mxu0
      %3288 = vmatprep.mubr.bf16.mxu0 0
      %3289 = vmatmul.mubr.bf16.gmra.mrb[0].mxu0 %v3091
      %v3290 = vpop.f32.mrb[0].mxu0
      %v3291 = vadd.f32 0.0, %v3290
      %v3292 = vpop.f32.mrb[0].mxu0
      %v3293 = vpop.f32.mrb[0].mxu0
      %v3294 = vpop.f32.mrb[0].mxu0
      %3295 = vdwg.mxu0
      %v3296 = vld [vmem:[#allocation3] sm:$0xff]
      %v3297 = vld [vmem:[#allocation3 + $0x8] sm:$0xff]
      %v3298 = vld [vmem:[#allocation3 + $0x10] sm:$0xff]
      %v3299 = vld [vmem:[#allocation3 + $0x18] sm:$0xff]
      %v3300 = vld [vmem:[#allocation3 + $0x20] sm:$0xff]
      %v3301 = vld [vmem:[#allocation3 + $0x28] sm:$0xff]
      %v3302 = vld [vmem:[#allocation3 + $0x30] sm:$0xff]
      %v3303 = vld [vmem:[#allocation3 + $0x38] sm:$0xff]
      %v3304 = vld [vmem:[#allocation3 + $0x40] sm:$0xff]
      %v3305 = vld [vmem:[#allocation3 + $0x48] sm:$0xff]
      %v3306 = vld [vmem:[#allocation3 + $0x50] sm:$0xff]
      %v3307 = vld [vmem:[#allocation3 + $0x58] sm:$0xff]
      %v3308 = vld [vmem:[#allocation3 + $0x60] sm:$0xff]
      %v3309 = vld [vmem:[#allocation3 + $0x68] sm:$0xff]
      %v3310 = vld [vmem:[#allocation3 + $0x70] sm:$0xff]
      %v3311 = vld [vmem:[#allocation3 + $0x78] sm:$0xff]
      %v3312 = vld [vmem:[#allocation3 + $0x80] sm:$0xff]
      %v3313 = vld [vmem:[#allocation3 + $0x88] sm:$0xff]
      %v3314 = vld [vmem:[#allocation3 + $0x90] sm:$0xff]
      %v3315 = vld [vmem:[#allocation3 + $0x98] sm:$0xff]
      %v3316 = vld [vmem:[#allocation3 + $0xa0] sm:$0xff]
      %v3317 = vld [vmem:[#allocation3 + $0xa8] sm:$0xff]
      %v3318 = vld [vmem:[#allocation3 + $0xb0] sm:$0xff]
      %v3319 = vld [vmem:[#allocation3 + $0xb8] sm:$0xff]
      %v3320 = vld [vmem:[#allocation3 + $0xc0] sm:$0xff]
      %v3321 = vld [vmem:[#allocation3 + $0xc8] sm:$0xff]
      %v3322 = vld [vmem:[#allocation3 + $0xd0] sm:$0xff]
      %v3323 = vld [vmem:[#allocation3 + $0xd8] sm:$0xff]
      %v3324 = vld [vmem:[#allocation3 + $0xe0] sm:$0xff]
      %v3325 = vld [vmem:[#allocation3 + $0xe8] sm:$0xff]
      %v3326 = vld [vmem:[#allocation3 + $0xf0] sm:$0xff]
      %v3327 = vld [vmem:[#allocation3 + $0xf8] sm:$0xff]
      %v3328 = vld [vmem:[#allocation3 + $0x100] sm:$0xff]
      %v3329 = vld [vmem:[#allocation3 + $0x108] sm:$0xff]
      %v3330 = vld [vmem:[#allocation3 + $0x110] sm:$0xff]
      %v3331 = vld [vmem:[#allocation3 + $0x118] sm:$0xff]
      %v3332 = vld [vmem:[#allocation3 + $0x120] sm:$0xff]
      %v3333 = vld [vmem:[#allocation3 + $0x128] sm:$0xff]
      %v3334 = vld [vmem:[#allocation3 + $0x130] sm:$0xff]
      %v3335 = vld [vmem:[#allocation3 + $0x138] sm:$0xff]
      %v3336 = vld [vmem:[#allocation3 + $0x140] sm:$0xff]
      %v3337 = vadd.f32 %v3296, %v3131
      %v3338 = vadd.f32 %v3297, %v3134
      %v3339 = vadd.f32 %v3298, %v3139
      %v3340 = vadd.f32 %v3299, %v3142
      %v3341 = vadd.f32 %v3300, %v3147
      %v3342 = vadd.f32 %v3301, %v3150
      %v3343 = vadd.f32 %v3302, %v3155
      %v3344 = vadd.f32 %v3303, %v3158
      %v3345 = vadd.f32 %v3304, %v3163
      %v3346 = vadd.f32 %v3305, %v3166
      %v3347 = vadd.f32 %v3306, %v3171
      %v3348 = vadd.f32 %v3307, %v3174
      %v3349 = vadd.f32 %v3308, %v3179
      %v3350 = vadd.f32 %v3309, %v3182
      %v3351 = vadd.f32 %v3310, %v3187
      %v3352 = vadd.f32 %v3311, %v3190
      %v3353 = vadd.f32 %v3312, %v3195
      %v3354 = vadd.f32 %v3313, %v3198
      %v3355 = vadd.f32 %v3314, %v3203
      %v3356 = vadd.f32 %v3315, %v3206
      %v3357 = vadd.f32 %v3316, %v3211
      %v3358 = vadd.f32 %v3317, %v3214
      %v3359 = vadd.f32 %v3318, %v3219
      %v3360 = vadd.f32 %v3319, %v3222
      %v3361 = vadd.f32 %v3320, %v3227
      %v3362 = vadd.f32 %v3321, %v3230
      %v3363 = vadd.f32 %v3322, %v3235
      %v3364 = vadd.f32 %v3323, %v3238
      %v3365 = vadd.f32 %v3324, %v3243
      %v3366 = vadd.f32 %v3325, %v3246
      %v3367 = vadd.f32 %v3326, %v3251
      %v3368 = vadd.f32 %v3327, %v3254
      %v3369 = vadd.f32 %v3328, %v3259
      %v3370 = vadd.f32 %v3329, %v3262
      %v3371 = vadd.f32 %v3330, %v3267
      %v3372 = vadd.f32 %v3331, %v3270
      %v3373 = vadd.f32 %v3332, %v3275
      %v3374 = vadd.f32 %v3333, %v3278
      %v3375 = vadd.f32 %v3334, %v3283
      %v3376 = vadd.f32 %v3335, %v3286
      %v3377 = vadd.f32 %v3336, %v3291
      %3378 = vst [vmem:[#allocation3] sm:$0xff] %v3337
      %3379 = vst [vmem:[#allocation3 + $0x8] sm:$0xff] %v3338
      %3380 = vst [vmem:[#allocation3 + $0x10] sm:$0xff] %v3339
      %3381 = vst [vmem:[#allocation3 + $0x18] sm:$0xff] %v3340
      %3382 = vst [vmem:[#allocation3 + $0x20] sm:$0xff] %v3341
      %3383 = vst [vmem:[#allocation3 + $0x28] sm:$0xff] %v3342
      %3384 = vst [vmem:[#allocation3 + $0x30] sm:$0xff] %v3343
      %3385 = vst [vmem:[#allocation3 + $0x38] sm:$0xff] %v3344
      %3386 = vst [vmem:[#allocation3 + $0x40] sm:$0xff] %v3345
      %3387 = vst [vmem:[#allocation3 + $0x48] sm:$0xff] %v3346
      %3388 = vst [vmem:[#allocation3 + $0x50] sm:$0xff] %v3347
      %3389 = vst [vmem:[#allocation3 + $0x58] sm:$0xff] %v3348
      %3390 = vst [vmem:[#allocation3 + $0x60] sm:$0xff] %v3349
      %3391 = vst [vmem:[#allocation3 + $0x68] sm:$0xff] %v3350
      %3392 = vst [vmem:[#allocation3 + $0x70] sm:$0xff] %v3351
      %3393 = vst [vmem:[#allocation3 + $0x78] sm:$0xff] %v3352
      %3394 = vst [vmem:[#allocation3 + $0x80] sm:$0xff] %v3353
      %3395 = vst [vmem:[#allocation3 + $0x88] sm:$0xff] %v3354
      %3396 = vst [vmem:[#allocation3 + $0x90] sm:$0xff] %v3355
      %3397 = vst [vmem:[#allocation3 + $0x98] sm:$0xff] %v3356
      %3398 = vst [vmem:[#allocation3 + $0xa0] sm:$0xff] %v3357
      %3399 = vst [vmem:[#allocation3 + $0xa8] sm:$0xff] %v3358
      %3400 = vst [vmem:[#allocation3 + $0xb0] sm:$0xff] %v3359
      %3401 = vst [vmem:[#allocation3 + $0xb8] sm:$0xff] %v3360
      %3402 = vst [vmem:[#allocation3 + $0xc0] sm:$0xff] %v3361
      %3403 = vst [vmem:[#allocation3 + $0xc8] sm:$0xff] %v3362
      %3404 = vst [vmem:[#allocation3 + $0xd0] sm:$0xff] %v3363
      %3405 = vst [vmem:[#allocation3 + $0xd8] sm:$0xff] %v3364
      %3406 = vst [vmem:[#allocation3 + $0xe0] sm:$0xff] %v3365
      %3407 = vst [vmem:[#allocation3 + $0xe8] sm:$0xff] %v3366
      %3408 = vst [vmem:[#allocation3 + $0xf0] sm:$0xff] %v3367
      %3409 = vst [vmem:[#allocation3 + $0xf8] sm:$0xff] %v3368
      %3410 = vst [vmem:[#allocation3 + $0x100] sm:$0xff] %v3369
      %3411 = vst [vmem:[#allocation3 + $0x108] sm:$0xff] %v3370
      %3412 = vst [vmem:[#allocation3 + $0x110] sm:$0xff] %v3371
      %3413 = vst [vmem:[#allocation3 + $0x118] sm:$0xff] %v3372
      %3414 = vst [vmem:[#allocation3 + $0x120] sm:$0xff] %v3373
      %3415 = vst [vmem:[#allocation3 + $0x128] sm:$0xff] %v3374
      %3416 = vst [vmem:[#allocation3 + $0x130] sm:$0xff] %v3375
      %3417 = vst [vmem:[#allocation3 + $0x138] sm:$0xff] %v3376
      %3418 = vst [vmem:[#allocation3 + $0x140] sm:$0xff] %v3377
      %v3419 = vld [vmem:[#allocation2 + $0x25] sm:$0xff]
      %v3420 = vld [vmem:[#allocation2 + $0x2d] sm:$0xff]
      %v3421 = vld [vmem:[#allocation2 + $0x35] sm:$0xff]
      %v3422 = vld [vmem:[#allocation2 + $0x3d] sm:$0xff]
      %v3423 = vld [vmem:[#allocation2 + $0x45] sm:$0xff]
      %v3424 = vld [vmem:[#allocation2 + $0x4d] sm:$0xff]
      %v3425 = vld [vmem:[#allocation2 + $0x55] sm:$0xff]
      %v3426 = vld [vmem:[#allocation2 + $0x5d] sm:$0xff]
      %v3427 = vld [vmem:[#allocation2 + $0x65] sm:$0xff]
      %v3428 = vld [vmem:[#allocation2 + $0x6d] sm:$0xff]
      %v3429 = vld [vmem:[#allocation2 + $0x75] sm:$0xff]
      %v3430 = vld [vmem:[#allocation2 + $0x7d] sm:$0xff]
      %v3431 = vld [vmem:[#allocation2 + $0x85] sm:$0xff]
      %v3432 = vld [vmem:[#allocation2 + $0x8d] sm:$0xff]
      %v3433 = vld [vmem:[#allocation2 + $0x95] sm:$0xff]
      %v3434 = vld [vmem:[#allocation2 + $0x9d] sm:$0xff]
      %v3435 = vld [vmem:[#allocation2 + $0xa5] sm:$0xff]
      %v3436 = vld [vmem:[#allocation2 + $0xad] sm:$0xff]
      %v3437 = vld [vmem:[#allocation2 + $0xb5] sm:$0xff]
      %v3438 = vld [vmem:[#allocation2 + $0xbd] sm:$0xff]
      %v3439 = vld [vmem:[#allocation2 + $0xc5] sm:$0xff]
      %v3440 = vld [vmem:[#allocation2 + $0xcd] sm:$0xff]
      %v3441 = vld [vmem:[#allocation2 + $0xd5] sm:$0xff]
      %v3442 = vld [vmem:[#allocation2 + $0xdd] sm:$0xff]
      %v3443 = vld [vmem:[#allocation2 + $0xe5] sm:$0xff]
      %v3444 = vld [vmem:[#allocation2 + $0xed] sm:$0xff]
      %v3445 = vld [vmem:[#allocation2 + $0xf5] sm:$0xff]
      %v3446 = vld [vmem:[#allocation2 + $0xfd] sm:$0xff]
      %v3447 = vld [vmem:[#allocation2 + $0x105] sm:$0xff]
      %v3448 = vld [vmem:[#allocation2 + $0x10d] sm:$0xff]
      %v3449 = vld [vmem:[#allocation2 + $0x115] sm:$0xff]
      %v3450 = vld [vmem:[#allocation2 + $0x11d] sm:$0xff]
      %v3451 = vld [vmem:[#allocation2 + $0x125] sm:$0xff]
      %v3452 = vld [vmem:[#allocation2 + $0x12d] sm:$0xff]
      %v3453 = vld [vmem:[#allocation2 + $0x135] sm:$0xff]
      %v3454 = vld [vmem:[#allocation2 + $0x13d] sm:$0xff]
      %v3455 = vld [vmem:[#allocation2 + $0x145] sm:$0xff]
      %v3456 = vld [vmem:[#allocation2 + $0x14d] sm:$0xff]
      %v3457 = vld [vmem:[#allocation2 + $0x155] sm:$0xff]
      %v3458 = vld [vmem:[#allocation2 + $0x15d] sm:$0xff]
      %v3459 = vld [vmem:[#allocation2 + $0x165] sm:$0xff]
      %v3460 = vpack.c.bf16 %v3420, %v3419
      %v3461 = vpack.c.bf16 %v3422, %v3421
      %v3462 = vpack.c.bf16 %v3424, %v3423
      %v3463 = vpack.c.bf16 %v3426, %v3425
      %v3464 = vpack.c.bf16 %v3428, %v3427
      %v3465 = vpack.c.bf16 %v3430, %v3429
      %v3466 = vpack.c.bf16 %v3432, %v3431
      %v3467 = vpack.c.bf16 %v3434, %v3433
      %v3468 = vpack.c.bf16 %v3436, %v3435
      %v3469 = vpack.c.bf16 %v3438, %v3437
      %v3470 = vpack.c.bf16 %v3440, %v3439
      %v3471 = vpack.c.bf16 %v3442, %v3441
      %v3472 = vpack.c.bf16 %v3444, %v3443
      %v3473 = vpack.c.bf16 %v3446, %v3445
      %v3474 = vpack.c.bf16 %v3448, %v3447
      %v3475 = vpack.c.bf16 %v3450, %v3449
      %v3476 = vpack.c.bf16 %v3452, %v3451
      %v3477 = vpack.c.bf16 %v3454, %v3453
      %v3478 = vpack.c.bf16 %v3456, %v3455
      %v3479 = vpack.c.bf16 %v3458, %v3457
      %v3480 = vpack.c.bf16 %v3459, %v3459
      %s3481 = scalar_lea.vmem %s164, 14
      %v3482 = vld [vmem:[%s3481] sm:$0x3]
      %v3484 = vsel %vm392, %v3460, 0
      %v3487 = vsel %vm392, %v3461, 0
      %v3490 = vsel %vm392, %v3462, 0
      %v3493 = vsel %vm392, %v3463, 0
      %v3496 = vsel %vm392, %v3464, 0
      %v3499 = vsel %vm392, %v3465, 0
      %v3502 = vsel %vm392, %v3466, 0
      %v3505 = vsel %vm392, %v3467, 0
      %v3508 = vsel %vm392, %v3468, 0
      %v3511 = vsel %vm392, %v3469, 0
      %v3514 = vsel %vm392, %v3470, 0
      %v3517 = vsel %vm392, %v3471, 0
      %v3520 = vsel %vm392, %v3472, 0
      %v3523 = vsel %vm392, %v3473, 0
      %v3526 = vsel %vm392, %v3474, 0
      %v3529 = vsel %vm392, %v3475, 0
      %v3532 = vsel %vm392, %v3476, 0
      %v3535 = vsel %vm392, %v3477, 0
      %v3538 = vsel %vm392, %v3478, 0
      %v3541 = vsel %vm392, %v3479, 0
      %v3544 = vsel %vm392, %v3480, 0
      %v3547 = vsel %vm456, %v3482, 0
      %3549 = vmatprep.subr.bf16.mxu0 0
      %3550 = vmatpush1.bf16.msra.mxu0 %v3547
      %3551 = vmatprep.subr.bf16.mxu0 0
      %3552 = vmatpush1.bf16.msra.mxu0 0
      %3553 = vmatprep.subr.bf16.mxu0 0
      %3554 = vmatpush1.bf16.msra.mxu0 0
      %3555 = vmatprep.subr.bf16.mxu0 0
      %3556 = vmatpush1.bf16.msra.mxu0 0
      %3557 = vmatprep.subr.bf16.mxu0 0
      %3558 = vmatpush1.bf16.msra.mxu0 0
      %3559 = vmatprep.subr.bf16.mxu0 0
      %3560 = vmatpush1.bf16.msra.mxu0 0
      %3561 = vmatprep.subr.bf16.mxu0 0
      %3562 = vmatpush1.bf16.msra.mxu0 0
      %3563 = vmatprep.subr.bf16.mxu0 0
      %3564 = vmatpush1.bf16.msra.mxu0 0
      %3565 = vmatprep.subr.bf16.mxu0 0
      %3566 = vmatpush1.bf16.msra.mxu0 0
      %3567 = vmatprep.subr.bf16.mxu0 0
      %3568 = vmatpush1.bf16.msra.mxu0 0
      %3569 = vmatprep.subr.bf16.mxu0 0
      %3570 = vmatpush1.bf16.msra.mxu0 0
      %3571 = vmatprep.subr.bf16.mxu0 0
      %3572 = vmatpush1.bf16.msra.mxu0 0
      %3573 = vmatprep.subr.bf16.mxu0 0
      %3574 = vmatpush1.bf16.msra.mxu0 0
      %3575 = vmatprep.subr.bf16.mxu0 0
      %3576 = vmatpush1.bf16.msra.mxu0 0
      %3577 = vmatprep.subr.bf16.mxu0 0
      %3578 = vmatpush1.bf16.msra.mxu0 0
      %3579 = vmatprep.subr.bf16.mxu0 0
      %3580 = vmatpush1.bf16.msra.mxu0 0
      %3581 = vmatprep.mubr.bf16.mxu0 0
      %3582 = vmatmul.mubr.bf16.gmra.mrb[0].mxu0 %v3484
      %v3583 = vpop.f32.mrb[0].mxu0
      %v3584 = vadd.f32 0.0, %v3583
      %v3585 = vpop.f32.mrb[0].mxu0
      %v3586 = vpop.f32.mrb[0].mxu0
      %v3587 = vadd.f32 0.0, %v3586
      %v3588 = vpop.f32.mrb[0].mxu0
      %3589 = vmatprep.mubr.bf16.mxu0 0
      %3590 = vmatmul.mubr.bf16.gmra.mrb[0].mxu0 %v3487
      %v3591 = vpop.f32.mrb[0].mxu0
      %v3592 = vadd.f32 0.0, %v3591
      %v3593 = vpop.f32.mrb[0].mxu0
      %v3594 = vpop.f32.mrb[0].mxu0
      %v3595 = vadd.f32 0.0, %v3594
      %v3596 = vpop.f32.mrb[0].mxu0
      %3597 = vmatprep.mubr.bf16.mxu0 0
      %3598 = vmatmul.mubr.bf16.gmra.mrb[0].mxu0 %v3490
      %v3599 = vpop.f32.mrb[0].mxu0
      %v3600 = vadd.f32 0.0, %v3599
      %v3601 = vpop.f32.mrb[0].mxu0
      %v3602 = vpop.f32.mrb[0].mxu0
      %v3603 = vadd.f32 0.0, %v3602
      %v3604 = vpop.f32.mrb[0].mxu0
      %3605 = vmatprep.mubr.bf16.mxu0 0
      %3606 = vmatmul.mubr.bf16.gmra.mrb[0].mxu0 %v3493
      %v3607 = vpop.f32.mrb[0].mxu0
      %v3608 = vadd.f32 0.0, %v3607
      %v3609 = vpop.f32.mrb[0].mxu0
      %v3610 = vpop.f32.mrb[0].mxu0
      %v3611 = vadd.f32 0.0, %v3610
      %v3612 = vpop.f32.mrb[0].mxu0
      %3613 = vmatprep.mubr.bf16.mxu0 0
      %3614 = vmatmul.mubr.bf16.gmra.mrb[0].mxu0 %v3496
      %v3615 = vpop.f32.mrb[0].mxu0
      %v3616 = vadd.f32 0.0, %v3615
      %v3617 = vpop.f32.mrb[0].mxu0
      %v3618 = vpop.f32.mrb[0].mxu0
      %v3619 = vadd.f32 0.0, %v3618
      %v3620 = vpop.f32.mrb[0].mxu0
      %3621 = vmatprep.mubr.bf16.mxu0 0
      %3622 = vmatmul.mubr.bf16.gmra.mrb[0].mxu0 %v3499
      %v3623 = vpop.f32.mrb[0].mxu0
      %v3624 = vadd.f32 0.0, %v3623
      %v3625 = vpop.f32.mrb[0].mxu0
      %v3626 = vpop.f32.mrb[0].mxu0
      %v3627 = vadd.f32 0.0, %v3626
      %v3628 = vpop.f32.mrb[0].mxu0
      %3629 = vmatprep.mubr.bf16.mxu0 0
      %3630 = vmatmul.mubr.bf16.gmra.mrb[0].mxu0 %v3502
      %v3631 = vpop.f32.mrb[0].mxu0
      %v3632 = vadd.f32 0.0, %v3631
      %v3633 = vpop.f32.mrb[0].mxu0
      %v3634 = vpop.f32.mrb[0].mxu0
      %v3635 = vadd.f32 0.0, %v3634
      %v3636 = vpop.f32.mrb[0].mxu0
      %3637 = vmatprep.mubr.bf16.mxu0 0
      %3638 = vmatmul.mubr.bf16.gmra.mrb[0].mxu0 %v3505
      %v3639 = vpop.f32.mrb[0].mxu0
      %v3640 = vadd.f32 0.0, %v3639
      %v3641 = vpop.f32.mrb[0].mxu0
      %v3642 = vpop.f32.mrb[0].mxu0
      %v3643 = vadd.f32 0.0, %v3642
      %v3644 = vpop.f32.mrb[0].mxu0
      %3645 = vmatprep.mubr.bf16.mxu0 0
      %3646 = vmatmul.mubr.bf16.gmra.mrb[0].mxu0 %v3508
      %v3647 = vpop.f32.mrb[0].mxu0
      %v3648 = vadd.f32 0.0, %v3647
      %v3649 = vpop.f32.mrb[0].mxu0
      %v3650 = vpop.f32.mrb[0].mxu0
      %v3651 = vadd.f32 0.0, %v3650
      %v3652 = vpop.f32.mrb[0].mxu0
      %3653 = vmatprep.mubr.bf16.mxu0 0
      %3654 = vmatmul.mubr.bf16.gmra.mrb[0].mxu0 %v3511
      %v3655 = vpop.f32.mrb[0].mxu0
      %v3656 = vadd.f32 0.0, %v3655
      %v3657 = vpop.f32.mrb[0].mxu0
      %v3658 = vpop.f32.mrb[0].mxu0
      %v3659 = vadd.f32 0.0, %v3658
      %v3660 = vpop.f32.mrb[0].mxu0
      %3661 = vmatprep.mubr.bf16.mxu0 0
      %3662 = vmatmul.mubr.bf16.gmra.mrb[0].mxu0 %v3514
      %v3663 = vpop.f32.mrb[0].mxu0
      %v3664 = vadd.f32 0.0, %v3663
      %v3665 = vpop.f32.mrb[0].mxu0
      %v3666 = vpop.f32.mrb[0].mxu0
      %v3667 = vadd.f32 0.0, %v3666
      %v3668 = vpop.f32.mrb[0].mxu0
      %3669 = vmatprep.mubr.bf16.mxu0 0
      %3670 = vmatmul.mubr.bf16.gmra.mrb[0].mxu0 %v3517
      %v3671 = vpop.f32.mrb[0].mxu0
      %v3672 = vadd.f32 0.0, %v3671
      %v3673 = vpop.f32.mrb[0].mxu0
      %v3674 = vpop.f32.mrb[0].mxu0
      %v3675 = vadd.f32 0.0, %v3674
      %v3676 = vpop.f32.mrb[0].mxu0
      %3677 = vmatprep.mubr.bf16.mxu0 0
      %3678 = vmatmul.mubr.bf16.gmra.mrb[0].mxu0 %v3520
      %v3679 = vpop.f32.mrb[0].mxu0
      %v3680 = vadd.f32 0.0, %v3679
      %v3681 = vpop.f32.mrb[0].mxu0
      %v3682 = vpop.f32.mrb[0].mxu0
      %v3683 = vadd.f32 0.0, %v3682
      %v3684 = vpop.f32.mrb[0].mxu0
      %3685 = vmatprep.mubr.bf16.mxu0 0
      %3686 = vmatmul.mubr.bf16.gmra.mrb[0].mxu0 %v3523
      %v3687 = vpop.f32.mrb[0].mxu0
      %v3688 = vadd.f32 0.0, %v3687
      %v3689 = vpop.f32.mrb[0].mxu0
      %v3690 = vpop.f32.mrb[0].mxu0
      %v3691 = vadd.f32 0.0, %v3690
      %v3692 = vpop.f32.mrb[0].mxu0
      %3693 = vmatprep.mubr.bf16.mxu0 0
      %3694 = vmatmul.mubr.bf16.gmra.mrb[0].mxu0 %v3526
      %v3695 = vpop.f32.mrb[0].mxu0
      %v3696 = vadd.f32 0.0, %v3695
      %v3697 = vpop.f32.mrb[0].mxu0
      %v3698 = vpop.f32.mrb[0].mxu0
      %v3699 = vadd.f32 0.0, %v3698
      %v3700 = vpop.f32.mrb[0].mxu0
      %3701 = vmatprep.mubr.bf16.mxu0 0
      %3702 = vmatmul.mubr.bf16.gmra.mrb[0].mxu0 %v3529
      %v3703 = vpop.f32.mrb[0].mxu0
      %v3704 = vadd.f32 0.0, %v3703
      %v3705 = vpop.f32.mrb[0].mxu0
      %v3706 = vpop.f32.mrb[0].mxu0
      %v3707 = vadd.f32 0.0, %v3706
      %v3708 = vpop.f32.mrb[0].mxu0
      %3709 = vmatprep.mubr.bf16.mxu0 0
      %3710 = vmatmul.mubr.bf16.gmra.mrb[0].mxu0 %v3532
      %v3711 = vpop.f32.mrb[0].mxu0
      %v3712 = vadd.f32 0.0, %v3711
      %v3713 = vpop.f32.mrb[0].mxu0
      %v3714 = vpop.f32.mrb[0].mxu0
      %v3715 = vadd.f32 0.0, %v3714
      %v3716 = vpop.f32.mrb[0].mxu0
      %3717 = vmatprep.mubr.bf16.mxu0 0
      %3718 = vmatmul.mubr.bf16.gmra.mrb[0].mxu0 %v3535
      %v3719 = vpop.f32.mrb[0].mxu0
      %v3720 = vadd.f32 0.0, %v3719
      %v3721 = vpop.f32.mrb[0].mxu0
      %v3722 = vpop.f32.mrb[0].mxu0
      %v3723 = vadd.f32 0.0, %v3722
      %v3724 = vpop.f32.mrb[0].mxu0
      %3725 = vmatprep.mubr.bf16.mxu0 0
      %3726 = vmatmul.mubr.bf16.gmra.mrb[0].mxu0 %v3538
      %v3727 = vpop.f32.mrb[0].mxu0
      %v3728 = vadd.f32 0.0, %v3727
      %v3729 = vpop.f32.mrb[0].mxu0
      %v3730 = vpop.f32.mrb[0].mxu0
      %v3731 = vadd.f32 0.0, %v3730
      %v3732 = vpop.f32.mrb[0].mxu0
      %3733 = vmatprep.mubr.bf16.mxu0 0
      %3734 = vmatmul.mubr.bf16.gmra.mrb[0].mxu0 %v3541
      %v3735 = vpop.f32.mrb[0].mxu0
      %v3736 = vadd.f32 0.0, %v3735
      %v3737 = vpop.f32.mrb[0].mxu0
      %v3738 = vpop.f32.mrb[0].mxu0
      %v3739 = vadd.f32 0.0, %v3738
      %v3740 = vpop.f32.mrb[0].mxu0
      %3741 = vmatprep.mubr.bf16.mxu0 0
      %3742 = vmatmul.mubr.bf16.gmra.mrb[0].mxu0 %v3544
      %v3743 = vpop.f32.mrb[0].mxu0
      %v3744 = vadd.f32 0.0, %v3743
      %v3745 = vpop.f32.mrb[0].mxu0
      %v3746 = vpop.f32.mrb[0].mxu0
      %v3747 = vpop.f32.mrb[0].mxu0
      %3748 = vdwg.mxu0
      %v3749 = vld [vmem:[#allocation3] sm:$0xff]
      %v3750 = vld [vmem:[#allocation3 + $0x8] sm:$0xff]
      %v3751 = vld [vmem:[#allocation3 + $0x10] sm:$0xff]
      %v3752 = vld [vmem:[#allocation3 + $0x18] sm:$0xff]
      %v3753 = vld [vmem:[#allocation3 + $0x20] sm:$0xff]
      %v3754 = vld [vmem:[#allocation3 + $0x28] sm:$0xff]
      %v3755 = vld [vmem:[#allocation3 + $0x30] sm:$0xff]
      %v3756 = vld [vmem:[#allocation3 + $0x38] sm:$0xff]
      %v3757 = vld [vmem:[#allocation3 + $0x40] sm:$0xff]
      %v3758 = vld [vmem:[#allocation3 + $0x48] sm:$0xff]
      %v3759 = vld [vmem:[#allocation3 + $0x50] sm:$0xff]
      %v3760 = vld [vmem:[#allocation3 + $0x58] sm:$0xff]
      %v3761 = vld [vmem:[#allocation3 + $0x60] sm:$0xff]
      %v3762 = vld [vmem:[#allocation3 + $0x68] sm:$0xff]
      %v3763 = vld [vmem:[#allocation3 + $0x70] sm:$0xff]
      %v3764 = vld [vmem:[#allocation3 + $0x78] sm:$0xff]
      %v3765 = vld [vmem:[#allocation3 + $0x80] sm:$0xff]
      %v3766 = vld [vmem:[#allocation3 + $0x88] sm:$0xff]
      %v3767 = vld [vmem:[#allocation3 + $0x90] sm:$0xff]
      %v3768 = vld [vmem:[#allocation3 + $0x98] sm:$0xff]
      %v3769 = vld [vmem:[#allocation3 + $0xa0] sm:$0xff]
      %v3770 = vld [vmem:[#allocation3 + $0xa8] sm:$0xff]
      %v3771 = vld [vmem:[#allocation3 + $0xb0] sm:$0xff]
      %v3772 = vld [vmem:[#allocation3 + $0xb8] sm:$0xff]
      %v3773 = vld [vmem:[#allocation3 + $0xc0] sm:$0xff]
      %v3774 = vld [vmem:[#allocation3 + $0xc8] sm:$0xff]
      %v3775 = vld [vmem:[#allocation3 + $0xd0] sm:$0xff]
      %v3776 = vld [vmem:[#allocation3 + $0xd8] sm:$0xff]
      %v3777 = vld [vmem:[#allocation3 + $0xe0] sm:$0xff]
      %v3778 = vld [vmem:[#allocation3 + $0xe8] sm:$0xff]
      %v3779 = vld [vmem:[#allocation3 + $0xf0] sm:$0xff]
      %v3780 = vld [vmem:[#allocation3 + $0xf8] sm:$0xff]
      %v3781 = vld [vmem:[#allocation3 + $0x100] sm:$0xff]
      %v3782 = vld [vmem:[#allocation3 + $0x108] sm:$0xff]
      %v3783 = vld [vmem:[#allocation3 + $0x110] sm:$0xff]
      %v3784 = vld [vmem:[#allocation3 + $0x118] sm:$0xff]
      %v3785 = vld [vmem:[#allocation3 + $0x120] sm:$0xff]
      %v3786 = vld [vmem:[#allocation3 + $0x128] sm:$0xff]
      %v3787 = vld [vmem:[#allocation3 + $0x130] sm:$0xff]
      %v3788 = vld [vmem:[#allocation3 + $0x138] sm:$0xff]
      %v3789 = vld [vmem:[#allocation3 + $0x140] sm:$0xff]
      %v3790 = vadd.f32 %v3749, %v3584
      %v3791 = vadd.f32 %v3750, %v3587
      %v3792 = vadd.f32 %v3751, %v3592
      %v3793 = vadd.f32 %v3752, %v3595
      %v3794 = vadd.f32 %v3753, %v3600
      %v3795 = vadd.f32 %v3754, %v3603
      %v3796 = vadd.f32 %v3755, %v3608
      %v3797 = vadd.f32 %v3756, %v3611
      %v3798 = vadd.f32 %v3757, %v3616
      %v3799 = vadd.f32 %v3758, %v3619
      %v3800 = vadd.f32 %v3759, %v3624
      %v3801 = vadd.f32 %v3760, %v3627
      %v3802 = vadd.f32 %v3761, %v3632
      %v3803 = vadd.f32 %v3762, %v3635
      %v3804 = vadd.f32 %v3763, %v3640
      %v3805 = vadd.f32 %v3764, %v3643
      %v3806 = vadd.f32 %v3765, %v3648
      %v3807 = vadd.f32 %v3766, %v3651
      %v3808 = vadd.f32 %v3767, %v3656
      %v3809 = vadd.f32 %v3768, %v3659
      %v3810 = vadd.f32 %v3769, %v3664
      %v3811 = vadd.f32 %v3770, %v3667
      %v3812 = vadd.f32 %v3771, %v3672
      %v3813 = vadd.f32 %v3772, %v3675
      %v3814 = vadd.f32 %v3773, %v3680
      %v3815 = vadd.f32 %v3774, %v3683
      %v3816 = vadd.f32 %v3775, %v3688
      %v3817 = vadd.f32 %v3776, %v3691
      %v3818 = vadd.f32 %v3777, %v3696
      %v3819 = vadd.f32 %v3778, %v3699
      %v3820 = vadd.f32 %v3779, %v3704
      %v3821 = vadd.f32 %v3780, %v3707
      %v3822 = vadd.f32 %v3781, %v3712
      %v3823 = vadd.f32 %v3782, %v3715
      %v3824 = vadd.f32 %v3783, %v3720
      %v3825 = vadd.f32 %v3784, %v3723
      %v3826 = vadd.f32 %v3785, %v3728
      %v3827 = vadd.f32 %v3786, %v3731
      %v3828 = vadd.f32 %v3787, %v3736
      %v3829 = vadd.f32 %v3788, %v3739
      %v3830 = vadd.f32 %v3789, %v3744
      %3831 = vst [vmem:[#allocation3] sm:$0xff] %v3790
      %3832 = vst [vmem:[#allocation3 + $0x8] sm:$0xff] %v3791
      %3833 = vst [vmem:[#allocation3 + $0x10] sm:$0xff] %v3792
      %3834 = vst [vmem:[#allocation3 + $0x18] sm:$0xff] %v3793
      %3835 = vst [vmem:[#allocation3 + $0x20] sm:$0xff] %v3794
      %3836 = vst [vmem:[#allocation3 + $0x28] sm:$0xff] %v3795
      %3837 = vst [vmem:[#allocation3 + $0x30] sm:$0xff] %v3796
      %3838 = vst [vmem:[#allocation3 + $0x38] sm:$0xff] %v3797
      %3839 = vst [vmem:[#allocation3 + $0x40] sm:$0xff] %v3798
      %3840 = vst [vmem:[#allocation3 + $0x48] sm:$0xff] %v3799
      %3841 = vst [vmem:[#allocation3 + $0x50] sm:$0xff] %v3800
      %3842 = vst [vmem:[#allocation3 + $0x58] sm:$0xff] %v3801
      %3843 = vst [vmem:[#allocation3 + $0x60] sm:$0xff] %v3802
      %3844 = vst [vmem:[#allocation3 + $0x68] sm:$0xff] %v3803
      %3845 = vst [vmem:[#allocation3 + $0x70] sm:$0xff] %v3804
      %3846 = vst [vmem:[#allocation3 + $0x78] sm:$0xff] %v3805
      %3847 = vst [vmem:[#allocation3 + $0x80] sm:$0xff] %v3806
      %3848 = vst [vmem:[#allocation3 + $0x88] sm:$0xff] %v3807
      %3849 = vst [vmem:[#allocation3 + $0x90] sm:$0xff] %v3808
      %3850 = vst [vmem:[#allocation3 + $0x98] sm:$0xff] %v3809
      %3851 = vst [vmem:[#allocation3 + $0xa0] sm:$0xff] %v3810
      %3852 = vst [vmem:[#allocation3 + $0xa8] sm:$0xff] %v3811
      %3853 = vst [vmem:[#allocation3 + $0xb0] sm:$0xff] %v3812
      %3854 = vst [vmem:[#allocation3 + $0xb8] sm:$0xff] %v3813
      %3855 = vst [vmem:[#allocation3 + $0xc0] sm:$0xff] %v3814
      %3856 = vst [vmem:[#allocation3 + $0xc8] sm:$0xff] %v3815
      %3857 = vst [vmem:[#allocation3 + $0xd0] sm:$0xff] %v3816
      %3858 = vst [vmem:[#allocation3 + $0xd8] sm:$0xff] %v3817
      %3859 = vst [vmem:[#allocation3 + $0xe0] sm:$0xff] %v3818
      %3860 = vst [vmem:[#allocation3 + $0xe8] sm:$0xff] %v3819
      %3861 = vst [vmem:[#allocation3 + $0xf0] sm:$0xff] %v3820
      %3862 = vst [vmem:[#allocation3 + $0xf8] sm:$0xff] %v3821
      %3863 = vst [vmem:[#allocation3 + $0x100] sm:$0xff] %v3822
      %3864 = vst [vmem:[#allocation3 + $0x108] sm:$0xff] %v3823
      %3865 = vst [vmem:[#allocation3 + $0x110] sm:$0xff] %v3824
      %3866 = vst [vmem:[#allocation3 + $0x118] sm:$0xff] %v3825
      %3867 = vst [vmem:[#allocation3 + $0x120] sm:$0xff] %v3826
      %3868 = vst [vmem:[#allocation3 + $0x128] sm:$0xff] %v3827
      %3869 = vst [vmem:[#allocation3 + $0x130] sm:$0xff] %v3828
      %3870 = vst [vmem:[#allocation3 + $0x138] sm:$0xff] %v3829
      %3871 = vst [vmem:[#allocation3 + $0x140] sm:$0xff] %v3830
      %v3872 = vld [vmem:[#allocation2 + $0x26] sm:$0xff]
      %v3873 = vld [vmem:[#allocation2 + $0x2e] sm:$0xff]
      %v3874 = vld [vmem:[#allocation2 + $0x36] sm:$0xff]
      %v3875 = vld [vmem:[#allocation2 + $0x3e] sm:$0xff]
      %v3876 = vld [vmem:[#allocation2 + $0x46] sm:$0xff]
      %v3877 = vld [vmem:[#allocation2 + $0x4e] sm:$0xff]
      %v3878 = vld [vmem:[#allocation2 + $0x56] sm:$0xff]
      %v3879 = vld [vmem:[#allocation2 + $0x5e] sm:$0xff]
      %v3880 = vld [vmem:[#allocation2 + $0x66] sm:$0xff]
      %v3881 = vld [vmem:[#allocation2 + $0x6e] sm:$0xff]
      %v3882 = vld [vmem:[#allocation2 + $0x76] sm:$0xff]
      %v3883 = vld [vmem:[#allocation2 + $0x7e] sm:$0xff]
      %v3884 = vld [vmem:[#allocation2 + $0x86] sm:$0xff]
      %v3885 = vld [vmem:[#allocation2 + $0x8e] sm:$0xff]
      %v3886 = vld [vmem:[#allocation2 + $0x96] sm:$0xff]
      %v3887 = vld [vmem:[#allocation2 + $0x9e] sm:$0xff]
      %v3888 = vld [vmem:[#allocation2 + $0xa6] sm:$0xff]
      %v3889 = vld [vmem:[#allocation2 + $0xae] sm:$0xff]
      %v3890 = vld [vmem:[#allocation2 + $0xb6] sm:$0xff]
      %v3891 = vld [vmem:[#allocation2 + $0xbe] sm:$0xff]
      %v3892 = vld [vmem:[#allocation2 + $0xc6] sm:$0xff]
      %v3893 = vld [vmem:[#allocation2 + $0xce] sm:$0xff]
      %v3894 = vld [vmem:[#allocation2 + $0xd6] sm:$0xff]
      %v3895 = vld [vmem:[#allocation2 + $0xde] sm:$0xff]
      %v3896 = vld [vmem:[#allocation2 + $0xe6] sm:$0xff]
      %v3897 = vld [vmem:[#allocation2 + $0xee] sm:$0xff]
      %v3898 = vld [vmem:[#allocation2 + $0xf6] sm:$0xff]
      %v3899 = vld [vmem:[#allocation2 + $0xfe] sm:$0xff]
      %v3900 = vld [vmem:[#allocation2 + $0x106] sm:$0xff]
      %v3901 = vld [vmem:[#allocation2 + $0x10e] sm:$0xff]
      %v3902 = vld [vmem:[#allocation2 + $0x116] sm:$0xff]
      %v3903 = vld [vmem:[#allocation2 + $0x11e] sm:$0xff]
      %v3904 = vld [vmem:[#allocation2 + $0x126] sm:$0xff]
      %v3905 = vld [vmem:[#allocation2 + $0x12e] sm:$0xff]
      %v3906 = vld [vmem:[#allocation2 + $0x136] sm:$0xff]
      %v3907 = vld [vmem:[#allocation2 + $0x13e] sm:$0xff]
      %v3908 = vld [vmem:[#allocation2 + $0x146] sm:$0xff]
      %v3909 = vld [vmem:[#allocation2 + $0x14e] sm:$0xff]
      %v3910 = vld [vmem:[#allocation2 + $0x156] sm:$0xff]
      %v3911 = vld [vmem:[#allocation2 + $0x15e] sm:$0xff]
      %v3912 = vld [vmem:[#allocation2 + $0x166] sm:$0xff]
      %v3913 = vpack.c.bf16 %v3873, %v3872
      %v3914 = vpack.c.bf16 %v3875, %v3874
      %v3915 = vpack.c.bf16 %v3877, %v3876
      %v3916 = vpack.c.bf16 %v3879, %v3878
      %v3917 = vpack.c.bf16 %v3881, %v3880
      %v3918 = vpack.c.bf16 %v3883, %v3882
      %v3919 = vpack.c.bf16 %v3885, %v3884
      %v3920 = vpack.c.bf16 %v3887, %v3886
      %v3921 = vpack.c.bf16 %v3889, %v3888
      %v3922 = vpack.c.bf16 %v3891, %v3890
      %v3923 = vpack.c.bf16 %v3893, %v3892
      %v3924 = vpack.c.bf16 %v3895, %v3894
      %v3925 = vpack.c.bf16 %v3897, %v3896
      %v3926 = vpack.c.bf16 %v3899, %v3898
      %v3927 = vpack.c.bf16 %v3901, %v3900
      %v3928 = vpack.c.bf16 %v3903, %v3902
      %v3929 = vpack.c.bf16 %v3905, %v3904
      %v3930 = vpack.c.bf16 %v3907, %v3906
      %v3931 = vpack.c.bf16 %v3909, %v3908
      %v3932 = vpack.c.bf16 %v3911, %v3910
      %v3933 = vpack.c.bf16 %v3912, %v3912
      %s3934 = scalar_lea.vmem %s164, 16
      %v3935 = vld [vmem:[%s3934] sm:$0x3]
      %v3937 = vsel %vm392, %v3913, 0
      %v3940 = vsel %vm392, %v3914, 0
      %v3943 = vsel %vm392, %v3915, 0
      %v3946 = vsel %vm392, %v3916, 0
      %v3949 = vsel %vm392, %v3917, 0
      %v3952 = vsel %vm392, %v3918, 0
      %v3955 = vsel %vm392, %v3919, 0
      %v3958 = vsel %vm392, %v3920, 0
      %v3961 = vsel %vm392, %v3921, 0
      %v3964 = vsel %vm392, %v3922, 0
      %v3967 = vsel %vm392, %v3923, 0
      %v3970 = vsel %vm392, %v3924, 0
      %v3973 = vsel %vm392, %v3925, 0
      %v3976 = vsel %vm392, %v3926, 0
      %v3979 = vsel %vm392, %v3927, 0
      %v3982 = vsel %vm392, %v3928, 0
      %v3985 = vsel %vm392, %v3929, 0
      %v3988 = vsel %vm392, %v3930, 0
      %v3991 = vsel %vm392, %v3931, 0
      %v3994 = vsel %vm392, %v3932, 0
      %v3997 = vsel %vm392, %v3933, 0
      %v4000 = vsel %vm456, %v3935, 0
      %4002 = vmatprep.subr.bf16.mxu0 0
      %4003 = vmatpush1.bf16.msra.mxu0 %v4000
      %4004 = vmatprep.subr.bf16.mxu0 0
      %4005 = vmatpush1.bf16.msra.mxu0 0
      %4006 = vmatprep.subr.bf16.mxu0 0
      %4007 = vmatpush1.bf16.msra.mxu0 0
      %4008 = vmatprep.subr.bf16.mxu0 0
      %4009 = vmatpush1.bf16.msra.mxu0 0
      %4010 = vmatprep.subr.bf16.mxu0 0
      %4011 = vmatpush1.bf16.msra.mxu0 0
      %4012 = vmatprep.subr.bf16.mxu0 0
      %4013 = vmatpush1.bf16.msra.mxu0 0
      %4014 = vmatprep.subr.bf16.mxu0 0
      %4015 = vmatpush1.bf16.msra.mxu0 0
      %4016 = vmatprep.subr.bf16.mxu0 0
      %4017 = vmatpush1.bf16.msra.mxu0 0
      %4018 = vmatprep.subr.bf16.mxu0 0
      %4019 = vmatpush1.bf16.msra.mxu0 0
      %4020 = vmatprep.subr.bf16.mxu0 0
      %4021 = vmatpush1.bf16.msra.mxu0 0
      %4022 = vmatprep.subr.bf16.mxu0 0
      %4023 = vmatpush1.bf16.msra.mxu0 0
      %4024 = vmatprep.subr.bf16.mxu0 0
      %4025 = vmatpush1.bf16.msra.mxu0 0
      %4026 = vmatprep.subr.bf16.mxu0 0
      %4027 = vmatpush1.bf16.msra.mxu0 0
      %4028 = vmatprep.subr.bf16.mxu0 0
      %4029 = vmatpush1.bf16.msra.mxu0 0
      %4030 = vmatprep.subr.bf16.mxu0 0
      %4031 = vmatpush1.bf16.msra.mxu0 0
      %4032 = vmatprep.subr.bf16.mxu0 0
      %4033 = vmatpush1.bf16.msra.mxu0 0
      %4034 = vmatprep.mubr.bf16.mxu0 0
      %4035 = vmatmul.mubr.bf16.gmra.mrb[0].mxu0 %v3937
      %v4036 = vpop.f32.mrb[0].mxu0
      %v4037 = vadd.f32 0.0, %v4036
      %v4038 = vpop.f32.mrb[0].mxu0
      %v4039 = vpop.f32.mrb[0].mxu0
      %v4040 = vadd.f32 0.0, %v4039
      %v4041 = vpop.f32.mrb[0].mxu0
      %4042 = vmatprep.mubr.bf16.mxu0 0
      %4043 = vmatmul.mubr.bf16.gmra.mrb[0].mxu0 %v3940
      %v4044 = vpop.f32.mrb[0].mxu0
      %v4045 = vadd.f32 0.0, %v4044
      %v4046 = vpop.f32.mrb[0].mxu0
      %v4047 = vpop.f32.mrb[0].mxu0
      %v4048 = vadd.f32 0.0, %v4047
      %v4049 = vpop.f32.mrb[0].mxu0
      %4050 = vmatprep.mubr.bf16.mxu0 0
      %4051 = vmatmul.mubr.bf16.gmra.mrb[0].mxu0 %v3943
      %v4052 = vpop.f32.mrb[0].mxu0
      %v4053 = vadd.f32 0.0, %v4052
      %v4054 = vpop.f32.mrb[0].mxu0
      %v4055 = vpop.f32.mrb[0].mxu0
      %v4056 = vadd.f32 0.0, %v4055
      %v4057 = vpop.f32.mrb[0].mxu0
      %4058 = vmatprep.mubr.bf16.mxu0 0
      %4059 = vmatmul.mubr.bf16.gmra.mrb[0].mxu0 %v3946
      %v4060 = vpop.f32.mrb[0].mxu0
      %v4061 = vadd.f32 0.0, %v4060
      %v4062 = vpop.f32.mrb[0].mxu0
      %v4063 = vpop.f32.mrb[0].mxu0
      %v4064 = vadd.f32 0.0, %v4063
      %v4065 = vpop.f32.mrb[0].mxu0
      %4066 = vmatprep.mubr.bf16.mxu0 0
      %4067 = vmatmul.mubr.bf16.gmra.mrb[0].mxu0 %v3949
      %v4068 = vpop.f32.mrb[0].mxu0
      %v4069 = vadd.f32 0.0, %v4068
      %v4070 = vpop.f32.mrb[0].mxu0
      %v4071 = vpop.f32.mrb[0].mxu0
      %v4072 = vadd.f32 0.0, %v4071
      %v4073 = vpop.f32.mrb[0].mxu0
      %4074 = vmatprep.mubr.bf16.mxu0 0
      %4075 = vmatmul.mubr.bf16.gmra.mrb[0].mxu0 %v3952
      %v4076 = vpop.f32.mrb[0].mxu0
      %v4077 = vadd.f32 0.0, %v4076
      %v4078 = vpop.f32.mrb[0].mxu0
      %v4079 = vpop.f32.mrb[0].mxu0
      %v4080 = vadd.f32 0.0, %v4079
      %v4081 = vpop.f32.mrb[0].mxu0
      %4082 = vmatprep.mubr.bf16.mxu0 0
      %4083 = vmatmul.mubr.bf16.gmra.mrb[0].mxu0 %v3955
      %v4084 = vpop.f32.mrb[0].mxu0
      %v4085 = vadd.f32 0.0, %v4084
      %v4086 = vpop.f32.mrb[0].mxu0
      %v4087 = vpop.f32.mrb[0].mxu0
      %v4088 = vadd.f32 0.0, %v4087
      %v4089 = vpop.f32.mrb[0].mxu0
      %4090 = vmatprep.mubr.bf16.mxu0 0
      %4091 = vmatmul.mubr.bf16.gmra.mrb[0].mxu0 %v3958
      %v4092 = vpop.f32.mrb[0].mxu0
      %v4093 = vadd.f32 0.0, %v4092
      %v4094 = vpop.f32.mrb[0].mxu0
      %v4095 = vpop.f32.mrb[0].mxu0
      %v4096 = vadd.f32 0.0, %v4095
      %v4097 = vpop.f32.mrb[0].mxu0
      %4098 = vmatprep.mubr.bf16.mxu0 0
      %4099 = vmatmul.mubr.bf16.gmra.mrb[0].mxu0 %v3961
      %v4100 = vpop.f32.mrb[0].mxu0
      %v4101 = vadd.f32 0.0, %v4100
      %v4102 = vpop.f32.mrb[0].mxu0
      %v4103 = vpop.f32.mrb[0].mxu0
      %v4104 = vadd.f32 0.0, %v4103
      %v4105 = vpop.f32.mrb[0].mxu0
      %4106 = vmatprep.mubr.bf16.mxu0 0
      %4107 = vmatmul.mubr.bf16.gmra.mrb[0].mxu0 %v3964
      %v4108 = vpop.f32.mrb[0].mxu0
      %v4109 = vadd.f32 0.0, %v4108
      %v4110 = vpop.f32.mrb[0].mxu0
      %v4111 = vpop.f32.mrb[0].mxu0
      %v4112 = vadd.f32 0.0, %v4111
      %v4113 = vpop.f32.mrb[0].mxu0
      %4114 = vmatprep.mubr.bf16.mxu0 0
      %4115 = vmatmul.mubr.bf16.gmra.mrb[0].mxu0 %v3967
      %v4116 = vpop.f32.mrb[0].mxu0
      %v4117 = vadd.f32 0.0, %v4116
      %v4118 = vpop.f32.mrb[0].mxu0
      %v4119 = vpop.f32.mrb[0].mxu0
      %v4120 = vadd.f32 0.0, %v4119
      %v4121 = vpop.f32.mrb[0].mxu0
      %4122 = vmatprep.mubr.bf16.mxu0 0
      %4123 = vmatmul.mubr.bf16.gmra.mrb[0].mxu0 %v3970
      %v4124 = vpop.f32.mrb[0].mxu0
      %v4125 = vadd.f32 0.0, %v4124
      %v4126 = vpop.f32.mrb[0].mxu0
      %v4127 = vpop.f32.mrb[0].mxu0
      %v4128 = vadd.f32 0.0, %v4127
      %v4129 = vpop.f32.mrb[0].mxu0
      %4130 = vmatprep.mubr.bf16.mxu0 0
      %4131 = vmatmul.mubr.bf16.gmra.mrb[0].mxu0 %v3973
      %v4132 = vpop.f32.mrb[0].mxu0
      %v4133 = vadd.f32 0.0, %v4132
      %v4134 = vpop.f32.mrb[0].mxu0
      %v4135 = vpop.f32.mrb[0].mxu0
      %v4136 = vadd.f32 0.0, %v4135
      %v4137 = vpop.f32.mrb[0].mxu0
      %4138 = vmatprep.mubr.bf16.mxu0 0
      %4139 = vmatmul.mubr.bf16.gmra.mrb[0].mxu0 %v3976
      %v4140 = vpop.f32.mrb[0].mxu0
      %v4141 = vadd.f32 0.0, %v4140
      %v4142 = vpop.f32.mrb[0].mxu0
      %v4143 = vpop.f32.mrb[0].mxu0
      %v4144 = vadd.f32 0.0, %v4143
      %v4145 = vpop.f32.mrb[0].mxu0
      %4146 = vmatprep.mubr.bf16.mxu0 0
      %4147 = vmatmul.mubr.bf16.gmra.mrb[0].mxu0 %v3979
      %v4148 = vpop.f32.mrb[0].mxu0
      %v4149 = vadd.f32 0.0, %v4148
      %v4150 = vpop.f32.mrb[0].mxu0
      %v4151 = vpop.f32.mrb[0].mxu0
      %v4152 = vadd.f32 0.0, %v4151
      %v4153 = vpop.f32.mrb[0].mxu0
      %4154 = vmatprep.mubr.bf16.mxu0 0
      %4155 = vmatmul.mubr.bf16.gmra.mrb[0].mxu0 %v3982
      %v4156 = vpop.f32.mrb[0].mxu0
      %v4157 = vadd.f32 0.0, %v4156
      %v4158 = vpop.f32.mrb[0].mxu0
      %v4159 = vpop.f32.mrb[0].mxu0
      %v4160 = vadd.f32 0.0, %v4159
      %v4161 = vpop.f32.mrb[0].mxu0
      %4162 = vmatprep.mubr.bf16.mxu0 0
      %4163 = vmatmul.mubr.bf16.gmra.mrb[0].mxu0 %v3985
      %v4164 = vpop.f32.mrb[0].mxu0
      %v4165 = vadd.f32 0.0, %v4164
      %v4166 = vpop.f32.mrb[0].mxu0
      %v4167 = vpop.f32.mrb[0].mxu0
      %v4168 = vadd.f32 0.0, %v4167
      %v4169 = vpop.f32.mrb[0].mxu0
      %4170 = vmatprep.mubr.bf16.mxu0 0
      %4171 = vmatmul.mubr.bf16.gmra.mrb[0].mxu0 %v3988
      %v4172 = vpop.f32.mrb[0].mxu0
      %v4173 = vadd.f32 0.0, %v4172
      %v4174 = vpop.f32.mrb[0].mxu0
      %v4175 = vpop.f32.mrb[0].mxu0
      %v4176 = vadd.f32 0.0, %v4175
      %v4177 = vpop.f32.mrb[0].mxu0
      %4178 = vmatprep.mubr.bf16.mxu0 0
      %4179 = vmatmul.mubr.bf16.gmra.mrb[0].mxu0 %v3991
      %v4180 = vpop.f32.mrb[0].mxu0
      %v4181 = vadd.f32 0.0, %v4180
      %v4182 = vpop.f32.mrb[0].mxu0
      %v4183 = vpop.f32.mrb[0].mxu0
      %v4184 = vadd.f32 0.0, %v4183
      %v4185 = vpop.f32.mrb[0].mxu0
      %4186 = vmatprep.mubr.bf16.mxu0 0
      %4187 = vmatmul.mubr.bf16.gmra.mrb[0].mxu0 %v3994
      %v4188 = vpop.f32.mrb[0].mxu0
      %v4189 = vadd.f32 0.0, %v4188
      %v4190 = vpop.f32.mrb[0].mxu0
      %v4191 = vpop.f32.mrb[0].mxu0
      %v4192 = vadd.f32 0.0, %v4191
      %v4193 = vpop.f32.mrb[0].mxu0
      %4194 = vmatprep.mubr.bf16.mxu0 0
      %4195 = vmatmul.mubr.bf16.gmra.mrb[0].mxu0 %v3997
      %v4196 = vpop.f32.mrb[0].mxu0
      %v4197 = vadd.f32 0.0, %v4196
      %v4198 = vpop.f32.mrb[0].mxu0
      %v4199 = vpop.f32.mrb[0].mxu0
      %v4200 = vpop.f32.mrb[0].mxu0
      %4201 = vdwg.mxu0
      %v4202 = vld [vmem:[#allocation3] sm:$0xff]
      %v4203 = vld [vmem:[#allocation3 + $0x8] sm:$0xff]
      %v4204 = vld [vmem:[#allocation3 + $0x10] sm:$0xff]
      %v4205 = vld [vmem:[#allocation3 + $0x18] sm:$0xff]
      %v4206 = vld [vmem:[#allocation3 + $0x20] sm:$0xff]
      %v4207 = vld [vmem:[#allocation3 + $0x28] sm:$0xff]
      %v4208 = vld [vmem:[#allocation3 + $0x30] sm:$0xff]
      %v4209 = vld [vmem:[#allocation3 + $0x38] sm:$0xff]
      %v4210 = vld [vmem:[#allocation3 + $0x40] sm:$0xff]
      %v4211 = vld [vmem:[#allocation3 + $0x48] sm:$0xff]
      %v4212 = vld [vmem:[#allocation3 + $0x50] sm:$0xff]
      %v4213 = vld [vmem:[#allocation3 + $0x58] sm:$0xff]
      %v4214 = vld [vmem:[#allocation3 + $0x60] sm:$0xff]
      %v4215 = vld [vmem:[#allocation3 + $0x68] sm:$0xff]
      %v4216 = vld [vmem:[#allocation3 + $0x70] sm:$0xff]
      %v4217 = vld [vmem:[#allocation3 + $0x78] sm:$0xff]
      %v4218 = vld [vmem:[#allocation3 + $0x80] sm:$0xff]
      %v4219 = vld [vmem:[#allocation3 + $0x88] sm:$0xff]
      %v4220 = vld [vmem:[#allocation3 + $0x90] sm:$0xff]
      %v4221 = vld [vmem:[#allocation3 + $0x98] sm:$0xff]
      %v4222 = vld [vmem:[#allocation3 + $0xa0] sm:$0xff]
      %v4223 = vld [vmem:[#allocation3 + $0xa8] sm:$0xff]
      %v4224 = vld [vmem:[#allocation3 + $0xb0] sm:$0xff]
      %v4225 = vld [vmem:[#allocation3 + $0xb8] sm:$0xff]
      %v4226 = vld [vmem:[#allocation3 + $0xc0] sm:$0xff]
      %v4227 = vld [vmem:[#allocation3 + $0xc8] sm:$0xff]
      %v4228 = vld [vmem:[#allocation3 + $0xd0] sm:$0xff]
      %v4229 = vld [vmem:[#allocation3 + $0xd8] sm:$0xff]
      %v4230 = vld [vmem:[#allocation3 + $0xe0] sm:$0xff]
      %v4231 = vld [vmem:[#allocation3 + $0xe8] sm:$0xff]
      %v4232 = vld [vmem:[#allocation3 + $0xf0] sm:$0xff]
      %v4233 = vld [vmem:[#allocation3 + $0xf8] sm:$0xff]
      %v4234 = vld [vmem:[#allocation3 + $0x100] sm:$0xff]
      %v4235 = vld [vmem:[#allocation3 + $0x108] sm:$0xff]
      %v4236 = vld [vmem:[#allocation3 + $0x110] sm:$0xff]
      %v4237 = vld [vmem:[#allocation3 + $0x118] sm:$0xff]
      %v4238 = vld [vmem:[#allocation3 + $0x120] sm:$0xff]
      %v4239 = vld [vmem:[#allocation3 + $0x128] sm:$0xff]
      %v4240 = vld [vmem:[#allocation3 + $0x130] sm:$0xff]
      %v4241 = vld [vmem:[#allocation3 + $0x138] sm:$0xff]
      %v4242 = vld [vmem:[#allocation3 + $0x140] sm:$0xff]
      %v4243 = vadd.f32 %v4202, %v4037
      %v4244 = vadd.f32 %v4203, %v4040
      %v4245 = vadd.f32 %v4204, %v4045
      %v4246 = vadd.f32 %v4205, %v4048
      %v4247 = vadd.f32 %v4206, %v4053
      %v4248 = vadd.f32 %v4207, %v4056
      %v4249 = vadd.f32 %v4208, %v4061
      %v4250 = vadd.f32 %v4209, %v4064
      %v4251 = vadd.f32 %v4210, %v4069
      %v4252 = vadd.f32 %v4211, %v4072
      %v4253 = vadd.f32 %v4212, %v4077
      %v4254 = vadd.f32 %v4213, %v4080
      %v4255 = vadd.f32 %v4214, %v4085
      %v4256 = vadd.f32 %v4215, %v4088
      %v4257 = vadd.f32 %v4216, %v4093
      %v4258 = vadd.f32 %v4217, %v4096
      %v4259 = vadd.f32 %v4218, %v4101
      %v4260 = vadd.f32 %v4219, %v4104
      %v4261 = vadd.f32 %v4220, %v4109
      %v4262 = vadd.f32 %v4221, %v4112
      %v4263 = vadd.f32 %v4222, %v4117
      %v4264 = vadd.f32 %v4223, %v4120
      %v4265 = vadd.f32 %v4224, %v4125
      %v4266 = vadd.f32 %v4225, %v4128
      %v4267 = vadd.f32 %v4226, %v4133
      %v4268 = vadd.f32 %v4227, %v4136
      %v4269 = vadd.f32 %v4228, %v4141
      %v4270 = vadd.f32 %v4229, %v4144
      %v4271 = vadd.f32 %v4230, %v4149
      %v4272 = vadd.f32 %v4231, %v4152
      %v4273 = vadd.f32 %v4232, %v4157
      %v4274 = vadd.f32 %v4233, %v4160
      %v4275 = vadd.f32 %v4234, %v4165
      %v4276 = vadd.f32 %v4235, %v4168
      %v4277 = vadd.f32 %v4236, %v4173
      %v4278 = vadd.f32 %v4237, %v4176
      %v4279 = vadd.f32 %v4238, %v4181
      %v4280 = vadd.f32 %v4239, %v4184
      %v4281 = vadd.f32 %v4240, %v4189
      %v4282 = vadd.f32 %v4241, %v4192
      %v4283 = vadd.f32 %v4242, %v4197
      %4284 = vst [vmem:[#allocation3] sm:$0xff] %v4243
      %4285 = vst [vmem:[#allocation3 + $0x8] sm:$0xff] %v4244
      %4286 = vst [vmem:[#allocation3 + $0x10] sm:$0xff] %v4245
      %4287 = vst [vmem:[#allocation3 + $0x18] sm:$0xff] %v4246
      %4288 = vst [vmem:[#allocation3 + $0x20] sm:$0xff] %v4247
      %4289 = vst [vmem:[#allocation3 + $0x28] sm:$0xff] %v4248
      %4290 = vst [vmem:[#allocation3 + $0x30] sm:$0xff] %v4249
      %4291 = vst [vmem:[#allocation3 + $0x38] sm:$0xff] %v4250
      %4292 = vst [vmem:[#allocation3 + $0x40] sm:$0xff] %v4251
      %4293 = vst [vmem:[#allocation3 + $0x48] sm:$0xff] %v4252
      %4294 = vst [vmem:[#allocation3 + $0x50] sm:$0xff] %v4253
      %4295 = vst [vmem:[#allocation3 + $0x58] sm:$0xff] %v4254
      %4296 = vst [vmem:[#allocation3 + $0x60] sm:$0xff] %v4255
      %4297 = vst [vmem:[#allocation3 + $0x68] sm:$0xff] %v4256
      %4298 = vst [vmem:[#allocation3 + $0x70] sm:$0xff] %v4257
      %4299 = vst [vmem:[#allocation3 + $0x78] sm:$0xff] %v4258
      %4300 = vst [vmem:[#allocation3 + $0x80] sm:$0xff] %v4259
      %4301 = vst [vmem:[#allocation3 + $0x88] sm:$0xff] %v4260
      %4302 = vst [vmem:[#allocation3 + $0x90] sm:$0xff] %v4261
      %4303 = vst [vmem:[#allocation3 + $0x98] sm:$0xff] %v4262
      %4304 = vst [vmem:[#allocation3 + $0xa0] sm:$0xff] %v4263
      %4305 = vst [vmem:[#allocation3 + $0xa8] sm:$0xff] %v4264
      %4306 = vst [vmem:[#allocation3 + $0xb0] sm:$0xff] %v4265
      %4307 = vst [vmem:[#allocation3 + $0xb8] sm:$0xff] %v4266
      %4308 = vst [vmem:[#allocation3 + $0xc0] sm:$0xff] %v4267
      %4309 = vst [vmem:[#allocation3 + $0xc8] sm:$0xff] %v4268
      %4310 = vst [vmem:[#allocation3 + $0xd0] sm:$0xff] %v4269
      %4311 = vst [vmem:[#allocation3 + $0xd8] sm:$0xff] %v4270
      %4312 = vst [vmem:[#allocation3 + $0xe0] sm:$0xff] %v4271
      %4313 = vst [vmem:[#allocation3 + $0xe8] sm:$0xff] %v4272
      %4314 = vst [vmem:[#allocation3 + $0xf0] sm:$0xff] %v4273
      %4315 = vst [vmem:[#allocation3 + $0xf8] sm:$0xff] %v4274
      %4316 = vst [vmem:[#allocation3 + $0x100] sm:$0xff] %v4275
      %4317 = vst [vmem:[#allocation3 + $0x108] sm:$0xff] %v4276
      %4318 = vst [vmem:[#allocation3 + $0x110] sm:$0xff] %v4277
      %4319 = vst [vmem:[#allocation3 + $0x118] sm:$0xff] %v4278
      %4320 = vst [vmem:[#allocation3 + $0x120] sm:$0xff] %v4279
      %4321 = vst [vmem:[#allocation3 + $0x128] sm:$0xff] %v4280
      %4322 = vst [vmem:[#allocation3 + $0x130] sm:$0xff] %v4281
      %4323 = vst [vmem:[#allocation3 + $0x138] sm:$0xff] %v4282
      %4324 = vst [vmem:[#allocation3 + $0x140] sm:$0xff] %v4283
      %v4325 = vld [vmem:[#allocation3] sm:$0xff]
      %v4326 = vld [vmem:[#allocation3 + $0x8] sm:$0xff]
      %v4327 = vld [vmem:[#allocation3 + $0x10] sm:$0xff]
      %v4328 = vld [vmem:[#allocation3 + $0x18] sm:$0xff]
      %v4329 = vld [vmem:[#allocation3 + $0x20] sm:$0xff]
      %v4330 = vld [vmem:[#allocation3 + $0x28] sm:$0xff]
      %v4331 = vld [vmem:[#allocation3 + $0x30] sm:$0xff]
      %v4332 = vld [vmem:[#allocation3 + $0x38] sm:$0xff]
      %v4333 = vld [vmem:[#allocation3 + $0x40] sm:$0xff]
      %v4334 = vld [vmem:[#allocation3 + $0x48] sm:$0xff]
      %v4335 = vld [vmem:[#allocation3 + $0x50] sm:$0xff]
      %v4336 = vld [vmem:[#allocation3 + $0x58] sm:$0xff]
      %v4337 = vld [vmem:[#allocation3 + $0x60] sm:$0xff]
      %v4338 = vld [vmem:[#allocation3 + $0x68] sm:$0xff]
      %v4339 = vld [vmem:[#allocation3 + $0x70] sm:$0xff]
      %v4340 = vld [vmem:[#allocation3 + $0x78] sm:$0xff]
      %v4341 = vld [vmem:[#allocation3 + $0x80] sm:$0xff]
      %v4342 = vld [vmem:[#allocation3 + $0x88] sm:$0xff]
      %v4343 = vld [vmem:[#allocation3 + $0x90] sm:$0xff]
      %v4344 = vld [vmem:[#allocation3 + $0x98] sm:$0xff]
      %v4345 = vld [vmem:[#allocation3 + $0xa0] sm:$0xff]
      %v4346 = vld [vmem:[#allocation3 + $0xa8] sm:$0xff]
      %v4347 = vld [vmem:[#allocation3 + $0xb0] sm:$0xff]
      %v4348 = vld [vmem:[#allocation3 + $0xb8] sm:$0xff]
      %v4349 = vld [vmem:[#allocation3 + $0xc0] sm:$0xff]
      %v4350 = vld [vmem:[#allocation3 + $0xc8] sm:$0xff]
      %v4351 = vld [vmem:[#allocation3 + $0xd0] sm:$0xff]
      %v4352 = vld [vmem:[#allocation3 + $0xd8] sm:$0xff]
      %v4353 = vld [vmem:[#allocation3 + $0xe0] sm:$0xff]
      %v4354 = vld [vmem:[#allocation3 + $0xe8] sm:$0xff]
      %v4355 = vld [vmem:[#allocation3 + $0xf0] sm:$0xff]
      %v4356 = vld [vmem:[#allocation3 + $0xf8] sm:$0xff]
      %v4357 = vld [vmem:[#allocation3 + $0x100] sm:$0xff]
      %v4358 = vld [vmem:[#allocation3 + $0x108] sm:$0xff]
      %v4359 = vld [vmem:[#allocation3 + $0x110] sm:$0xff]
      %v4360 = vld [vmem:[#allocation3 + $0x118] sm:$0xff]
      %v4361 = vld [vmem:[#allocation3 + $0x120] sm:$0xff]
      %v4362 = vld [vmem:[#allocation3 + $0x128] sm:$0xff]
      %v4363 = vld [vmem:[#allocation3 + $0x130] sm:$0xff]
      %v4364 = vld [vmem:[#allocation3 + $0x138] sm:$0xff]
      %v4365 = vld [vmem:[#allocation3 + $0x140] sm:$0xff]
      %v4366 = vld [vmem:[%s167] sm:$0x1]
      %v4368 = vlaneseq
      %v4369 = vshrl.u32 %v4368, 7
      %v4370 = vsub.s32 0, %v4369
      %v4371 = vrot.slane %v4366, %v4370
      %v4373 = vadd.f32 %v4325, %v4371
      %v4374 = vadd.f32 %v4326, %v4371
      %v4375 = vadd.f32 %v4327, %v4371
      %v4376 = vadd.f32 %v4328, %v4371
      %v4377 = vadd.f32 %v4329, %v4371
      %v4378 = vadd.f32 %v4330, %v4371
      %v4379 = vadd.f32 %v4331, %v4371
      %v4380 = vadd.f32 %v4332, %v4371
      %v4381 = vadd.f32 %v4333, %v4371
      %v4382 = vadd.f32 %v4334, %v4371
      %v4383 = vadd.f32 %v4335, %v4371
      %v4384 = vadd.f32 %v4336, %v4371
      %v4385 = vadd.f32 %v4337, %v4371
      %v4386 = vadd.f32 %v4338, %v4371
      %v4387 = vadd.f32 %v4339, %v4371
      %v4388 = vadd.f32 %v4340, %v4371
      %v4389 = vadd.f32 %v4341, %v4371
      %v4390 = vadd.f32 %v4342, %v4371
      %v4391 = vadd.f32 %v4343, %v4371
      %v4392 = vadd.f32 %v4344, %v4371
      %v4393 = vadd.f32 %v4345, %v4371
      %v4394 = vadd.f32 %v4346, %v4371
      %v4395 = vadd.f32 %v4347, %v4371
      %v4396 = vadd.f32 %v4348, %v4371
      %v4397 = vadd.f32 %v4349, %v4371
      %v4398 = vadd.f32 %v4350, %v4371
      %v4399 = vadd.f32 %v4351, %v4371
      %v4400 = vadd.f32 %v4352, %v4371
      %v4401 = vadd.f32 %v4353, %v4371
      %v4402 = vadd.f32 %v4354, %v4371
      %v4403 = vadd.f32 %v4355, %v4371
      %v4404 = vadd.f32 %v4356, %v4371
      %v4405 = vadd.f32 %v4357, %v4371
      %v4406 = vadd.f32 %v4358, %v4371
      %v4407 = vadd.f32 %v4359, %v4371
      %v4408 = vadd.f32 %v4360, %v4371
      %v4409 = vadd.f32 %v4361, %v4371
      %v4410 = vadd.f32 %v4362, %v4371
      %v4411 = vadd.f32 %v4363, %v4371
      %v4412 = vadd.f32 %v4364, %v4371
      %v4413 = vadd.f32 %v4365, %v4371
      %v4414 = vmax.f32 %v4373, 0.0
      %v4415 = vmax.f32 %v4374, 0.0
      %v4416 = vmax.f32 %v4375, 0.0
      %v4417 = vmax.f32 %v4376, 0.0
      %v4418 = vmax.f32 %v4377, 0.0
      %v4419 = vmax.f32 %v4378, 0.0
      %v4420 = vmax.f32 %v4379, 0.0
      %v4421 = vmax.f32 %v4380, 0.0
      %v4422 = vmax.f32 %v4381, 0.0
      %v4423 = vmax.f32 %v4382, 0.0
      %v4424 = vmax.f32 %v4383, 0.0
      %v4425 = vmax.f32 %v4384, 0.0
      %v4426 = vmax.f32 %v4385, 0.0
      %v4427 = vmax.f32 %v4386, 0.0
      %v4428 = vmax.f32 %v4387, 0.0
      %v4429 = vmax.f32 %v4388, 0.0
      %v4430 = vmax.f32 %v4389, 0.0
      %v4431 = vmax.f32 %v4390, 0.0
      %v4432 = vmax.f32 %v4391, 0.0
      %v4433 = vmax.f32 %v4392, 0.0
      %v4434 = vmax.f32 %v4393, 0.0
      %v4435 = vmax.f32 %v4394, 0.0
      %v4436 = vmax.f32 %v4395, 0.0
      %v4437 = vmax.f32 %v4396, 0.0
      %v4438 = vmax.f32 %v4397, 0.0
      %v4439 = vmax.f32 %v4398, 0.0
      %v4440 = vmax.f32 %v4399, 0.0
      %v4441 = vmax.f32 %v4400, 0.0
      %v4442 = vmax.f32 %v4401, 0.0
      %v4443 = vmax.f32 %v4402, 0.0
      %v4444 = vmax.f32 %v4403, 0.0
      %v4445 = vmax.f32 %v4404, 0.0
      %v4446 = vmax.f32 %v4405, 0.0
      %v4447 = vmax.f32 %v4406, 0.0
      %v4448 = vmax.f32 %v4407, 0.0
      %v4449 = vmax.f32 %v4408, 0.0
      %v4450 = vmax.f32 %v4409, 0.0
      %v4451 = vmax.f32 %v4410, 0.0
      %v4452 = vmax.f32 %v4411, 0.0
      %v4453 = vmax.f32 %v4412, 0.0
      %v4454 = vmax.f32 %v4413, 0.0
      %4455 = vst [vmem:[%s175] sm:$0xff] %v4414
      %4456 = vst [vmem:[%s175 + $0x8] sm:$0xff] %v4415
      %4457 = vst [vmem:[%s175 + $0x10] sm:$0xff] %v4416
      %4458 = vst [vmem:[%s175 + $0x18] sm:$0xff] %v4417
      %4459 = vst [vmem:[%s175 + $0x20] sm:$0xff] %v4418
      %4460 = vst [vmem:[%s175 + $0x28] sm:$0xff] %v4419
      %4461 = vst [vmem:[%s175 + $0x30] sm:$0xff] %v4420
      %4462 = vst [vmem:[%s175 + $0x38] sm:$0xff] %v4421
      %4463 = vst [vmem:[%s175 + $0x40] sm:$0xff] %v4422
      %4464 = vst [vmem:[%s175 + $0x48] sm:$0xff] %v4423
      %4465 = vst [vmem:[%s175 + $0x50] sm:$0xff] %v4424
      %4466 = vst [vmem:[%s175 + $0x58] sm:$0xff] %v4425
      %4467 = vst [vmem:[%s175 + $0x60] sm:$0xff] %v4426
      %4468 = vst [vmem:[%s175 + $0x68] sm:$0xff] %v4427
      %4469 = vst [vmem:[%s175 + $0x70] sm:$0xff] %v4428
      %4470 = vst [vmem:[%s175 + $0x78] sm:$0xff] %v4429
      %4471 = vst [vmem:[%s175 + $0x80] sm:$0xff] %v4430
      %4472 = vst [vmem:[%s175 + $0x88] sm:$0xff] %v4431
      %4473 = vst [vmem:[%s175 + $0x90] sm:$0xff] %v4432
      %4474 = vst [vmem:[%s175 + $0x98] sm:$0xff] %v4433
      %4475 = vst [vmem:[%s175 + $0xa0] sm:$0xff] %v4434
      %4476 = vst [vmem:[%s175 + $0xa8] sm:$0xff] %v4435
      %4477 = vst [vmem:[%s175 + $0xb0] sm:$0xff] %v4436
      %4478 = vst [vmem:[%s175 + $0xb8] sm:$0xff] %v4437
      %4479 = vst [vmem:[%s175 + $0xc0] sm:$0xff] %v4438
      %4480 = vst [vmem:[%s175 + $0xc8] sm:$0xff] %v4439
      %4481 = vst [vmem:[%s175 + $0xd0] sm:$0xff] %v4440
      %4482 = vst [vmem:[%s175 + $0xd8] sm:$0xff] %v4441
      %4483 = vst [vmem:[%s175 + $0xe0] sm:$0xff] %v4442
      %4484 = vst [vmem:[%s175 + $0xe8] sm:$0xff] %v4443
      %4485 = vst [vmem:[%s175 + $0xf0] sm:$0xff] %v4444
      %4486 = vst [vmem:[%s175 + $0xf8] sm:$0xff] %v4445
      %4487 = vst [vmem:[%s175 + $0x100] sm:$0xff] %v4446
      %4488 = vst [vmem:[%s175 + $0x108] sm:$0xff] %v4447
      %4489 = vst [vmem:[%s175 + $0x110] sm:$0xff] %v4448
      %4490 = vst [vmem:[%s175 + $0x118] sm:$0xff] %v4449
      %4491 = vst [vmem:[%s175 + $0x120] sm:$0xff] %v4450
      %4492 = vst [vmem:[%s175 + $0x128] sm:$0xff] %v4451
      %4493 = vst [vmem:[%s175 + $0x130] sm:$0xff] %v4452
      %4494 = vst [vmem:[%s175 + $0x138] sm:$0xff] %v4453
      %4495 = vst [vmem:[%s175 + $0x140] sm:$0xff] %v4454
      %s4496 = smul.u32 41, %s18
      %p4497 = scmp.lt.s32.totalorder %s4496, 81
      %s4498 = scalar_select %p4497, %s4496, 81
      %p4499 = scmp.lt.s32.totalorder %s19, 0
      %s4500 = scalar_select %p4499, %s19, 0
      %s4501 = sadd.s32 %s4500, %s4498
      %s4502 = smul.addr %s4501, 8
      %s4503 = scalar_lea.vmem %s3, %s4502
      // Predicated region
      $region70: #{_conv_bn_relu_forward.1} parent=27 // pred_check
        %p4504 = pneg %p98
      $region71: #{_conv_bn_relu_forward.1} parent=27 // pred_check_branch
        %4506 = sbr.rel (%p4504) target = $region73
      $region72: #{_conv_bn_relu_forward.1} parent=27 // pred_region
        %s4507 = smul.u32 41, %s18
      $region73: #{_conv_bn_relu_forward.1} parent=27 // pred_fallthru
        _
    $region28: #{_conv_bn_relu_forward.1} parent=5 // pred_fallthru
      _
    %p4508 = scmp.le.s32.totalorder 2, %s9
    // Predicated region
    $region74: #{_conv_bn_relu_forward.1} parent=5 // pred_check
      %p4509 = pneg %p4508
    $region75: #{_conv_bn_relu_forward.1} parent=5 // pred_check_branch
      %4511 = sbr.rel (%p4509) target = $region77
    $region76: #{_conv_bn_relu_forward.1} parent=5 // pred_region
      %s4512 = ssub.s32 %s9, 2
      // Predicated region
      $region78: #{_conv_bn_relu_forward.1} parent=76 // pred_check
        %p4513 = pneg %p104
      $region79: #{_conv_bn_relu_forward.1} parent=76 // pred_check_branch
        %4515 = sbr.rel (%p4513) target = $region81
      $region80: #{_conv_bn_relu_forward.1} parent=76 // pred_region
        %s4516 = smul.u32 41, %s20
        %p4517 = scmp.lt.s32.totalorder %s4516, 81
        %s4518 = scalar_select %p4517, %s4516, 81
        %p4519 = scmp.lt.s32.totalorder %s21, 0
        %s4520 = scalar_select %p4519, %s21, 0
        %s4521 = sadd.s32 %s4520, %s4518
        %s4522 = smul.addr %s4521, 8
        %s4523 = scalar_lea.vmem %s3, %s4522
      $region81: #{_conv_bn_relu_forward.1} parent=76 // pred_fallthru
        _
    $region77: #{_conv_bn_relu_forward.1} parent=5 // pred_fallthru
      _
  $region6: #{_conv_bn_relu_forward.1} parent=0 // loop_footer
    %s13 = sadd.s32 1, %s9
  $region7: #{_conv_bn_relu_forward.1} parent=0 // loop_footer_branch
    %8 = sbr.rel target = $region3
  $region8: #{_conv_bn_relu_forward.1} parent=0 // loop_exit
    _
  %4524 = vsyncmov [#allocation4]
  %s4525 = vpop.sfrf %4524
  %p4526 = scmp.eq.s32.totalorder %s4525, 0
  %p4527 = pneg %p4526
  %4529 = shalt.err (%p4527)

</llo_original>
